<compile_context>
chip_gen: v6e
topology: v6e:2x2x1
jax: 0.10.0
libtpu: 0.0.40
codegen_flags: <defaults>
</compile_context>

<pallas_src>
import functools

import jax
import jax.numpy as jnp
from jax.experimental import pallas as pl
from jax.experimental.pallas import tpu as pltpu


def _round_up(v, m):
    return ((v + m - 1) // m) * m


def _vmem_footprint_bytes(bn, in_dim, hidden, out_dim):
    """Rough per-call VMEM footprint for one batch tile of size bn."""
    lane = 128
    x_tile = 2 * bn * _round_up(in_dim, lane) * 4        # double-buffered, lane-padded
    o_tile = 2 * bn * _round_up(out_dim, lane) * 4       # double-buffered, lane-padded
    acts = bn * hidden * (4 + 4 + 2)                      # f32 acc + f32 temp + bf16 h
    weights = 2 * (_round_up(in_dim, 8) * hidden * 4      # w1 (f32)
                   + 3 * hidden * hidden * 2              # w2..w4 (bf16)
                   + _round_up(out_dim, 8) * hidden * 4   # w5^T (f32)
                   + 5 * 8 * _round_up(hidden, lane) * 4) # biases (lane/sublane padded)
    return x_tile + o_tile + acts + weights


def _mlp_kernel(x_ref,
                w1_ref, b1_ref,
                w2_ref, b2_ref,
                w3_ref, b3_ref,
                w4_ref, b4_ref,
                w5t_ref, b5_ref,
                o_ref):
    in_dim = w1_ref.shape[0]
    out_dim = w5t_ref.shape[0]

    x = x_ref[...].astype(jnp.float32)        # (bn, in_dim)
    w1 = w1_ref[...]                          # (in_dim, H) f32
    b1 = b1_ref[...]                          # (1, H) f32

    # Layer 1: K == in_dim (2) is tiny, so use VPU broadcast FMAs instead of an
    # MXU push that would waste almost all systolic-array rows.
    h = b1 + x[:, 0:1] * w1[0:1, :]
    for k in range(1, in_dim):
        h = h + x[:, k:k + 1] * w1[k:k + 1, :]
    h = jnp.maximum(h, 0.0).astype(jnp.bfloat16)

    # Layers 2-4: bf16 MXU matmuls with f32 accumulation.  Bias + ReLU + cast
    # are fused into one expression and h stays bf16-resident between layers.
    for w_ref, b_ref in ((w2_ref, b2_ref), (w3_ref, b3_ref), (w4_ref, b4_ref)):
        acc = jnp.dot(h, w_ref[...], preferred_element_type=jnp.float32)
        h = jnp.maximum(acc + b_ref[...], 0.0).astype(jnp.bfloat16)

    # Layer 5 (out_dim == 1 for SIREN's MLP): VPU multiply + lane reduction on
    # the XLU instead of a zero-padded 128-wide MXU matmul + padded store.
    h32 = h.astype(jnp.float32)
    w5t = w5t_ref[...]                        # (out_dim, H) f32
    cols = [jnp.sum(h32 * w5t[j:j + 1, :], axis=-1, keepdims=True)
            for j in range(out_dim)]
    out = cols[0] if out_dim == 1 else jnp.concatenate(cols, axis=-1)
    o_ref[...] = (out + b5_ref[...]).astype(o_ref.dtype)


@functools.partial(jax.jit, static_argnames=("block_n",))
def mlp_forward(x, params, *, block_n=4096):
    """x: (N, in_dim). params: (in,out) weights, (1,out) biases (f32)."""
    n, in_dim = x.shape
    hidden = params["w1"].shape[1]
    out_dim = params["w5"].shape[1]

    # Physical VMEM capacity (64 MiB on v7x, 128 MiB on v5e/v6e); 25% headroom.
    try:
        vmem_cap = int(pltpu.get_tpu_info().vmem_capacity_bytes)
    except Exception:
        vmem_cap = 64 * 1024 * 1024
    vmem_budget = (vmem_cap * 3) // 4

    # ---- batch tile selection ----
    n8 = _round_up(n, 8)
    bn = _round_up(min(block_n, n8), 8)
    # v7x megacore: keep >= 2 grid steps whenever the batch allows it so the
    # "parallel" axis shards over both TensorCores (weights are ~0.5 MiB, so
    # duplicating them per core is free).  No effect on v5e/v6e (1 TC).
    half = _round_up(n8 // 2, 8)
    if n8 >= 16 and bn > half:
        bn = half
    # Shrink the tile until its VMEM footprint fits the budget.
    while bn > 256 and _vmem_footprint_bytes(bn, in_dim, hidden, out_dim) > vmem_budget:
        bn = _round_up(bn // 2, 8)

    padded_n = _round_up(n, bn)
    if padded_n != n:
        x = jnp.pad(x, ((0, padded_n - n), (0, 0)))

    # bf16 MXU operands for the square layers (f32 accumulation in-kernel);
    # w1 / w5 stay f32 because those layers run on the VPU; biases stay f32.
    w2 = params["w2"].astype(jnp.bfloat16)
    w3 = params["w3"].astype(jnp.bfloat16)
    w4 = params["w4"].astype(jnp.bfloat16)
    w5t = params["w5"].T                      # (out_dim, hidden) f32 row(s)
    b5 = params["b5"]                         # (1, out_dim) f32

    grid = (padded_n // bn,)

    def full_spec(arr):
        return pl.BlockSpec(arr.shape, lambda i: (0, 0))

    in_specs = [
        pl.BlockSpec((bn, in_dim), lambda i: (i, 0)),   # x tile
        full_spec(params["w1"]), full_spec(params["b1"]),
        full_spec(w2), full_spec(params["b2"]),
        full_spec(w3), full_spec(params["b3"]),
        full_spec(w4), full_spec(params["b4"]),
        full_spec(w5t), full_spec(b5),
    ]
    out_spec = pl.BlockSpec((bn, out_dim), lambda i: (i, 0))

    footprint = _vmem_footprint_bytes(bn, in_dim, hidden, out_dim)
    vmem_limit = int(min(vmem_budget,
                         max(32 * 1024 * 1024, int(footprint * 1.3) + (8 << 20))))

    flops = 2 * padded_n * (in_dim * hidden + 3 * hidden * hidden
                            + hidden * out_dim)
    bytes_accessed = (padded_n * in_dim * 4 + padded_n * out_dim * 4
                      + (in_dim * hidden + 5 * hidden + hidden * out_dim) * 4
                      + 3 * hidden * hidden * 2)

    out = pl.pallas_call(
        _mlp_kernel,
        out_shape=jax.ShapeDtypeStruct((padded_n, out_dim), x.dtype),
        grid_spec=pltpu.PrefetchScalarGridSpec(
            num_scalar_prefetch=0,
            grid=grid,
            in_specs=in_specs,
            out_specs=out_spec,
        ),
        compiler_params=pltpu.CompilerParams(
            dimension_semantics=("parallel",),
            vmem_limit_bytes=vmem_limit),
        cost_estimate=pl.CostEstimate(
            flops=flops, transcendentals=0, bytes_accessed=bytes_accessed),
    )(x,
      params["w1"], params["b1"],
      w2, params["b2"],
      w3, params["b3"],
      w4, params["b4"],
      w5t, b5)

    return out[:n] if padded_n != n else out


def init_mlp_params(key, in_dim=2, hidden_dim=256, out_dim=1, dtype=jnp.float32):
    """nn.Linear-style U(-1/sqrt(fan_in), 1/sqrt(fan_in)) init.

    Weights stored as (fan_in, fan_out) so the kernel computes x @ W + b,
    matching PyTorch's x @ W_pt.T + b.
    """
    dims = [(in_dim, hidden_dim),
            (hidden_dim, hidden_dim),
            (hidden_dim, hidden_dim),
            (hidden_dim, hidden_dim),
            (hidden_dim, out_dim)]
    params = {}
    for layer_idx, (fan_in, fan_out) in enumerate(dims, start=1):
        key, kw, kb = jax.random.split(key, 3)
        bound = 1.0 / float(fan_in) ** 0.5
        params[f"w{layer_idx}"] = jax.random.uniform(
            kw, (fan_in, fan_out), dtype, minval=-bound, maxval=bound)
        params[f"b{layer_idx}"] = jax.random.uniform(
            kb, (1, fan_out), dtype, minval=-bound, maxval=bound)
    return params


def mlp_reference_f32(x, params):
    h = x
    for i in range(1, 5):
        h = jnp.maximum(h @ params[f"w{i}"] + params[f"b{i}"], 0.0)
    return h @ params["w5"] + params["b5"]


def mlp_reference_mixed(x, params):
    """Mirrors the kernel precision recipe: bf16 MXU operands, f32 accumulate,
    bf16-resident activations, f32 final VPU layer."""
    h = jnp.maximum(x @ params["w1"] + params["b1"], 0.0).astype(jnp.bfloat16)
    for i in range(2, 5):
        acc = jnp.dot(h, params[f"w{i}"].astype(jnp.bfloat16),
                      preferred_element_type=jnp.float32)
        h = jnp.maximum(acc + params[f"b{i}"], 0.0).astype(jnp.bfloat16)
    return h.astype(jnp.float32) @ params["w5"] + params["b5"]


if __name__ == "__main__":
    key = jax.random.PRNGKey(0)
    k_params, k_x = jax.random.split(key)

    in_dim, hidden_dim, out_dim = 2, 256, 1
    n = 1024  # batch of 2-D coordinates; split into >=2 tiles (v7x megacore)

    params = init_mlp_params(k_params, in_dim, hidden_dim, out_dim)
    x = jax.random.uniform(k_x, (n, in_dim), jnp.float32, minval=-1.0, maxval=1.0)

    out = mlp_forward(x, params)
    out = jax.block_until_ready(out)
    assert out.shape == (n, out_dim), out.shape

    ref_mixed = mlp_reference_mixed(x, params)   # same precision recipe
    ref_f32 = mlp_reference_f32(x, params)       # pure-f32 PyTorch semantics
    err_mixed = float(jnp.max(jnp.abs(out - ref_mixed)))
    err_f32 = float(jnp.max(jnp.abs(out - ref_f32)))
    assert jnp.allclose(out, ref_mixed, atol=5e-3, rtol=5e-3), err_mixed
    assert jnp.allclose(out, ref_f32, atol=5e-2, rtol=5e-2), err_f32

    print("KERNEL_OK")
</pallas_src>

<mosaic_0001>
module attributes {stable_mosaic.version = 11 : i64} {
  func.func @_mlp_kernel(%arg0: i32, %arg1: memref<512x2xf32, #tpu.memory_space<vmem>>, %arg2: memref<2x256xf32, #tpu.memory_space<vmem>>, %arg3: memref<1x256xf32, #tpu.memory_space<vmem>>, %arg4: memref<256x256xbf16, #tpu.memory_space<vmem>>, %arg5: memref<1x256xf32, #tpu.memory_space<vmem>>, %arg6: memref<256x256xbf16, #tpu.memory_space<vmem>>, %arg7: memref<1x256xf32, #tpu.memory_space<vmem>>, %arg8: memref<256x256xbf16, #tpu.memory_space<vmem>>, %arg9: memref<1x256xf32, #tpu.memory_space<vmem>>, %arg10: memref<1x256xf32, #tpu.memory_space<vmem>>, %arg11: memref<1x1xf32, #tpu.memory_space<vmem>>, %arg12: memref<512x1xf32, #tpu.memory_space<vmem>>) attributes {dimension_semantics = [#tpu.dimension_semantics<parallel>], iteration_bounds = array<i64: 2>, scalar_prefetch = 0 : i64, scratch_operands = 0 : i64, tpu.core_type = #tpu.core_type<tc>, window_params = [{transform_indices = @transform_0, window_bounds = array<i64: 512, 2>}, {pipeline_mode = #tpu.pipeline_mode<synchronous>, transform_indices = @transform_1, window_bounds = array<i64: 2, 256>}, {pipeline_mode = #tpu.pipeline_mode<synchronous>, transform_indices = @transform_2, window_bounds = array<i64: 1, 256>}, {pipeline_mode = #tpu.pipeline_mode<synchronous>, transform_indices = @transform_3, window_bounds = array<i64: 256, 256>}, {pipeline_mode = #tpu.pipeline_mode<synchronous>, transform_indices = @transform_4, window_bounds = array<i64: 1, 256>}, {pipeline_mode = #tpu.pipeline_mode<synchronous>, transform_indices = @transform_5, window_bounds = array<i64: 256, 256>}, {pipeline_mode = #tpu.pipeline_mode<synchronous>, transform_indices = @transform_6, window_bounds = array<i64: 1, 256>}, {pipeline_mode = #tpu.pipeline_mode<synchronous>, transform_indices = @transform_7, window_bounds = array<i64: 256, 256>}, {pipeline_mode = #tpu.pipeline_mode<synchronous>, transform_indices = @transform_8, window_bounds = array<i64: 1, 256>}, {pipeline_mode = #tpu.pipeline_mode<synchronous>, transform_indices = @transform_9, window_bounds = array<i64: 1, 256>}, {pipeline_mode = #tpu.pipeline_mode<synchronous>, transform_indices = @transform_10, window_bounds = array<i64: 1, 1>}, {transform_indices = @transform_11, window_bounds = array<i64: 512, 1>}]} {
    %c0 = arith.constant 0 : index
    %c0_0 = arith.constant 0 : index
    %0 = vector.load %arg1[%c0, %c0_0] : memref<512x2xf32, #tpu.memory_space<vmem>>, vector<512x2xf32>
    %c0_1 = arith.constant 0 : index
    %c0_2 = arith.constant 0 : index
    %1 = vector.load %arg2[%c0_1, %c0_2] : memref<2x256xf32, #tpu.memory_space<vmem>>, vector<2x256xf32>
    %c0_3 = arith.constant 0 : index
    %c0_4 = arith.constant 0 : index
    %2 = vector.load %arg3[%c0_3, %c0_4] : memref<1x256xf32, #tpu.memory_space<vmem>>, vector<1x256xf32>
    %3 = vector.extract_strided_slice %0 {offsets = [0, 0], sizes = [512, 1], strides = [1, 1]} : vector<512x2xf32> to vector<512x1xf32>
    %4 = vector.extract_strided_slice %1 {offsets = [0, 0], sizes = [1, 256], strides = [1, 1]} : vector<2x256xf32> to vector<1x256xf32>
    %5 = vector.broadcast %3 : vector<512x1xf32> to vector<512x256xf32>
    %6 = vector.broadcast %4 : vector<1x256xf32> to vector<512x256xf32>
    %7 = arith.mulf %5, %6 : vector<512x256xf32>
    %8 = vector.broadcast %2 : vector<1x256xf32> to vector<512x256xf32>
    %9 = arith.addf %8, %7 : vector<512x256xf32>
    %10 = vector.extract_strided_slice %0 {offsets = [0, 1], sizes = [512, 1], strides = [1, 1]} : vector<512x2xf32> to vector<512x1xf32>
    %11 = vector.extract_strided_slice %1 {offsets = [1, 0], sizes = [1, 256], strides = [1, 1]} : vector<2x256xf32> to vector<1x256xf32>
    %12 = vector.broadcast %10 : vector<512x1xf32> to vector<512x256xf32>
    %13 = vector.broadcast %11 : vector<1x256xf32> to vector<512x256xf32>
    %14 = arith.mulf %12, %13 : vector<512x256xf32>
    %15 = arith.addf %9, %14 : vector<512x256xf32>
    %cst = arith.constant 0.000000e+00 : f32
    %16 = vector.broadcast %cst : f32 to vector<512x256xf32>
    %17 = arith.maximumf %15, %16 : vector<512x256xf32>
    %18 = arith.truncf %17 : vector<512x256xf32> to vector<512x256xbf16>
    %c0_5 = arith.constant 0 : index
    %c0_6 = arith.constant 0 : index
    %19 = vector.load %arg4[%c0_5, %c0_6] : memref<256x256xbf16, #tpu.memory_space<vmem>>, vector<256x256xbf16>
    %cst_7 = arith.constant dense<0.000000e+00> : vector<512x256xf32>
    %20 = tpu.matmul %18, %19, %cst_7 {dimension_numbers = #tpu.dot_dimension_numbers<[1], [0], [0], [1], [0, 0, 1, 1], [], []>} : vector<512x256xbf16>, vector<256x256xbf16>, vector<512x256xf32> -> vector<512x256xf32>
    %c0_8 = arith.constant 0 : index
    %c0_9 = arith.constant 0 : index
    %21 = vector.load %arg5[%c0_8, %c0_9] : memref<1x256xf32, #tpu.memory_space<vmem>>, vector<1x256xf32>
    %22 = vector.broadcast %21 : vector<1x256xf32> to vector<512x256xf32>
    %23 = arith.addf %20, %22 : vector<512x256xf32>
    %cst_10 = arith.constant 0.000000e+00 : f32
    %24 = vector.broadcast %cst_10 : f32 to vector<512x256xf32>
    %25 = arith.maximumf %23, %24 : vector<512x256xf32>
    %26 = arith.truncf %25 : vector<512x256xf32> to vector<512x256xbf16>
    %c0_11 = arith.constant 0 : index
    %c0_12 = arith.constant 0 : index
    %27 = vector.load %arg6[%c0_11, %c0_12] : memref<256x256xbf16, #tpu.memory_space<vmem>>, vector<256x256xbf16>
    %cst_13 = arith.constant dense<0.000000e+00> : vector<512x256xf32>
    %28 = tpu.matmul %26, %27, %cst_13 {dimension_numbers = #tpu.dot_dimension_numbers<[1], [0], [0], [1], [0, 0, 1, 1], [], []>} : vector<512x256xbf16>, vector<256x256xbf16>, vector<512x256xf32> -> vector<512x256xf32>
    %c0_14 = arith.constant 0 : index
    %c0_15 = arith.constant 0 : index
    %29 = vector.load %arg7[%c0_14, %c0_15] : memref<1x256xf32, #tpu.memory_space<vmem>>, vector<1x256xf32>
    %30 = vector.broadcast %29 : vector<1x256xf32> to vector<512x256xf32>
    %31 = arith.addf %28, %30 : vector<512x256xf32>
    %cst_16 = arith.constant 0.000000e+00 : f32
    %32 = vector.broadcast %cst_16 : f32 to vector<512x256xf32>
    %33 = arith.maximumf %31, %32 : vector<512x256xf32>
    %34 = arith.truncf %33 : vector<512x256xf32> to vector<512x256xbf16>
    %c0_17 = arith.constant 0 : index
    %c0_18 = arith.constant 0 : index
    %35 = vector.load %arg8[%c0_17, %c0_18] : memref<256x256xbf16, #tpu.memory_space<vmem>>, vector<256x256xbf16>
    %cst_19 = arith.constant dense<0.000000e+00> : vector<512x256xf32>
    %36 = tpu.matmul %34, %35, %cst_19 {dimension_numbers = #tpu.dot_dimension_numbers<[1], [0], [0], [1], [0, 0, 1, 1], [], []>} : vector<512x256xbf16>, vector<256x256xbf16>, vector<512x256xf32> -> vector<512x256xf32>
    %c0_20 = arith.constant 0 : index
    %c0_21 = arith.constant 0 : index
    %37 = vector.load %arg9[%c0_20, %c0_21] : memref<1x256xf32, #tpu.memory_space<vmem>>, vector<1x256xf32>
    %38 = vector.broadcast %37 : vector<1x256xf32> to vector<512x256xf32>
    %39 = arith.addf %36, %38 : vector<512x256xf32>
    %cst_22 = arith.constant 0.000000e+00 : f32
    %40 = vector.broadcast %cst_22 : f32 to vector<512x256xf32>
    %41 = arith.maximumf %39, %40 : vector<512x256xf32>
    %42 = arith.truncf %41 : vector<512x256xf32> to vector<512x256xbf16>
    %43 = arith.extf %42 : vector<512x256xbf16> to vector<512x256xf32>
    %c0_23 = arith.constant 0 : index
    %c0_24 = arith.constant 0 : index
    %44 = vector.load %arg10[%c0_23, %c0_24] : memref<1x256xf32, #tpu.memory_space<vmem>>, vector<1x256xf32>
    %45 = vector.broadcast %44 : vector<1x256xf32> to vector<512x256xf32>
    %46 = arith.mulf %43, %45 : vector<512x256xf32>
    %cst_25 = arith.constant dense<0.000000e+00> : vector<512xf32>
    %47 = vector.multi_reduction <add>, %46, %cst_25 [1] : vector<512x256xf32> to vector<512xf32>
    %48 = vector.shape_cast %47 : vector<512xf32> to vector<512x1xf32>
    %c0_26 = arith.constant 0 : index
    %c0_27 = arith.constant 0 : index
    %49 = vector.load %arg11[%c0_26, %c0_27] : memref<1x1xf32, #tpu.memory_space<vmem>>, vector<1x1xf32>
    %50 = vector.broadcast %49 : vector<1x1xf32> to vector<512x1xf32>
    %51 = arith.addf %48, %50 : vector<512x1xf32>
    %c0_28 = arith.constant 0 : index
    %c0_29 = arith.constant 0 : index
    %52 = vector.load %arg12[%c0_28, %c0_29] : memref<512x1xf32, #tpu.memory_space<vmem>>, vector<512x1xf32>
    tpu.vector_store %arg12[%c0_28, %c0_29], %51 {strides = array<i32>} : memref<512x1xf32, #tpu.memory_space<vmem>>, vector<512x1xf32>,
    return
  }
  func.func @transform_0(%arg0: i32) -> (i32, i32) {
    %c0_i32 = arith.constant 0 : i32
    %c0_i32_0 = arith.constant 0 : i32
    return %arg0, %c0_i32 : i32, i32
  }
  func.func @transform_1(%arg0: i32) -> (i32, i32) {
    %c0_i32 = arith.constant 0 : i32
    %c0_i32_0 = arith.constant 0 : i32
    %c0_i32_1 = arith.constant 0 : i32
    return %c0_i32, %c0_i32_0 : i32, i32
  }
  func.func @transform_2(%arg0: i32) -> (i32, i32) {
    %c0_i32 = arith.constant 0 : i32
    %c0_i32_0 = arith.constant 0 : i32
    %c0_i32_1 = arith.constant 0 : i32
    return %c0_i32, %c0_i32_0 : i32, i32
  }
  func.func @transform_3(%arg0: i32) -> (i32, i32) {
    %c0_i32 = arith.constant 0 : i32
    %c0_i32_0 = arith.constant 0 : i32
    %c0_i32_1 = arith.constant 0 : i32
    return %c0_i32, %c0_i32_0 : i32, i32
  }
  func.func @transform_4(%arg0: i32) -> (i32, i32) {
    %c0_i32 = arith.constant 0 : i32
    %c0_i32_0 = arith.constant 0 : i32
    %c0_i32_1 = arith.constant 0 : i32
    return %c0_i32, %c0_i32_0 : i32, i32
  }
  func.func @transform_5(%arg0: i32) -> (i32, i32) {
    %c0_i32 = arith.constant 0 : i32
    %c0_i32_0 = arith.constant 0 : i32
    %c0_i32_1 = arith.constant 0 : i32
    return %c0_i32, %c0_i32_0 : i32, i32
  }
  func.func @transform_6(%arg0: i32) -> (i32, i32) {
    %c0_i32 = arith.constant 0 : i32
    %c0_i32_0 = arith.constant 0 : i32
    %c0_i32_1 = arith.constant 0 : i32
    return %c0_i32, %c0_i32_0 : i32, i32
  }
  func.func @transform_7(%arg0: i32) -> (i32, i32) {
    %c0_i32 = arith.constant 0 : i32
    %c0_i32_0 = arith.constant 0 : i32
    %c0_i32_1 = arith.constant 0 : i32
    return %c0_i32, %c0_i32_0 : i32, i32
  }
  func.func @transform_8(%arg0: i32) -> (i32, i32) {
    %c0_i32 = arith.constant 0 : i32
    %c0_i32_0 = arith.constant 0 : i32
    %c0_i32_1 = arith.constant 0 : i32
    return %c0_i32, %c0_i32_0 : i32, i32
  }
  func.func @transform_9(%arg0: i32) -> (i32, i32) {
    %c0_i32 = arith.constant 0 : i32
    %c0_i32_0 = arith.constant 0 : i32
    %c0_i32_1 = arith.constant 0 : i32
    return %c0_i32, %c0_i32_0 : i32, i32
  }
  func.func @transform_10(%arg0: i32) -> (i32, i32) {
    %c0_i32 = arith.constant 0 : i32
    %c0_i32_0 = arith.constant 0 : i32
    %c0_i32_1 = arith.constant 0 : i32
    return %c0_i32, %c0_i32_0 : i32, i32
  }
  func.func @transform_11(%arg0: i32) -> (i32, i32) {
    %c0_i32 = arith.constant 0 : i32
    %c0_i32_0 = arith.constant 0 : i32
    return %arg0, %c0_i32 : i32, i32
  }
}

</mosaic_0001>

<llo_original>
// kernel: mlp_forward.1
$region0: #{mlp_forward.1}
  #allocation0 [shape = 'u32[]', space=smem, size = 0x4, offset = 0x4, fixed_abs, tag = 'smem constant byte address 0x4 - core index']
  #allocation1 [shape = 'u32[144,128]{1,0:T(1,128)}', space=vmem, size = 0x12000, scoped, tag = 'internal scratch']
  #allocation2 [shape = 'f32[1,1]{1,0:T(1,128)S(1)}', space=vmem, size = 0x200, scoped, tag = 'scoped memory for mlp_forward.1']
  %s0 = inlined_call_operand.vmem [shape: f32[1024,2], index: 0, kind: input, shape index: {}]
  %s1 = inlined_call_operand.vmem [shape: f32[2,256], index: 1, kind: input, shape index: {}]
  %s2 = inlined_call_operand.vmem [shape: f32[1,256], index: 2, kind: input, shape index: {}]
  %s3 = inlined_call_operand.vmem [shape: bf16[256,256], index: 3, kind: input, shape index: {}]
  %s4 = inlined_call_operand.vmem [shape: f32[1,256], index: 4, kind: input, shape index: {}]
  %s5 = inlined_call_operand.vmem [shape: bf16[256,256], index: 5, kind: input, shape index: {}]
  %s6 = inlined_call_operand.vmem [shape: f32[1,256], index: 6, kind: input, shape index: {}]
  %s7 = inlined_call_operand.vmem [shape: bf16[256,256], index: 7, kind: input, shape index: {}]
  %s8 = inlined_call_operand.vmem [shape: f32[1,256], index: 8, kind: input, shape index: {}]
  %s9 = inlined_call_operand.vmem [shape: f32[1,256], index: 9, kind: input, shape index: {}]
  %s10 = inlined_call_operand.<no memory space> [shape: f32[1,1], index: 10, kind: input, shape index: {}]
  %s11 = inlined_call_operand.vmem [shape: f32[1024,1], index: 11, kind: output, shape index: {}]
  %s12 = sld [smem:[#allocation0]]
  $region77: #{mlp_forward.1} parent=0
    _
  %s14 = ssub.s32 1, %s12
  %s15 = scalar_select 0, %s14, %s12
  %v16 = vstv %s10
  %17 = vst [vmem:[#allocation2] sm:$0x1] %v16
  loop: start=0, step=1, limit=4
  $region2: #{mlp_forward.1} parent=0 // loop_pre_header
    _
  $region3: #{mlp_forward.1} parent=0 // loop_header
    %s19 = sphi 0, %s23
    %p20 = scmp.ge.s32.totalorder %s19, 4
    %s29 = sphi 0, %s31
    %s32 = sphi 0, %s29
    %s33 = sphi 0, %s32
    %s49 = sphi 0, %s33
    %s53 = sphi 0, %s53
    %s55 = sphi 0, %s53
    %s56 = sphi 0, %s55
    %s70 = sphi 0, %s56
    %s74 = sphi 0, %s74
    %s76 = sphi 0, %s74
    %s77 = sphi 0, %s76
    %s91 = sphi 0, %s77
    %s95 = sphi 0, %s95
    %s97 = sphi 0, %s95
    %s98 = sphi 0, %s97
    %s112 = sphi 0, %s98
    %s116 = sphi 0, %s116
    %s118 = sphi 0, %s116
    %s119 = sphi 0, %s118
    %s133 = sphi 0, %s119
    %s137 = sphi 0, %s137
    %s139 = sphi 0, %s137
    %s140 = sphi 0, %s139
    %s154 = sphi 0, %s140
    %s158 = sphi 0, %s158
    %s160 = sphi 0, %s158
    %s161 = sphi 0, %s160
    %s175 = sphi 0, %s161
    %s179 = sphi 0, %s179
    %s181 = sphi 0, %s179
    %s182 = sphi 0, %s181
    %s196 = sphi 0, %s182
    %s200 = sphi 0, %s200
    %s202 = sphi 0, %s200
    %s203 = sphi 0, %s202
    %s217 = sphi 0, %s203
    %s221 = sphi 0, %s221
    %s223 = sphi 0, %s221
    %s224 = sphi 0, %s223
    %s238 = sphi 0, %s224
    %s242 = sphi 0, %s242
    %s244 = sphi 0, %s242
    %s245 = sphi 0, %s244
    %s259 = sphi 0, %s245
    %s265 = sphi 0, %s267
    %s268 = sphi 0, %s265
    %s269 = sphi 0, %s268
    %s285 = sphi 0, %s269
  $region4: #{mlp_forward.1} parent=0 // loop_header_branch
    %22 = sbr.rel (%p20) target = $region8
  $region5: #{mlp_forward.1} parent=0 // loop_body
    %s24 = ssub.s32 %s19, 1
    %s25 = ssub.s32 %s19, 2
    %s26 = sadd.s32 %s19, 1
    %s27 = ssub.s32 %s19, %s26
    %p28 = scmp.eq.s32.totalorder %s27, 0
    %s30 = sadd.s32 %s29, 1
    %s31 = scalar_select %p28, %s29, %s30
    %p34 = pneg %p28
    %p35 = scmp.eq.s32.totalorder %s19, 1
    %p36 = por %p34, %p35
    %p37 = scmp.ne.s32.totalorder %s29, %s32
    %p38 = scmp.eq.s32.totalorder %s19, 0
    %p39 = por %p37, %p38
    %p40 = scmp.ne.s32.totalorder %s29, %s32
    %p41 = scmp.eq.s32.totalorder %s24, 1
    %p42 = por %p40, %p41
    %p43 = scmp.ne.s32.totalorder %s32, %s33
    %p44 = scmp.eq.s32.totalorder %s24, 0
    %p45 = por %p43, %p44
    %p46 = scmp.ne.s32.totalorder %s32, %s33
    %p47 = scmp.eq.s32.totalorder %s25, 1
    %p48 = por %p46, %p47
    %p50 = scmp.ne.s32.totalorder %s33, %s49
    %p51 = scmp.eq.s32.totalorder %s25, 0
    %p52 = por %p50, %p51
    %s54 = sadd.s32 %s53, 1
    %p57 = scmp.eq.s32.totalorder %s19, 1
    %p58 = scmp.ne.s32.totalorder %s53, %s55
    %p59 = scmp.eq.s32.totalorder %s19, 0
    %p60 = por %p58, %p59
    %p61 = scmp.ne.s32.totalorder %s53, %s55
    %p62 = scmp.eq.s32.totalorder %s24, 1
    %p63 = por %p61, %p62
    %p64 = scmp.ne.s32.totalorder %s55, %s56
    %p65 = scmp.eq.s32.totalorder %s24, 0
    %p66 = por %p64, %p65
    %p67 = scmp.ne.s32.totalorder %s55, %s56
    %p68 = scmp.eq.s32.totalorder %s25, 1
    %p69 = por %p67, %p68
    %p71 = scmp.ne.s32.totalorder %s56, %s70
    %p72 = scmp.eq.s32.totalorder %s25, 0
    %p73 = por %p71, %p72
    %s75 = sadd.s32 %s74, 1
    %p78 = scmp.eq.s32.totalorder %s19, 1
    %p79 = scmp.ne.s32.totalorder %s74, %s76
    %p80 = scmp.eq.s32.totalorder %s19, 0
    %p81 = por %p79, %p80
    %p82 = scmp.ne.s32.totalorder %s74, %s76
    %p83 = scmp.eq.s32.totalorder %s24, 1
    %p84 = por %p82, %p83
    %p85 = scmp.ne.s32.totalorder %s76, %s77
    %p86 = scmp.eq.s32.totalorder %s24, 0
    %p87 = por %p85, %p86
    %p88 = scmp.ne.s32.totalorder %s76, %s77
    %p89 = scmp.eq.s32.totalorder %s25, 1
    %p90 = por %p88, %p89
    %p92 = scmp.ne.s32.totalorder %s77, %s91
    %p93 = scmp.eq.s32.totalorder %s25, 0
    %p94 = por %p92, %p93
    %s96 = sadd.s32 %s95, 1
    %p99 = scmp.eq.s32.totalorder %s19, 1
    %p100 = scmp.ne.s32.totalorder %s95, %s97
    %p101 = scmp.eq.s32.totalorder %s19, 0
    %p102 = por %p100, %p101
    %p103 = scmp.ne.s32.totalorder %s95, %s97
    %p104 = scmp.eq.s32.totalorder %s24, 1
    %p105 = por %p103, %p104
    %p106 = scmp.ne.s32.totalorder %s97, %s98
    %p107 = scmp.eq.s32.totalorder %s24, 0
    %p108 = por %p106, %p107
    %p109 = scmp.ne.s32.totalorder %s97, %s98
    %p110 = scmp.eq.s32.totalorder %s25, 1
    %p111 = por %p109, %p110
    %p113 = scmp.ne.s32.totalorder %s98, %s112
    %p114 = scmp.eq.s32.totalorder %s25, 0
    %p115 = por %p113, %p114
    %s117 = sadd.s32 %s116, 1
    %p120 = scmp.eq.s32.totalorder %s19, 1
    %p121 = scmp.ne.s32.totalorder %s116, %s118
    %p122 = scmp.eq.s32.totalorder %s19, 0
    %p123 = por %p121, %p122
    %p124 = scmp.ne.s32.totalorder %s116, %s118
    %p125 = scmp.eq.s32.totalorder %s24, 1
    %p126 = por %p124, %p125
    %p127 = scmp.ne.s32.totalorder %s118, %s119
    %p128 = scmp.eq.s32.totalorder %s24, 0
    %p129 = por %p127, %p128
    %p130 = scmp.ne.s32.totalorder %s118, %s119
    %p131 = scmp.eq.s32.totalorder %s25, 1
    %p132 = por %p130, %p131
    %p134 = scmp.ne.s32.totalorder %s119, %s133
    %p135 = scmp.eq.s32.totalorder %s25, 0
    %p136 = por %p134, %p135
    %s138 = sadd.s32 %s137, 1
    %p141 = scmp.eq.s32.totalorder %s19, 1
    %p142 = scmp.ne.s32.totalorder %s137, %s139
    %p143 = scmp.eq.s32.totalorder %s19, 0
    %p144 = por %p142, %p143
    %p145 = scmp.ne.s32.totalorder %s137, %s139
    %p146 = scmp.eq.s32.totalorder %s24, 1
    %p147 = por %p145, %p146
    %p148 = scmp.ne.s32.totalorder %s139, %s140
    %p149 = scmp.eq.s32.totalorder %s24, 0
    %p150 = por %p148, %p149
    %p151 = scmp.ne.s32.totalorder %s139, %s140
    %p152 = scmp.eq.s32.totalorder %s25, 1
    %p153 = por %p151, %p152
    %p155 = scmp.ne.s32.totalorder %s140, %s154
    %p156 = scmp.eq.s32.totalorder %s25, 0
    %p157 = por %p155, %p156
    %s159 = sadd.s32 %s158, 1
    %p162 = scmp.eq.s32.totalorder %s19, 1
    %p163 = scmp.ne.s32.totalorder %s158, %s160
    %p164 = scmp.eq.s32.totalorder %s19, 0
    %p165 = por %p163, %p164
    %p166 = scmp.ne.s32.totalorder %s158, %s160
    %p167 = scmp.eq.s32.totalorder %s24, 1
    %p168 = por %p166, %p167
    %p169 = scmp.ne.s32.totalorder %s160, %s161
    %p170 = scmp.eq.s32.totalorder %s24, 0
    %p171 = por %p169, %p170
    %p172 = scmp.ne.s32.totalorder %s160, %s161
    %p173 = scmp.eq.s32.totalorder %s25, 1
    %p174 = por %p172, %p173
    %p176 = scmp.ne.s32.totalorder %s161, %s175
    %p177 = scmp.eq.s32.totalorder %s25, 0
    %p178 = por %p176, %p177
    %s180 = sadd.s32 %s179, 1
    %p183 = scmp.eq.s32.totalorder %s19, 1
    %p184 = scmp.ne.s32.totalorder %s179, %s181
    %p185 = scmp.eq.s32.totalorder %s19, 0
    %p186 = por %p184, %p185
    %p187 = scmp.ne.s32.totalorder %s179, %s181
    %p188 = scmp.eq.s32.totalorder %s24, 1
    %p189 = por %p187, %p188
    %p190 = scmp.ne.s32.totalorder %s181, %s182
    %p191 = scmp.eq.s32.totalorder %s24, 0
    %p192 = por %p190, %p191
    %p193 = scmp.ne.s32.totalorder %s181, %s182
    %p194 = scmp.eq.s32.totalorder %s25, 1
    %p195 = por %p193, %p194
    %p197 = scmp.ne.s32.totalorder %s182, %s196
    %p198 = scmp.eq.s32.totalorder %s25, 0
    %p199 = por %p197, %p198
    %s201 = sadd.s32 %s200, 1
    %p204 = scmp.eq.s32.totalorder %s19, 1
    %p205 = scmp.ne.s32.totalorder %s200, %s202
    %p206 = scmp.eq.s32.totalorder %s19, 0
    %p207 = por %p205, %p206
    %p208 = scmp.ne.s32.totalorder %s200, %s202
    %p209 = scmp.eq.s32.totalorder %s24, 1
    %p210 = por %p208, %p209
    %p211 = scmp.ne.s32.totalorder %s202, %s203
    %p212 = scmp.eq.s32.totalorder %s24, 0
    %p213 = por %p211, %p212
    %p214 = scmp.ne.s32.totalorder %s202, %s203
    %p215 = scmp.eq.s32.totalorder %s25, 1
    %p216 = por %p214, %p215
    %p218 = scmp.ne.s32.totalorder %s203, %s217
    %p219 = scmp.eq.s32.totalorder %s25, 0
    %p220 = por %p218, %p219
    %s222 = sadd.s32 %s221, 1
    %p225 = scmp.eq.s32.totalorder %s19, 1
    %p226 = scmp.ne.s32.totalorder %s221, %s223
    %p227 = scmp.eq.s32.totalorder %s19, 0
    %p228 = por %p226, %p227
    %p229 = scmp.ne.s32.totalorder %s221, %s223
    %p230 = scmp.eq.s32.totalorder %s24, 1
    %p231 = por %p229, %p230
    %p232 = scmp.ne.s32.totalorder %s223, %s224
    %p233 = scmp.eq.s32.totalorder %s24, 0
    %p234 = por %p232, %p233
    %p235 = scmp.ne.s32.totalorder %s223, %s224
    %p236 = scmp.eq.s32.totalorder %s25, 1
    %p237 = por %p235, %p236
    %p239 = scmp.ne.s32.totalorder %s224, %s238
    %p240 = scmp.eq.s32.totalorder %s25, 0
    %p241 = por %p239, %p240
    %s243 = sadd.s32 %s242, 1
    %p246 = scmp.eq.s32.totalorder %s19, 1
    %p247 = scmp.ne.s32.totalorder %s242, %s244
    %p248 = scmp.eq.s32.totalorder %s19, 0
    %p249 = por %p247, %p248
    %p250 = scmp.ne.s32.totalorder %s242, %s244
    %p251 = scmp.eq.s32.totalorder %s24, 1
    %p252 = por %p250, %p251
    %p253 = scmp.ne.s32.totalorder %s244, %s245
    %p254 = scmp.eq.s32.totalorder %s24, 0
    %p255 = por %p253, %p254
    %p256 = scmp.ne.s32.totalorder %s244, %s245
    %p257 = scmp.eq.s32.totalorder %s25, 1
    %p258 = por %p256, %p257
    %p260 = scmp.ne.s32.totalorder %s245, %s259
    %p261 = scmp.eq.s32.totalorder %s25, 0
    %p262 = por %p260, %p261
    %s263 = ssub.s32 %s19, %s26
    %p264 = scmp.eq.s32.totalorder %s263, 0
    %s266 = sadd.s32 %s265, 1
    %s267 = scalar_select %p264, %s265, %s266
    %p270 = pneg %p264
    %p271 = scmp.eq.s32.totalorder %s19, 1
    %p272 = por %p270, %p271
    %p273 = scmp.ne.s32.totalorder %s265, %s268
    %p274 = scmp.eq.s32.totalorder %s19, 0
    %p275 = por %p273, %p274
    %p276 = scmp.ne.s32.totalorder %s265, %s268
    %p277 = scmp.eq.s32.totalorder %s24, 1
    %p278 = por %p276, %p277
    %p279 = scmp.ne.s32.totalorder %s268, %s269
    %p280 = scmp.eq.s32.totalorder %s24, 0
    %p281 = por %p279, %p280
    %p282 = scmp.ne.s32.totalorder %s268, %s269
    %p283 = scmp.eq.s32.totalorder %s25, 1
    %p284 = por %p282, %p283
    %p286 = scmp.ne.s32.totalorder %s269, %s285
    %p287 = scmp.eq.s32.totalorder %s25, 0
    %p288 = por %p286, %p287
    %p289 = scmp.le.s32.totalorder 1, %s19
    %p290 = scmp.lt.s32.totalorder %s19, 3
    %p291 = pnand %p289, %p290
    %p292 = pneg %p291
    // Predicated region
    $region9: #{mlp_forward.1} parent=5 // pred_check
      _
    $region10: #{mlp_forward.1} parent=5 // pred_check_branch
      %294 = sbr.rel (%p291) target = $region12
    $region11: #{mlp_forward.1} parent=5 // pred_region
      %s295 = ssub.s32 %s19, 1
      // Predicated region
      $region13: #{mlp_forward.1} parent=11 // pred_check
        %p296 = pneg %p66
      $region14: #{mlp_forward.1} parent=11 // pred_check_branch
        %298 = sbr.rel (%p296) target = $region16
      $region15: #{mlp_forward.1} parent=11 // pred_region
        _
      $region16: #{mlp_forward.1} parent=11 // pred_fallthru
        _
      // Predicated region
      $region17: #{mlp_forward.1} parent=11 // pred_check
        %p299 = pneg %p87
      $region18: #{mlp_forward.1} parent=11 // pred_check_branch
        %301 = sbr.rel (%p299) target = $region20
      $region19: #{mlp_forward.1} parent=11 // pred_region
        _
      $region20: #{mlp_forward.1} parent=11 // pred_fallthru
        _
      // Predicated region
      $region21: #{mlp_forward.1} parent=11 // pred_check
        %p302 = pneg %p108
      $region22: #{mlp_forward.1} parent=11 // pred_check_branch
        %304 = sbr.rel (%p302) target = $region24
      $region23: #{mlp_forward.1} parent=11 // pred_region
        _
      $region24: #{mlp_forward.1} parent=11 // pred_fallthru
        _
      // Predicated region
      $region25: #{mlp_forward.1} parent=11 // pred_check
        %p305 = pneg %p129
      $region26: #{mlp_forward.1} parent=11 // pred_check_branch
        %307 = sbr.rel (%p305) target = $region28
      $region27: #{mlp_forward.1} parent=11 // pred_region
        _
      $region28: #{mlp_forward.1} parent=11 // pred_fallthru
        _
      // Predicated region
      $region29: #{mlp_forward.1} parent=11 // pred_check
        %p308 = pneg %p150
      $region30: #{mlp_forward.1} parent=11 // pred_check_branch
        %310 = sbr.rel (%p308) target = $region32
      $region31: #{mlp_forward.1} parent=11 // pred_region
        _
      $region32: #{mlp_forward.1} parent=11 // pred_fallthru
        _
      // Predicated region
      $region33: #{mlp_forward.1} parent=11 // pred_check
        %p311 = pneg %p171
      $region34: #{mlp_forward.1} parent=11 // pred_check_branch
        %313 = sbr.rel (%p311) target = $region36
      $region35: #{mlp_forward.1} parent=11 // pred_region
        _
      $region36: #{mlp_forward.1} parent=11 // pred_fallthru
        _
      // Predicated region
      $region37: #{mlp_forward.1} parent=11 // pred_check
        %p314 = pneg %p192
      $region38: #{mlp_forward.1} parent=11 // pred_check_branch
        %316 = sbr.rel (%p314) target = $region40
      $region39: #{mlp_forward.1} parent=11 // pred_region
        _
      $region40: #{mlp_forward.1} parent=11 // pred_fallthru
        _
      // Predicated region
      $region41: #{mlp_forward.1} parent=11 // pred_check
        %p317 = pneg %p213
      $region42: #{mlp_forward.1} parent=11 // pred_check_branch
        %319 = sbr.rel (%p317) target = $region44
      $region43: #{mlp_forward.1} parent=11 // pred_region
        _
      $region44: #{mlp_forward.1} parent=11 // pred_fallthru
        _
      // Predicated region
      $region45: #{mlp_forward.1} parent=11 // pred_check
        %p320 = pneg %p234
      $region46: #{mlp_forward.1} parent=11 // pred_check_branch
        %322 = sbr.rel (%p320) target = $region48
      $region47: #{mlp_forward.1} parent=11 // pred_region
        _
      $region48: #{mlp_forward.1} parent=11 // pred_fallthru
        _
      // Predicated region
      $region49: #{mlp_forward.1} parent=11 // pred_check
        %p323 = pneg %p255
      $region50: #{mlp_forward.1} parent=11 // pred_check_branch
        %325 = sbr.rel (%p323) target = $region52
      $region51: #{mlp_forward.1} parent=11 // pred_region
        _
      $region52: #{mlp_forward.1} parent=11 // pred_fallthru
        _
    $region12: #{mlp_forward.1} parent=5 // pred_fallthru
      _
    %p326 = scmp.lt.s32.totalorder %s19, 2
    // Predicated region
    $region53: #{mlp_forward.1} parent=5 // pred_check
      %p327 = pneg %p326
    $region54: #{mlp_forward.1} parent=5 // pred_check_branch
      %329 = sbr.rel (%p327) target = $region56
    $region55: #{mlp_forward.1} parent=5 // pred_region
      // Predicated region
      $region57: #{mlp_forward.1} parent=55 // pred_check
        %p330 = pneg %p39
      $region58: #{mlp_forward.1} parent=55 // pred_check_branch
        %332 = sbr.rel (%p330) target = $region60
      $region59: #{mlp_forward.1} parent=55 // pred_region
        %s333 = smul.u32 64, %s19
        %p334 = scmp.lt.s32.totalorder %s333, 127
        %s335 = scalar_select %p334, %s333, 127
        %s336 = smul.addr %s335, 8
        %s337 = scalar_lea.vmem %s0, %s336
        %s338 = smul.u32 64, %s19
      $region60: #{mlp_forward.1} parent=55 // pred_fallthru
        _
    $region56: #{mlp_forward.1} parent=5 // pred_fallthru
      _
    %p339 = scmp.le.s32.totalorder 1, %s19
    %p340 = scmp.lt.s32.totalorder %s19, 3
    %p341 = pnand %p339, %p340
    %p342 = pneg %p341
    // Predicated region
    $region61: #{mlp_forward.1} parent=5 // pred_check
      _
    $region62: #{mlp_forward.1} parent=5 // pred_check_branch
      %344 = sbr.rel (%p341) target = $region64
    $region63: #{mlp_forward.1} parent=5 // pred_region
      %s345 = ssub.s32 %s19, 1
      %s346 = smul.u32 64, %s24
      %p347 = scmp.lt.s32.totalorder %s346, 127
      %s348 = scalar_select %p347, %s346, 127
      %s349 = smul.addr %s348, 8
      %s350 = scalar_lea.vmem %s0, %s349
      %p351 = pneg %p45
      %p352 = pneg %p42
      %p353 = pneg %p66
      %p354 = pneg %p63
      %p355 = pneg %p87
      %p356 = pneg %p84
      %p357 = pneg %p108
      %p358 = pneg %p105
      %p359 = pneg %p129
      %p360 = pneg %p126
      %p361 = pneg %p150
      %p362 = pneg %p147
      %p363 = pneg %p171
      %p364 = pneg %p168
      %p365 = pneg %p192
      %p366 = pneg %p189
      %p367 = pneg %p213
      %p368 = pneg %p210
      %p369 = pneg %p234
      %p370 = pneg %p231
      %p371 = pneg %p255
      %p372 = pneg %p252
      %p373 = pneg %p281
      %p374 = pneg %p278
      %s375 = smul.u32 64, %s24
      %p376 = scmp.lt.s32.totalorder %s375, 127
      %s377 = scalar_select %p376, %s375, 127
      %s378 = smul.addr %s377, 8
      %s379 = scalar_lea.vmem %s11, %s378
      %s380 = smul.u32 64, %s24
      %p381 = scmp.lt.s32.totalorder %s380, 127
      %s382 = scalar_select %p381, %s380, 127
      %s383 = smul.addr %s382, 8
      %s384 = scalar_lea.vmem %s0, %s383
      %s385 = smul.u32 64, %s24
      %s386 = smul.u32 64, %s24
      %p387 = scmp.lt.s32.totalorder %s386, 127
      %s388 = scalar_select %p387, %s386, 127
      %s389 = smul.addr %s388, 8
      %s390 = scalar_lea.vmem %s11, %s389
      %s391 = smul.u32 64, %s24
      %v392 = vld [vmem:[%s384] sm:$0xff]
      %v393 = vld [vmem:[%s384 + $0x8] sm:$0xff]
      %v394 = vld [vmem:[%s384 + $0x10] sm:$0xff]
      %v395 = vld [vmem:[%s384 + $0x18] sm:$0xff]
      %v396 = vld [vmem:[%s384 + $0x20] sm:$0xff]
      %v397 = vld [vmem:[%s384 + $0x28] sm:$0xff]
      %v398 = vld [vmem:[%s384 + $0x30] sm:$0xff]
      %v399 = vld [vmem:[%s384 + $0x38] sm:$0xff]
      %v400 = vld [vmem:[%s384 + $0x40] sm:$0xff]
      %v401 = vld [vmem:[%s384 + $0x48] sm:$0xff]
      %v402 = vld [vmem:[%s384 + $0x50] sm:$0xff]
      %v403 = vld [vmem:[%s384 + $0x58] sm:$0xff]
      %v404 = vld [vmem:[%s384 + $0x60] sm:$0xff]
      %v405 = vld [vmem:[%s384 + $0x68] sm:$0xff]
      %v406 = vld [vmem:[%s384 + $0x70] sm:$0xff]
      %v407 = vld [vmem:[%s384 + $0x78] sm:$0xff]
      %v408 = vld [vmem:[%s384 + $0x80] sm:$0xff]
      %v409 = vld [vmem:[%s384 + $0x88] sm:$0xff]
      %v410 = vld [vmem:[%s384 + $0x90] sm:$0xff]
      %v411 = vld [vmem:[%s384 + $0x98] sm:$0xff]
      %v412 = vld [vmem:[%s384 + $0xa0] sm:$0xff]
      %v413 = vld [vmem:[%s384 + $0xa8] sm:$0xff]
      %v414 = vld [vmem:[%s384 + $0xb0] sm:$0xff]
      %v415 = vld [vmem:[%s384 + $0xb8] sm:$0xff]
      %v416 = vld [vmem:[%s384 + $0xc0] sm:$0xff]
      %v417 = vld [vmem:[%s384 + $0xc8] sm:$0xff]
      %v418 = vld [vmem:[%s384 + $0xd0] sm:$0xff]
      %v419 = vld [vmem:[%s384 + $0xd8] sm:$0xff]
      %v420 = vld [vmem:[%s384 + $0xe0] sm:$0xff]
      %v421 = vld [vmem:[%s384 + $0xe8] sm:$0xff]
      %v422 = vld [vmem:[%s384 + $0xf0] sm:$0xff]
      %v423 = vld [vmem:[%s384 + $0xf8] sm:$0xff]
      %v424 = vld [vmem:[%s384 + $0x100] sm:$0xff]
      %v425 = vld [vmem:[%s384 + $0x108] sm:$0xff]
      %v426 = vld [vmem:[%s384 + $0x110] sm:$0xff]
      %v427 = vld [vmem:[%s384 + $0x118] sm:$0xff]
      %v428 = vld [vmem:[%s384 + $0x120] sm:$0xff]
      %v429 = vld [vmem:[%s384 + $0x128] sm:$0xff]
      %v430 = vld [vmem:[%s384 + $0x130] sm:$0xff]
      %v431 = vld [vmem:[%s384 + $0x138] sm:$0xff]
      %v432 = vld [vmem:[%s384 + $0x140] sm:$0xff]
      %v433 = vld [vmem:[%s384 + $0x148] sm:$0xff]
      %v434 = vld [vmem:[%s384 + $0x150] sm:$0xff]
      %v435 = vld [vmem:[%s384 + $0x158] sm:$0xff]
      %v436 = vld [vmem:[%s384 + $0x160] sm:$0xff]
      %v437 = vld [vmem:[%s384 + $0x168] sm:$0xff]
      %v438 = vld [vmem:[%s384 + $0x170] sm:$0xff]
      %v439 = vld [vmem:[%s384 + $0x178] sm:$0xff]
      %v440 = vld [vmem:[%s384 + $0x180] sm:$0xff]
      %v441 = vld [vmem:[%s384 + $0x188] sm:$0xff]
      %v442 = vld [vmem:[%s384 + $0x190] sm:$0xff]
      %v443 = vld [vmem:[%s384 + $0x198] sm:$0xff]
      %v444 = vld [vmem:[%s384 + $0x1a0] sm:$0xff]
      %v445 = vld [vmem:[%s384 + $0x1a8] sm:$0xff]
      %v446 = vld [vmem:[%s384 + $0x1b0] sm:$0xff]
      %v447 = vld [vmem:[%s384 + $0x1b8] sm:$0xff]
      %v448 = vld [vmem:[%s384 + $0x1c0] sm:$0xff]
      %v449 = vld [vmem:[%s384 + $0x1c8] sm:$0xff]
      %v450 = vld [vmem:[%s384 + $0x1d0] sm:$0xff]
      %v451 = vld [vmem:[%s384 + $0x1d8] sm:$0xff]
      %v452 = vld [vmem:[%s384 + $0x1e0] sm:$0xff]
      %v453 = vld [vmem:[%s384 + $0x1e8] sm:$0xff]
      %v454 = vld [vmem:[%s384 + $0x1f0] sm:$0xff]
      %v455 = vld [vmem:[%s384 + $0x1f8] sm:$0xff]
      %v456 = vld [vmem:[%s1] sm:$0xf]
      %v457 = vld [vmem:[%s2] sm:$0x3]
      %459 = vset.pattern.permute.xlu0 0
      %460 = vperm.xlu0 %459, %v392
      %v461 = vpop.permute.xlu0 %460
      %464 = vset.pattern.permute.xlu0 0
      %465 = vperm.xlu0 %464, %v393
      %v466 = vpop.permute.xlu0 %465
      %469 = vset.pattern.permute.xlu0 0
      %470 = vperm.xlu0 %469, %v394
      %v471 = vpop.permute.xlu0 %470
      %474 = vset.pattern.permute.xlu0 0
      %475 = vperm.xlu0 %474, %v395
      %v476 = vpop.permute.xlu0 %475
      %479 = vset.pattern.permute.xlu0 0
      %480 = vperm.xlu0 %479, %v396
      %v481 = vpop.permute.xlu0 %480
      %484 = vset.pattern.permute.xlu0 0
      %485 = vperm.xlu0 %484, %v397
      %v486 = vpop.permute.xlu0 %485
      %489 = vset.pattern.permute.xlu0 0
      %490 = vperm.xlu0 %489, %v398
      %v491 = vpop.permute.xlu0 %490
      %494 = vset.pattern.permute.xlu0 0
      %495 = vperm.xlu0 %494, %v399
      %v496 = vpop.permute.xlu0 %495
      %499 = vset.pattern.permute.xlu0 0
      %500 = vperm.xlu0 %499, %v400
      %v501 = vpop.permute.xlu0 %500
      %504 = vset.pattern.permute.xlu0 0
      %505 = vperm.xlu0 %504, %v401
      %v506 = vpop.permute.xlu0 %505
      %509 = vset.pattern.permute.xlu0 0
      %510 = vperm.xlu0 %509, %v402
      %v511 = vpop.permute.xlu0 %510
      %514 = vset.pattern.permute.xlu0 0
      %515 = vperm.xlu0 %514, %v403
      %v516 = vpop.permute.xlu0 %515
      %519 = vset.pattern.permute.xlu0 0
      %520 = vperm.xlu0 %519, %v404
      %v521 = vpop.permute.xlu0 %520
      %524 = vset.pattern.permute.xlu0 0
      %525 = vperm.xlu0 %524, %v405
      %v526 = vpop.permute.xlu0 %525
      %529 = vset.pattern.permute.xlu0 0
      %530 = vperm.xlu0 %529, %v406
      %v531 = vpop.permute.xlu0 %530
      %534 = vset.pattern.permute.xlu0 0
      %535 = vperm.xlu0 %534, %v407
      %v536 = vpop.permute.xlu0 %535
      %539 = vset.pattern.permute.xlu0 0
      %540 = vperm.xlu0 %539, %v408
      %v541 = vpop.permute.xlu0 %540
      %544 = vset.pattern.permute.xlu0 0
      %545 = vperm.xlu0 %544, %v409
      %v546 = vpop.permute.xlu0 %545
      %549 = vset.pattern.permute.xlu0 0
      %550 = vperm.xlu0 %549, %v410
      %v551 = vpop.permute.xlu0 %550
      %554 = vset.pattern.permute.xlu0 0
      %555 = vperm.xlu0 %554, %v411
      %v556 = vpop.permute.xlu0 %555
      %559 = vset.pattern.permute.xlu0 0
      %560 = vperm.xlu0 %559, %v412
      %v561 = vpop.permute.xlu0 %560
      %564 = vset.pattern.permute.xlu0 0
      %565 = vperm.xlu0 %564, %v413
      %v566 = vpop.permute.xlu0 %565
      %569 = vset.pattern.permute.xlu0 0
      %570 = vperm.xlu0 %569, %v414
      %v571 = vpop.permute.xlu0 %570
      %574 = vset.pattern.permute.xlu0 0
      %575 = vperm.xlu0 %574, %v415
      %v576 = vpop.permute.xlu0 %575
      %579 = vset.pattern.permute.xlu0 0
      %580 = vperm.xlu0 %579, %v416
      %v581 = vpop.permute.xlu0 %580
      %584 = vset.pattern.permute.xlu0 0
      %585 = vperm.xlu0 %584, %v417
      %v586 = vpop.permute.xlu0 %585
      %589 = vset.pattern.permute.xlu0 0
      %590 = vperm.xlu0 %589, %v418
      %v591 = vpop.permute.xlu0 %590
      %594 = vset.pattern.permute.xlu0 0
      %595 = vperm.xlu0 %594, %v419
      %v596 = vpop.permute.xlu0 %595
      %599 = vset.pattern.permute.xlu0 0
      %600 = vperm.xlu0 %599, %v420
      %v601 = vpop.permute.xlu0 %600
      %604 = vset.pattern.permute.xlu0 0
      %605 = vperm.xlu0 %604, %v421
      %v606 = vpop.permute.xlu0 %605
      %609 = vset.pattern.permute.xlu0 0
      %610 = vperm.xlu0 %609, %v422
      %v611 = vpop.permute.xlu0 %610
      %614 = vset.pattern.permute.xlu0 0
      %615 = vperm.xlu0 %614, %v423
      %v616 = vpop.permute.xlu0 %615
      %619 = vset.pattern.permute.xlu0 0
      %620 = vperm.xlu0 %619, %v424
      %v621 = vpop.permute.xlu0 %620
      %624 = vset.pattern.permute.xlu0 0
      %625 = vperm.xlu0 %624, %v425
      %v626 = vpop.permute.xlu0 %625
      %629 = vset.pattern.permute.xlu0 0
      %630 = vperm.xlu0 %629, %v426
      %v631 = vpop.permute.xlu0 %630
      %634 = vset.pattern.permute.xlu0 0
      %635 = vperm.xlu0 %634, %v427
      %v636 = vpop.permute.xlu0 %635
      %639 = vset.pattern.permute.xlu0 0
      %640 = vperm.xlu0 %639, %v428
      %v641 = vpop.permute.xlu0 %640
      %644 = vset.pattern.permute.xlu0 0
      %645 = vperm.xlu0 %644, %v429
      %v646 = vpop.permute.xlu0 %645
      %649 = vset.pattern.permute.xlu0 0
      %650 = vperm.xlu0 %649, %v430
      %v651 = vpop.permute.xlu0 %650
      %654 = vset.pattern.permute.xlu0 0
      %655 = vperm.xlu0 %654, %v431
      %v656 = vpop.permute.xlu0 %655
      %659 = vset.pattern.permute.xlu0 0
      %660 = vperm.xlu0 %659, %v432
      %v661 = vpop.permute.xlu0 %660
      %664 = vset.pattern.permute.xlu0 0
      %665 = vperm.xlu0 %664, %v433
      %v666 = vpop.permute.xlu0 %665
      %669 = vset.pattern.permute.xlu0 0
      %670 = vperm.xlu0 %669, %v434
      %v671 = vpop.permute.xlu0 %670
      %674 = vset.pattern.permute.xlu0 0
      %675 = vperm.xlu0 %674, %v435
      %v676 = vpop.permute.xlu0 %675
      %679 = vset.pattern.permute.xlu0 0
      %680 = vperm.xlu0 %679, %v436
      %v681 = vpop.permute.xlu0 %680
      %684 = vset.pattern.permute.xlu0 0
      %685 = vperm.xlu0 %684, %v437
      %v686 = vpop.permute.xlu0 %685
      %689 = vset.pattern.permute.xlu0 0
      %690 = vperm.xlu0 %689, %v438
      %v691 = vpop.permute.xlu0 %690
      %694 = vset.pattern.permute.xlu0 0
      %695 = vperm.xlu0 %694, %v439
      %v696 = vpop.permute.xlu0 %695
      %699 = vset.pattern.permute.xlu0 0
      %700 = vperm.xlu0 %699, %v440
      %v701 = vpop.permute.xlu0 %700
      %704 = vset.pattern.permute.xlu0 0
      %705 = vperm.xlu0 %704, %v441
      %v706 = vpop.permute.xlu0 %705
      %709 = vset.pattern.permute.xlu0 0
      %710 = vperm.xlu0 %709, %v442
      %v711 = vpop.permute.xlu0 %710
      %714 = vset.pattern.permute.xlu0 0
      %715 = vperm.xlu0 %714, %v443
      %v716 = vpop.permute.xlu0 %715
      %719 = vset.pattern.permute.xlu0 0
      %720 = vperm.xlu0 %719, %v444
      %v721 = vpop.permute.xlu0 %720
      %724 = vset.pattern.permute.xlu0 0
      %725 = vperm.xlu0 %724, %v445
      %v726 = vpop.permute.xlu0 %725
      %729 = vset.pattern.permute.xlu0 0
      %730 = vperm.xlu0 %729, %v446
      %v731 = vpop.permute.xlu0 %730
      %734 = vset.pattern.permute.xlu0 0
      %735 = vperm.xlu0 %734, %v447
      %v736 = vpop.permute.xlu0 %735
      %739 = vset.pattern.permute.xlu0 0
      %740 = vperm.xlu0 %739, %v448
      %v741 = vpop.permute.xlu0 %740
      %744 = vset.pattern.permute.xlu0 0
      %745 = vperm.xlu0 %744, %v449
      %v746 = vpop.permute.xlu0 %745
      %749 = vset.pattern.permute.xlu0 0
      %750 = vperm.xlu0 %749, %v450
      %v751 = vpop.permute.xlu0 %750
      %754 = vset.pattern.permute.xlu0 0
      %755 = vperm.xlu0 %754, %v451
      %v756 = vpop.permute.xlu0 %755
      %759 = vset.pattern.permute.xlu0 0
      %760 = vperm.xlu0 %759, %v452
      %v761 = vpop.permute.xlu0 %760
      %764 = vset.pattern.permute.xlu0 0
      %765 = vperm.xlu0 %764, %v453
      %v766 = vpop.permute.xlu0 %765
      %769 = vset.pattern.permute.xlu0 0
      %770 = vperm.xlu0 %769, %v454
      %v771 = vpop.permute.xlu0 %770
      %774 = vset.pattern.permute.xlu0 0
      %775 = vperm.xlu0 %774, %v455
      %v776 = vpop.permute.xlu0 %775
      %v779 = vlaneseq
      %v780 = vshrl.u32 %v779, 7
      %v781 = vsub.s32 0, %v780
      %v782 = vrot.slane %v456, %v781
      %v783 = vlaneseq
      %v784 = vshrl.u32 %v783, 7
      %v785 = vsub.s32 2, %v784
      %v786 = vrot.slane %v456, %v785
      %v789 = vlaneseq
      %v790 = vshrl.u32 %v789, 7
      %v791 = vsub.s32 0, %v790
      %v792 = vrot.slane %v782, %v791
      %v793 = vlaneseq
      %v794 = vshrl.u32 %v793, 7
      %v795 = vsub.s32 0, %v794
      %v796 = vrot.slane %v786, %v795
      %v797 = vmul.f32 %v461, %v792
      %v798 = vmul.f32 %v461, %v796
      %v799 = vmul.f32 %v466, %v792
      %v800 = vmul.f32 %v466, %v796
      %v801 = vmul.f32 %v471, %v792
      %v802 = vmul.f32 %v471, %v796
      %v803 = vmul.f32 %v476, %v792
      %v804 = vmul.f32 %v476, %v796
      %v805 = vmul.f32 %v481, %v792
      %v806 = vmul.f32 %v481, %v796
      %v807 = vmul.f32 %v486, %v792
      %v808 = vmul.f32 %v486, %v796
      %v809 = vmul.f32 %v491, %v792
      %v810 = vmul.f32 %v491, %v796
      %v811 = vmul.f32 %v496, %v792
      %v812 = vmul.f32 %v496, %v796
      %v813 = vmul.f32 %v501, %v792
      %v814 = vmul.f32 %v501, %v796
      %v815 = vmul.f32 %v506, %v792
      %v816 = vmul.f32 %v506, %v796
      %v817 = vmul.f32 %v511, %v792
      %v818 = vmul.f32 %v511, %v796
      %v819 = vmul.f32 %v516, %v792
      %v820 = vmul.f32 %v516, %v796
      %v821 = vmul.f32 %v521, %v792
      %v822 = vmul.f32 %v521, %v796
      %v823 = vmul.f32 %v526, %v792
      %v824 = vmul.f32 %v526, %v796
      %v825 = vmul.f32 %v531, %v792
      %v826 = vmul.f32 %v531, %v796
      %v827 = vmul.f32 %v536, %v792
      %v828 = vmul.f32 %v536, %v796
      %v829 = vmul.f32 %v541, %v792
      %v830 = vmul.f32 %v541, %v796
      %v831 = vmul.f32 %v546, %v792
      %v832 = vmul.f32 %v546, %v796
      %v833 = vmul.f32 %v551, %v792
      %v834 = vmul.f32 %v551, %v796
      %v835 = vmul.f32 %v556, %v792
      %v836 = vmul.f32 %v556, %v796
      %v837 = vmul.f32 %v561, %v792
      %v838 = vmul.f32 %v561, %v796
      %v839 = vmul.f32 %v566, %v792
      %v840 = vmul.f32 %v566, %v796
      %v841 = vmul.f32 %v571, %v792
      %v842 = vmul.f32 %v571, %v796
      %v843 = vmul.f32 %v576, %v792
      %v844 = vmul.f32 %v576, %v796
      %v845 = vmul.f32 %v581, %v792
      %v846 = vmul.f32 %v581, %v796
      %v847 = vmul.f32 %v586, %v792
      %v848 = vmul.f32 %v586, %v796
      %v849 = vmul.f32 %v591, %v792
      %v850 = vmul.f32 %v591, %v796
      %v851 = vmul.f32 %v596, %v792
      %v852 = vmul.f32 %v596, %v796
      %v853 = vmul.f32 %v601, %v792
      %v854 = vmul.f32 %v601, %v796
      %v855 = vmul.f32 %v606, %v792
      %v856 = vmul.f32 %v606, %v796
      %v857 = vmul.f32 %v611, %v792
      %v858 = vmul.f32 %v611, %v796
      %v859 = vmul.f32 %v616, %v792
      %v860 = vmul.f32 %v616, %v796
      %v861 = vmul.f32 %v621, %v792
      %v862 = vmul.f32 %v621, %v796
      %v863 = vmul.f32 %v626, %v792
      %v864 = vmul.f32 %v626, %v796
      %v865 = vmul.f32 %v631, %v792
      %v866 = vmul.f32 %v631, %v796
      %v867 = vmul.f32 %v636, %v792
      %v868 = vmul.f32 %v636, %v796
      %v869 = vmul.f32 %v641, %v792
      %v870 = vmul.f32 %v641, %v796
      %v871 = vmul.f32 %v646, %v792
      %v872 = vmul.f32 %v646, %v796
      %v873 = vmul.f32 %v651, %v792
      %v874 = vmul.f32 %v651, %v796
      %v875 = vmul.f32 %v656, %v792
      %v876 = vmul.f32 %v656, %v796
      %v877 = vmul.f32 %v661, %v792
      %v878 = vmul.f32 %v661, %v796
      %v879 = vmul.f32 %v666, %v792
      %v880 = vmul.f32 %v666, %v796
      %v881 = vmul.f32 %v671, %v792
      %v882 = vmul.f32 %v671, %v796
      %v883 = vmul.f32 %v676, %v792
      %v884 = vmul.f32 %v676, %v796
      %v885 = vmul.f32 %v681, %v792
      %v886 = vmul.f32 %v681, %v796
      %v887 = vmul.f32 %v686, %v792
      %v888 = vmul.f32 %v686, %v796
      %v889 = vmul.f32 %v691, %v792
      %v890 = vmul.f32 %v691, %v796
      %v891 = vmul.f32 %v696, %v792
      %v892 = vmul.f32 %v696, %v796
      %v893 = vmul.f32 %v701, %v792
      %v894 = vmul.f32 %v701, %v796
      %v895 = vmul.f32 %v706, %v792
      %v896 = vmul.f32 %v706, %v796
      %v897 = vmul.f32 %v711, %v792
      %v898 = vmul.f32 %v711, %v796
      %v899 = vmul.f32 %v716, %v792
      %v900 = vmul.f32 %v716, %v796
      %v901 = vmul.f32 %v721, %v792
      %v902 = vmul.f32 %v721, %v796
      %v903 = vmul.f32 %v726, %v792
      %v904 = vmul.f32 %v726, %v796
      %v905 = vmul.f32 %v731, %v792
      %v906 = vmul.f32 %v731, %v796
      %v907 = vmul.f32 %v736, %v792
      %v908 = vmul.f32 %v736, %v796
      %v909 = vmul.f32 %v741, %v792
      %v910 = vmul.f32 %v741, %v796
      %v911 = vmul.f32 %v746, %v792
      %v912 = vmul.f32 %v746, %v796
      %v913 = vmul.f32 %v751, %v792
      %v914 = vmul.f32 %v751, %v796
      %v915 = vmul.f32 %v756, %v792
      %v916 = vmul.f32 %v756, %v796
      %v917 = vmul.f32 %v761, %v792
      %v918 = vmul.f32 %v761, %v796
      %v919 = vmul.f32 %v766, %v792
      %v920 = vmul.f32 %v766, %v796
      %v921 = vmul.f32 %v771, %v792
      %v922 = vmul.f32 %v771, %v796
      %v923 = vmul.f32 %v776, %v792
      %v924 = vmul.f32 %v776, %v796
      %v926 = vlaneseq
      %v927 = vshrl.u32 %v926, 7
      %v928 = vsub.s32 0, %v927
      %v929 = vrot.slane %v457, %v928
      %v930 = vlaneseq
      %v931 = vshrl.u32 %v930, 7
      %v932 = vsub.s32 1, %v931
      %v933 = vrot.slane %v457, %v932
      %v936 = vadd.f32 %v929, %v797
      %v937 = vadd.f32 %v933, %v798
      %v938 = vadd.f32 %v929, %v799
      %v939 = vadd.f32 %v933, %v800
      %v940 = vadd.f32 %v929, %v801
      %v941 = vadd.f32 %v933, %v802
      %v942 = vadd.f32 %v929, %v803
      %v943 = vadd.f32 %v933, %v804
      %v944 = vadd.f32 %v929, %v805
      %v945 = vadd.f32 %v933, %v806
      %v946 = vadd.f32 %v929, %v807
      %v947 = vadd.f32 %v933, %v808
      %v948 = vadd.f32 %v929, %v809
      %v949 = vadd.f32 %v933, %v810
      %v950 = vadd.f32 %v929, %v811
      %v951 = vadd.f32 %v933, %v812
      %v952 = vadd.f32 %v929, %v813
      %v953 = vadd.f32 %v933, %v814
      %v954 = vadd.f32 %v929, %v815
      %v955 = vadd.f32 %v933, %v816
      %v956 = vadd.f32 %v929, %v817
      %v957 = vadd.f32 %v933, %v818
      %v958 = vadd.f32 %v929, %v819
      %v959 = vadd.f32 %v933, %v820
      %v960 = vadd.f32 %v929, %v821
      %v961 = vadd.f32 %v933, %v822
      %v962 = vadd.f32 %v929, %v823
      %v963 = vadd.f32 %v933, %v824
      %v964 = vadd.f32 %v929, %v825
      %v965 = vadd.f32 %v933, %v826
      %v966 = vadd.f32 %v929, %v827
      %v967 = vadd.f32 %v933, %v828
      %v968 = vadd.f32 %v929, %v829
      %v969 = vadd.f32 %v933, %v830
      %v970 = vadd.f32 %v929, %v831
      %v971 = vadd.f32 %v933, %v832
      %v972 = vadd.f32 %v929, %v833
      %v973 = vadd.f32 %v933, %v834
      %v974 = vadd.f32 %v929, %v835
      %v975 = vadd.f32 %v933, %v836
      %v976 = vadd.f32 %v929, %v837
      %v977 = vadd.f32 %v933, %v838
      %v978 = vadd.f32 %v929, %v839
      %v979 = vadd.f32 %v933, %v840
      %v980 = vadd.f32 %v929, %v841
      %v981 = vadd.f32 %v933, %v842
      %v982 = vadd.f32 %v929, %v843
      %v983 = vadd.f32 %v933, %v844
      %v984 = vadd.f32 %v929, %v845
      %v985 = vadd.f32 %v933, %v846
      %v986 = vadd.f32 %v929, %v847
      %v987 = vadd.f32 %v933, %v848
      %v988 = vadd.f32 %v929, %v849
      %v989 = vadd.f32 %v933, %v850
      %v990 = vadd.f32 %v929, %v851
      %v991 = vadd.f32 %v933, %v852
      %v992 = vadd.f32 %v929, %v853
      %v993 = vadd.f32 %v933, %v854
      %v994 = vadd.f32 %v929, %v855
      %v995 = vadd.f32 %v933, %v856
      %v996 = vadd.f32 %v929, %v857
      %v997 = vadd.f32 %v933, %v858
      %v998 = vadd.f32 %v929, %v859
      %v999 = vadd.f32 %v933, %v860
      %v1000 = vadd.f32 %v929, %v861
      %v1001 = vadd.f32 %v933, %v862
      %v1002 = vadd.f32 %v929, %v863
      %v1003 = vadd.f32 %v933, %v864
      %v1004 = vadd.f32 %v929, %v865
      %v1005 = vadd.f32 %v933, %v866
      %v1006 = vadd.f32 %v929, %v867
      %v1007 = vadd.f32 %v933, %v868
      %v1008 = vadd.f32 %v929, %v869
      %v1009 = vadd.f32 %v933, %v870
      %v1010 = vadd.f32 %v929, %v871
      %v1011 = vadd.f32 %v933, %v872
      %v1012 = vadd.f32 %v929, %v873
      %v1013 = vadd.f32 %v933, %v874
      %v1014 = vadd.f32 %v929, %v875
      %v1015 = vadd.f32 %v933, %v876
      %v1016 = vadd.f32 %v929, %v877
      %v1017 = vadd.f32 %v933, %v878
      %v1018 = vadd.f32 %v929, %v879
      %v1019 = vadd.f32 %v933, %v880
      %v1020 = vadd.f32 %v929, %v881
      %v1021 = vadd.f32 %v933, %v882
      %v1022 = vadd.f32 %v929, %v883
      %v1023 = vadd.f32 %v933, %v884
      %v1024 = vadd.f32 %v929, %v885
      %v1025 = vadd.f32 %v933, %v886
      %v1026 = vadd.f32 %v929, %v887
      %v1027 = vadd.f32 %v933, %v888
      %v1028 = vadd.f32 %v929, %v889
      %v1029 = vadd.f32 %v933, %v890
      %v1030 = vadd.f32 %v929, %v891
      %v1031 = vadd.f32 %v933, %v892
      %v1032 = vadd.f32 %v929, %v893
      %v1033 = vadd.f32 %v933, %v894
      %v1034 = vadd.f32 %v929, %v895
      %v1035 = vadd.f32 %v933, %v896
      %v1036 = vadd.f32 %v929, %v897
      %v1037 = vadd.f32 %v933, %v898
      %v1038 = vadd.f32 %v929, %v899
      %v1039 = vadd.f32 %v933, %v900
      %v1040 = vadd.f32 %v929, %v901
      %v1041 = vadd.f32 %v933, %v902
      %v1042 = vadd.f32 %v929, %v903
      %v1043 = vadd.f32 %v933, %v904
      %v1044 = vadd.f32 %v929, %v905
      %v1045 = vadd.f32 %v933, %v906
      %v1046 = vadd.f32 %v929, %v907
      %v1047 = vadd.f32 %v933, %v908
      %v1048 = vadd.f32 %v929, %v909
      %v1049 = vadd.f32 %v933, %v910
      %v1050 = vadd.f32 %v929, %v911
      %v1051 = vadd.f32 %v933, %v912
      %v1052 = vadd.f32 %v929, %v913
      %v1053 = vadd.f32 %v933, %v914
      %v1054 = vadd.f32 %v929, %v915
      %v1055 = vadd.f32 %v933, %v916
      %v1056 = vadd.f32 %v929, %v917
      %v1057 = vadd.f32 %v933, %v918
      %v1058 = vadd.f32 %v929, %v919
      %v1059 = vadd.f32 %v933, %v920
      %v1060 = vadd.f32 %v929, %v921
      %v1061 = vadd.f32 %v933, %v922
      %v1062 = vadd.f32 %v929, %v923
      %v1063 = vadd.f32 %v933, %v924
      %1064 = vset.pattern.permute.xlu0 1
      %1065 = vperm.xlu0 %1064, %v392
      %v1066 = vpop.permute.xlu0 %1065
      %1068 = vset.pattern.permute.xlu0 1
      %1069 = vperm.xlu0 %1068, %v393
      %v1070 = vpop.permute.xlu0 %1069
      %1072 = vset.pattern.permute.xlu0 1
      %1073 = vperm.xlu0 %1072, %v394
      %v1074 = vpop.permute.xlu0 %1073
      %1076 = vset.pattern.permute.xlu0 1
      %1077 = vperm.xlu0 %1076, %v395
      %v1078 = vpop.permute.xlu0 %1077
      %1080 = vset.pattern.permute.xlu0 1
      %1081 = vperm.xlu0 %1080, %v396
      %v1082 = vpop.permute.xlu0 %1081
      %1084 = vset.pattern.permute.xlu0 1
      %1085 = vperm.xlu0 %1084, %v397
      %v1086 = vpop.permute.xlu0 %1085
      %1088 = vset.pattern.permute.xlu0 1
      %1089 = vperm.xlu0 %1088, %v398
      %v1090 = vpop.permute.xlu0 %1089
      %1092 = vset.pattern.permute.xlu0 1
      %1093 = vperm.xlu0 %1092, %v399
      %v1094 = vpop.permute.xlu0 %1093
      %1096 = vset.pattern.permute.xlu0 1
      %1097 = vperm.xlu0 %1096, %v400
      %v1098 = vpop.permute.xlu0 %1097
      %1100 = vset.pattern.permute.xlu0 1
      %1101 = vperm.xlu0 %1100, %v401
      %v1102 = vpop.permute.xlu0 %1101
      %1104 = vset.pattern.permute.xlu0 1
      %1105 = vperm.xlu0 %1104, %v402
      %v1106 = vpop.permute.xlu0 %1105
      %1108 = vset.pattern.permute.xlu0 1
      %1109 = vperm.xlu0 %1108, %v403
      %v1110 = vpop.permute.xlu0 %1109
      %1112 = vset.pattern.permute.xlu0 1
      %1113 = vperm.xlu0 %1112, %v404
      %v1114 = vpop.permute.xlu0 %1113
      %1116 = vset.pattern.permute.xlu0 1
      %1117 = vperm.xlu0 %1116, %v405
      %v1118 = vpop.permute.xlu0 %1117
      %1120 = vset.pattern.permute.xlu0 1
      %1121 = vperm.xlu0 %1120, %v406
      %v1122 = vpop.permute.xlu0 %1121
      %1124 = vset.pattern.permute.xlu0 1
      %1125 = vperm.xlu0 %1124, %v407
      %v1126 = vpop.permute.xlu0 %1125
      %1128 = vset.pattern.permute.xlu0 1
      %1129 = vperm.xlu0 %1128, %v408
      %v1130 = vpop.permute.xlu0 %1129
      %1132 = vset.pattern.permute.xlu0 1
      %1133 = vperm.xlu0 %1132, %v409
      %v1134 = vpop.permute.xlu0 %1133
      %1136 = vset.pattern.permute.xlu0 1
      %1137 = vperm.xlu0 %1136, %v410
      %v1138 = vpop.permute.xlu0 %1137
      %1140 = vset.pattern.permute.xlu0 1
      %1141 = vperm.xlu0 %1140, %v411
      %v1142 = vpop.permute.xlu0 %1141
      %1144 = vset.pattern.permute.xlu0 1
      %1145 = vperm.xlu0 %1144, %v412
      %v1146 = vpop.permute.xlu0 %1145
      %1148 = vset.pattern.permute.xlu0 1
      %1149 = vperm.xlu0 %1148, %v413
      %v1150 = vpop.permute.xlu0 %1149
      %1152 = vset.pattern.permute.xlu0 1
      %1153 = vperm.xlu0 %1152, %v414
      %v1154 = vpop.permute.xlu0 %1153
      %1156 = vset.pattern.permute.xlu0 1
      %1157 = vperm.xlu0 %1156, %v415
      %v1158 = vpop.permute.xlu0 %1157
      %1160 = vset.pattern.permute.xlu0 1
      %1161 = vperm.xlu0 %1160, %v416
      %v1162 = vpop.permute.xlu0 %1161
      %1164 = vset.pattern.permute.xlu0 1
      %1165 = vperm.xlu0 %1164, %v417
      %v1166 = vpop.permute.xlu0 %1165
      %1168 = vset.pattern.permute.xlu0 1
      %1169 = vperm.xlu0 %1168, %v418
      %v1170 = vpop.permute.xlu0 %1169
      %1172 = vset.pattern.permute.xlu0 1
      %1173 = vperm.xlu0 %1172, %v419
      %v1174 = vpop.permute.xlu0 %1173
      %1176 = vset.pattern.permute.xlu0 1
      %1177 = vperm.xlu0 %1176, %v420
      %v1178 = vpop.permute.xlu0 %1177
      %1180 = vset.pattern.permute.xlu0 1
      %1181 = vperm.xlu0 %1180, %v421
      %v1182 = vpop.permute.xlu0 %1181
      %1184 = vset.pattern.permute.xlu0 1
      %1185 = vperm.xlu0 %1184, %v422
      %v1186 = vpop.permute.xlu0 %1185
      %1188 = vset.pattern.permute.xlu0 1
      %1189 = vperm.xlu0 %1188, %v423
      %v1190 = vpop.permute.xlu0 %1189
      %1192 = vset.pattern.permute.xlu0 1
      %1193 = vperm.xlu0 %1192, %v424
      %v1194 = vpop.permute.xlu0 %1193
      %1196 = vset.pattern.permute.xlu0 1
      %1197 = vperm.xlu0 %1196, %v425
      %v1198 = vpop.permute.xlu0 %1197
      %1200 = vset.pattern.permute.xlu0 1
      %1201 = vperm.xlu0 %1200, %v426
      %v1202 = vpop.permute.xlu0 %1201
      %1204 = vset.pattern.permute.xlu0 1
      %1205 = vperm.xlu0 %1204, %v427
      %v1206 = vpop.permute.xlu0 %1205
      %1208 = vset.pattern.permute.xlu0 1
      %1209 = vperm.xlu0 %1208, %v428
      %v1210 = vpop.permute.xlu0 %1209
      %1212 = vset.pattern.permute.xlu0 1
      %1213 = vperm.xlu0 %1212, %v429
      %v1214 = vpop.permute.xlu0 %1213
      %1216 = vset.pattern.permute.xlu0 1
      %1217 = vperm.xlu0 %1216, %v430
      %v1218 = vpop.permute.xlu0 %1217
      %1220 = vset.pattern.permute.xlu0 1
      %1221 = vperm.xlu0 %1220, %v431
      %v1222 = vpop.permute.xlu0 %1221
      %1224 = vset.pattern.permute.xlu0 1
      %1225 = vperm.xlu0 %1224, %v432
      %v1226 = vpop.permute.xlu0 %1225
      %1228 = vset.pattern.permute.xlu0 1
      %1229 = vperm.xlu0 %1228, %v433
      %v1230 = vpop.permute.xlu0 %1229
      %1232 = vset.pattern.permute.xlu0 1
      %1233 = vperm.xlu0 %1232, %v434
      %v1234 = vpop.permute.xlu0 %1233
      %1236 = vset.pattern.permute.xlu0 1
      %1237 = vperm.xlu0 %1236, %v435
      %v1238 = vpop.permute.xlu0 %1237
      %1240 = vset.pattern.permute.xlu0 1
      %1241 = vperm.xlu0 %1240, %v436
      %v1242 = vpop.permute.xlu0 %1241
      %1244 = vset.pattern.permute.xlu0 1
      %1245 = vperm.xlu0 %1244, %v437
      %v1246 = vpop.permute.xlu0 %1245
      %1248 = vset.pattern.permute.xlu0 1
      %1249 = vperm.xlu0 %1248, %v438
      %v1250 = vpop.permute.xlu0 %1249
      %1252 = vset.pattern.permute.xlu0 1
      %1253 = vperm.xlu0 %1252, %v439
      %v1254 = vpop.permute.xlu0 %1253
      %1256 = vset.pattern.permute.xlu0 1
      %1257 = vperm.xlu0 %1256, %v440
      %v1258 = vpop.permute.xlu0 %1257
      %1260 = vset.pattern.permute.xlu0 1
      %1261 = vperm.xlu0 %1260, %v441
      %v1262 = vpop.permute.xlu0 %1261
      %1264 = vset.pattern.permute.xlu0 1
      %1265 = vperm.xlu0 %1264, %v442
      %v1266 = vpop.permute.xlu0 %1265
      %1268 = vset.pattern.permute.xlu0 1
      %1269 = vperm.xlu0 %1268, %v443
      %v1270 = vpop.permute.xlu0 %1269
      %1272 = vset.pattern.permute.xlu0 1
      %1273 = vperm.xlu0 %1272, %v444
      %v1274 = vpop.permute.xlu0 %1273
      %1276 = vset.pattern.permute.xlu0 1
      %1277 = vperm.xlu0 %1276, %v445
      %v1278 = vpop.permute.xlu0 %1277
      %1280 = vset.pattern.permute.xlu0 1
      %1281 = vperm.xlu0 %1280, %v446
      %v1282 = vpop.permute.xlu0 %1281
      %1284 = vset.pattern.permute.xlu0 1
      %1285 = vperm.xlu0 %1284, %v447
      %v1286 = vpop.permute.xlu0 %1285
      %1288 = vset.pattern.permute.xlu0 1
      %1289 = vperm.xlu0 %1288, %v448
      %v1290 = vpop.permute.xlu0 %1289
      %1292 = vset.pattern.permute.xlu0 1
      %1293 = vperm.xlu0 %1292, %v449
      %v1294 = vpop.permute.xlu0 %1293
      %1296 = vset.pattern.permute.xlu0 1
      %1297 = vperm.xlu0 %1296, %v450
      %v1298 = vpop.permute.xlu0 %1297
      %1300 = vset.pattern.permute.xlu0 1
      %1301 = vperm.xlu0 %1300, %v451
      %v1302 = vpop.permute.xlu0 %1301
      %1304 = vset.pattern.permute.xlu0 1
      %1305 = vperm.xlu0 %1304, %v452
      %v1306 = vpop.permute.xlu0 %1305
      %1308 = vset.pattern.permute.xlu0 1
      %1309 = vperm.xlu0 %1308, %v453
      %v1310 = vpop.permute.xlu0 %1309
      %1312 = vset.pattern.permute.xlu0 1
      %1313 = vperm.xlu0 %1312, %v454
      %v1314 = vpop.permute.xlu0 %1313
      %1316 = vset.pattern.permute.xlu0 1
      %1317 = vperm.xlu0 %1316, %v455
      %v1318 = vpop.permute.xlu0 %1317
      %v1320 = vlaneseq
      %v1321 = vshrl.u32 %v1320, 7
      %v1322 = vsub.s32 1, %v1321
      %v1323 = vrot.slane %v456, %v1322
      %v1324 = vlaneseq
      %v1325 = vshrl.u32 %v1324, 7
      %v1326 = vsub.s32 3, %v1325
      %v1327 = vrot.slane %v456, %v1326
      %v1330 = vlaneseq
      %v1331 = vshrl.u32 %v1330, 7
      %v1332 = vsub.s32 1, %v1331
      %v1333 = vrot.slane %v1323, %v1332
      %v1334 = vlaneseq
      %v1335 = vshrl.u32 %v1334, 7
      %v1336 = vsub.s32 1, %v1335
      %v1337 = vrot.slane %v1327, %v1336
      %v1338 = vmul.f32 %v1066, %v1333
      %v1339 = vmul.f32 %v1066, %v1337
      %v1340 = vmul.f32 %v1070, %v1333
      %v1341 = vmul.f32 %v1070, %v1337
      %v1342 = vmul.f32 %v1074, %v1333
      %v1343 = vmul.f32 %v1074, %v1337
      %v1344 = vmul.f32 %v1078, %v1333
      %v1345 = vmul.f32 %v1078, %v1337
      %v1346 = vmul.f32 %v1082, %v1333
      %v1347 = vmul.f32 %v1082, %v1337
      %v1348 = vmul.f32 %v1086, %v1333
      %v1349 = vmul.f32 %v1086, %v1337
      %v1350 = vmul.f32 %v1090, %v1333
      %v1351 = vmul.f32 %v1090, %v1337
      %v1352 = vmul.f32 %v1094, %v1333
      %v1353 = vmul.f32 %v1094, %v1337
      %v1354 = vmul.f32 %v1098, %v1333
      %v1355 = vmul.f32 %v1098, %v1337
      %v1356 = vmul.f32 %v1102, %v1333
      %v1357 = vmul.f32 %v1102, %v1337
      %v1358 = vmul.f32 %v1106, %v1333
      %v1359 = vmul.f32 %v1106, %v1337
      %v1360 = vmul.f32 %v1110, %v1333
      %v1361 = vmul.f32 %v1110, %v1337
      %v1362 = vmul.f32 %v1114, %v1333
      %v1363 = vmul.f32 %v1114, %v1337
      %v1364 = vmul.f32 %v1118, %v1333
      %v1365 = vmul.f32 %v1118, %v1337
      %v1366 = vmul.f32 %v1122, %v1333
      %v1367 = vmul.f32 %v1122, %v1337
      %v1368 = vmul.f32 %v1126, %v1333
      %v1369 = vmul.f32 %v1126, %v1337
      %v1370 = vmul.f32 %v1130, %v1333
      %v1371 = vmul.f32 %v1130, %v1337
      %v1372 = vmul.f32 %v1134, %v1333
      %v1373 = vmul.f32 %v1134, %v1337
      %v1374 = vmul.f32 %v1138, %v1333
      %v1375 = vmul.f32 %v1138, %v1337
      %v1376 = vmul.f32 %v1142, %v1333
      %v1377 = vmul.f32 %v1142, %v1337
      %v1378 = vmul.f32 %v1146, %v1333
      %v1379 = vmul.f32 %v1146, %v1337
      %v1380 = vmul.f32 %v1150, %v1333
      %v1381 = vmul.f32 %v1150, %v1337
      %v1382 = vmul.f32 %v1154, %v1333
      %v1383 = vmul.f32 %v1154, %v1337
      %v1384 = vmul.f32 %v1158, %v1333
      %v1385 = vmul.f32 %v1158, %v1337
      %v1386 = vmul.f32 %v1162, %v1333
      %v1387 = vmul.f32 %v1162, %v1337
      %v1388 = vmul.f32 %v1166, %v1333
      %v1389 = vmul.f32 %v1166, %v1337
      %v1390 = vmul.f32 %v1170, %v1333
      %v1391 = vmul.f32 %v1170, %v1337
      %v1392 = vmul.f32 %v1174, %v1333
      %v1393 = vmul.f32 %v1174, %v1337
      %v1394 = vmul.f32 %v1178, %v1333
      %v1395 = vmul.f32 %v1178, %v1337
      %v1396 = vmul.f32 %v1182, %v1333
      %v1397 = vmul.f32 %v1182, %v1337
      %v1398 = vmul.f32 %v1186, %v1333
      %v1399 = vmul.f32 %v1186, %v1337
      %v1400 = vmul.f32 %v1190, %v1333
      %v1401 = vmul.f32 %v1190, %v1337
      %v1402 = vmul.f32 %v1194, %v1333
      %v1403 = vmul.f32 %v1194, %v1337
      %v1404 = vmul.f32 %v1198, %v1333
      %v1405 = vmul.f32 %v1198, %v1337
      %v1406 = vmul.f32 %v1202, %v1333
      %v1407 = vmul.f32 %v1202, %v1337
      %v1408 = vmul.f32 %v1206, %v1333
      %v1409 = vmul.f32 %v1206, %v1337
      %v1410 = vmul.f32 %v1210, %v1333
      %v1411 = vmul.f32 %v1210, %v1337
      %v1412 = vmul.f32 %v1214, %v1333
      %v1413 = vmul.f32 %v1214, %v1337
      %v1414 = vmul.f32 %v1218, %v1333
      %v1415 = vmul.f32 %v1218, %v1337
      %v1416 = vmul.f32 %v1222, %v1333
      %v1417 = vmul.f32 %v1222, %v1337
      %v1418 = vmul.f32 %v1226, %v1333
      %v1419 = vmul.f32 %v1226, %v1337
      %v1420 = vmul.f32 %v1230, %v1333
      %v1421 = vmul.f32 %v1230, %v1337
      %v1422 = vmul.f32 %v1234, %v1333
      %v1423 = vmul.f32 %v1234, %v1337
      %v1424 = vmul.f32 %v1238, %v1333
      %v1425 = vmul.f32 %v1238, %v1337
      %v1426 = vmul.f32 %v1242, %v1333
      %v1427 = vmul.f32 %v1242, %v1337
      %v1428 = vmul.f32 %v1246, %v1333
      %v1429 = vmul.f32 %v1246, %v1337
      %v1430 = vmul.f32 %v1250, %v1333
      %v1431 = vmul.f32 %v1250, %v1337
      %v1432 = vmul.f32 %v1254, %v1333
      %v1433 = vmul.f32 %v1254, %v1337
      %v1434 = vmul.f32 %v1258, %v1333
      %v1435 = vmul.f32 %v1258, %v1337
      %v1436 = vmul.f32 %v1262, %v1333
      %v1437 = vmul.f32 %v1262, %v1337
      %v1438 = vmul.f32 %v1266, %v1333
      %v1439 = vmul.f32 %v1266, %v1337
      %v1440 = vmul.f32 %v1270, %v1333
      %v1441 = vmul.f32 %v1270, %v1337
      %v1442 = vmul.f32 %v1274, %v1333
      %v1443 = vmul.f32 %v1274, %v1337
      %v1444 = vmul.f32 %v1278, %v1333
      %v1445 = vmul.f32 %v1278, %v1337
      %v1446 = vmul.f32 %v1282, %v1333
      %v1447 = vmul.f32 %v1282, %v1337
      %v1448 = vmul.f32 %v1286, %v1333
      %v1449 = vmul.f32 %v1286, %v1337
      %v1450 = vmul.f32 %v1290, %v1333
      %v1451 = vmul.f32 %v1290, %v1337
      %v1452 = vmul.f32 %v1294, %v1333
      %v1453 = vmul.f32 %v1294, %v1337
      %v1454 = vmul.f32 %v1298, %v1333
      %v1455 = vmul.f32 %v1298, %v1337
      %v1456 = vmul.f32 %v1302, %v1333
      %v1457 = vmul.f32 %v1302, %v1337
      %v1458 = vmul.f32 %v1306, %v1333
      %v1459 = vmul.f32 %v1306, %v1337
      %v1460 = vmul.f32 %v1310, %v1333
      %v1461 = vmul.f32 %v1310, %v1337
      %v1462 = vmul.f32 %v1314, %v1333
      %v1463 = vmul.f32 %v1314, %v1337
      %v1464 = vmul.f32 %v1318, %v1333
      %v1465 = vmul.f32 %v1318, %v1337
      %v1466 = vadd.f32 %v936, %v1338
      %v1467 = vadd.f32 %v937, %v1339
      %v1468 = vadd.f32 %v938, %v1340
      %v1469 = vadd.f32 %v939, %v1341
      %v1470 = vadd.f32 %v940, %v1342
      %v1471 = vadd.f32 %v941, %v1343
      %v1472 = vadd.f32 %v942, %v1344
      %v1473 = vadd.f32 %v943, %v1345
      %v1474 = vadd.f32 %v944, %v1346
      %v1475 = vadd.f32 %v945, %v1347
      %v1476 = vadd.f32 %v946, %v1348
      %v1477 = vadd.f32 %v947, %v1349
      %v1478 = vadd.f32 %v948, %v1350
      %v1479 = vadd.f32 %v949, %v1351
      %v1480 = vadd.f32 %v950, %v1352
      %v1481 = vadd.f32 %v951, %v1353
      %v1482 = vadd.f32 %v952, %v1354
      %v1483 = vadd.f32 %v953, %v1355
      %v1484 = vadd.f32 %v954, %v1356
      %v1485 = vadd.f32 %v955, %v1357
      %v1486 = vadd.f32 %v956, %v1358
      %v1487 = vadd.f32 %v957, %v1359
      %v1488 = vadd.f32 %v958, %v1360
      %v1489 = vadd.f32 %v959, %v1361
      %v1490 = vadd.f32 %v960, %v1362
      %v1491 = vadd.f32 %v961, %v1363
      %v1492 = vadd.f32 %v962, %v1364
      %v1493 = vadd.f32 %v963, %v1365
      %v1494 = vadd.f32 %v964, %v1366
      %v1495 = vadd.f32 %v965, %v1367
      %v1496 = vadd.f32 %v966, %v1368
      %v1497 = vadd.f32 %v967, %v1369
      %v1498 = vadd.f32 %v968, %v1370
      %v1499 = vadd.f32 %v969, %v1371
      %v1500 = vadd.f32 %v970, %v1372
      %v1501 = vadd.f32 %v971, %v1373
      %v1502 = vadd.f32 %v972, %v1374
      %v1503 = vadd.f32 %v973, %v1375
      %v1504 = vadd.f32 %v974, %v1376
      %v1505 = vadd.f32 %v975, %v1377
      %v1506 = vadd.f32 %v976, %v1378
      %v1507 = vadd.f32 %v977, %v1379
      %v1508 = vadd.f32 %v978, %v1380
      %v1509 = vadd.f32 %v979, %v1381
      %v1510 = vadd.f32 %v980, %v1382
      %v1511 = vadd.f32 %v981, %v1383
      %v1512 = vadd.f32 %v982, %v1384
      %v1513 = vadd.f32 %v983, %v1385
      %v1514 = vadd.f32 %v984, %v1386
      %v1515 = vadd.f32 %v985, %v1387
      %v1516 = vadd.f32 %v986, %v1388
      %v1517 = vadd.f32 %v987, %v1389
      %v1518 = vadd.f32 %v988, %v1390
      %v1519 = vadd.f32 %v989, %v1391
      %v1520 = vadd.f32 %v990, %v1392
      %v1521 = vadd.f32 %v991, %v1393
      %v1522 = vadd.f32 %v992, %v1394
      %v1523 = vadd.f32 %v993, %v1395
      %v1524 = vadd.f32 %v994, %v1396
      %v1525 = vadd.f32 %v995, %v1397
      %v1526 = vadd.f32 %v996, %v1398
      %v1527 = vadd.f32 %v997, %v1399
      %v1528 = vadd.f32 %v998, %v1400
      %v1529 = vadd.f32 %v999, %v1401
      %v1530 = vadd.f32 %v1000, %v1402
      %v1531 = vadd.f32 %v1001, %v1403
      %v1532 = vadd.f32 %v1002, %v1404
      %v1533 = vadd.f32 %v1003, %v1405
      %v1534 = vadd.f32 %v1004, %v1406
      %v1535 = vadd.f32 %v1005, %v1407
      %v1536 = vadd.f32 %v1006, %v1408
      %v1537 = vadd.f32 %v1007, %v1409
      %v1538 = vadd.f32 %v1008, %v1410
      %v1539 = vadd.f32 %v1009, %v1411
      %v1540 = vadd.f32 %v1010, %v1412
      %v1541 = vadd.f32 %v1011, %v1413
      %v1542 = vadd.f32 %v1012, %v1414
      %v1543 = vadd.f32 %v1013, %v1415
      %v1544 = vadd.f32 %v1014, %v1416
      %v1545 = vadd.f32 %v1015, %v1417
      %v1546 = vadd.f32 %v1016, %v1418
      %v1547 = vadd.f32 %v1017, %v1419
      %v1548 = vadd.f32 %v1018, %v1420
      %v1549 = vadd.f32 %v1019, %v1421
      %v1550 = vadd.f32 %v1020, %v1422
      %v1551 = vadd.f32 %v1021, %v1423
      %v1552 = vadd.f32 %v1022, %v1424
      %v1553 = vadd.f32 %v1023, %v1425
      %v1554 = vadd.f32 %v1024, %v1426
      %v1555 = vadd.f32 %v1025, %v1427
      %v1556 = vadd.f32 %v1026, %v1428
      %v1557 = vadd.f32 %v1027, %v1429
      %v1558 = vadd.f32 %v1028, %v1430
      %v1559 = vadd.f32 %v1029, %v1431
      %v1560 = vadd.f32 %v1030, %v1432
      %v1561 = vadd.f32 %v1031, %v1433
      %v1562 = vadd.f32 %v1032, %v1434
      %v1563 = vadd.f32 %v1033, %v1435
      %v1564 = vadd.f32 %v1034, %v1436
      %v1565 = vadd.f32 %v1035, %v1437
      %v1566 = vadd.f32 %v1036, %v1438
      %v1567 = vadd.f32 %v1037, %v1439
      %v1568 = vadd.f32 %v1038, %v1440
      %v1569 = vadd.f32 %v1039, %v1441
      %v1570 = vadd.f32 %v1040, %v1442
      %v1571 = vadd.f32 %v1041, %v1443
      %v1572 = vadd.f32 %v1042, %v1444
      %v1573 = vadd.f32 %v1043, %v1445
      %v1574 = vadd.f32 %v1044, %v1446
      %v1575 = vadd.f32 %v1045, %v1447
      %v1576 = vadd.f32 %v1046, %v1448
      %v1577 = vadd.f32 %v1047, %v1449
      %v1578 = vadd.f32 %v1048, %v1450
      %v1579 = vadd.f32 %v1049, %v1451
      %v1580 = vadd.f32 %v1050, %v1452
      %v1581 = vadd.f32 %v1051, %v1453
      %v1582 = vadd.f32 %v1052, %v1454
      %v1583 = vadd.f32 %v1053, %v1455
      %v1584 = vadd.f32 %v1054, %v1456
      %v1585 = vadd.f32 %v1055, %v1457
      %v1586 = vadd.f32 %v1056, %v1458
      %v1587 = vadd.f32 %v1057, %v1459
      %v1588 = vadd.f32 %v1058, %v1460
      %v1589 = vadd.f32 %v1059, %v1461
      %v1590 = vadd.f32 %v1060, %v1462
      %v1591 = vadd.f32 %v1061, %v1463
      %v1592 = vadd.f32 %v1062, %v1464
      %v1593 = vadd.f32 %v1063, %v1465
      %v1594 = vmax.f32 %v1466, 0.0
      %v1595 = vmax.f32 %v1467, 0.0
      %v1596 = vmax.f32 %v1468, 0.0
      %v1597 = vmax.f32 %v1469, 0.0
      %v1598 = vmax.f32 %v1470, 0.0
      %v1599 = vmax.f32 %v1471, 0.0
      %v1600 = vmax.f32 %v1472, 0.0
      %v1601 = vmax.f32 %v1473, 0.0
      %v1602 = vmax.f32 %v1474, 0.0
      %v1603 = vmax.f32 %v1475, 0.0
      %v1604 = vmax.f32 %v1476, 0.0
      %v1605 = vmax.f32 %v1477, 0.0
      %v1606 = vmax.f32 %v1478, 0.0
      %v1607 = vmax.f32 %v1479, 0.0
      %v1608 = vmax.f32 %v1480, 0.0
      %v1609 = vmax.f32 %v1481, 0.0
      %v1610 = vmax.f32 %v1482, 0.0
      %v1611 = vmax.f32 %v1483, 0.0
      %v1612 = vmax.f32 %v1484, 0.0
      %v1613 = vmax.f32 %v1485, 0.0
      %v1614 = vmax.f32 %v1486, 0.0
      %v1615 = vmax.f32 %v1487, 0.0
      %v1616 = vmax.f32 %v1488, 0.0
      %v1617 = vmax.f32 %v1489, 0.0
      %v1618 = vmax.f32 %v1490, 0.0
      %v1619 = vmax.f32 %v1491, 0.0
      %v1620 = vmax.f32 %v1492, 0.0
      %v1621 = vmax.f32 %v1493, 0.0
      %v1622 = vmax.f32 %v1494, 0.0
      %v1623 = vmax.f32 %v1495, 0.0
      %v1624 = vmax.f32 %v1496, 0.0
      %v1625 = vmax.f32 %v1497, 0.0
      %v1626 = vmax.f32 %v1498, 0.0
      %v1627 = vmax.f32 %v1499, 0.0
      %v1628 = vmax.f32 %v1500, 0.0
      %v1629 = vmax.f32 %v1501, 0.0
      %v1630 = vmax.f32 %v1502, 0.0
      %v1631 = vmax.f32 %v1503, 0.0
      %v1632 = vmax.f32 %v1504, 0.0
      %v1633 = vmax.f32 %v1505, 0.0
      %v1634 = vmax.f32 %v1506, 0.0
      %v1635 = vmax.f32 %v1507, 0.0
      %v1636 = vmax.f32 %v1508, 0.0
      %v1637 = vmax.f32 %v1509, 0.0
      %v1638 = vmax.f32 %v1510, 0.0
      %v1639 = vmax.f32 %v1511, 0.0
      %v1640 = vmax.f32 %v1512, 0.0
      %v1641 = vmax.f32 %v1513, 0.0
      %v1642 = vmax.f32 %v1514, 0.0
      %v1643 = vmax.f32 %v1515, 0.0
      %v1644 = vmax.f32 %v1516, 0.0
      %v1645 = vmax.f32 %v1517, 0.0
      %v1646 = vmax.f32 %v1518, 0.0
      %v1647 = vmax.f32 %v1519, 0.0
      %v1648 = vmax.f32 %v1520, 0.0
      %v1649 = vmax.f32 %v1521, 0.0
      %v1650 = vmax.f32 %v1522, 0.0
      %v1651 = vmax.f32 %v1523, 0.0
      %v1652 = vmax.f32 %v1524, 0.0
      %v1653 = vmax.f32 %v1525, 0.0
      %v1654 = vmax.f32 %v1526, 0.0
      %v1655 = vmax.f32 %v1527, 0.0
      %v1656 = vmax.f32 %v1528, 0.0
      %v1657 = vmax.f32 %v1529, 0.0
      %v1658 = vmax.f32 %v1530, 0.0
      %v1659 = vmax.f32 %v1531, 0.0
      %v1660 = vmax.f32 %v1532, 0.0
      %v1661 = vmax.f32 %v1533, 0.0
      %v1662 = vmax.f32 %v1534, 0.0
      %v1663 = vmax.f32 %v1535, 0.0
      %v1664 = vmax.f32 %v1536, 0.0
      %v1665 = vmax.f32 %v1537, 0.0
      %v1666 = vmax.f32 %v1538, 0.0
      %v1667 = vmax.f32 %v1539, 0.0
      %v1668 = vmax.f32 %v1540, 0.0
      %v1669 = vmax.f32 %v1541, 0.0
      %v1670 = vmax.f32 %v1542, 0.0
      %v1671 = vmax.f32 %v1543, 0.0
      %v1672 = vmax.f32 %v1544, 0.0
      %v1673 = vmax.f32 %v1545, 0.0
      %v1674 = vmax.f32 %v1546, 0.0
      %v1675 = vmax.f32 %v1547, 0.0
      %v1676 = vmax.f32 %v1548, 0.0
      %v1677 = vmax.f32 %v1549, 0.0
      %v1678 = vmax.f32 %v1550, 0.0
      %v1679 = vmax.f32 %v1551, 0.0
      %v1680 = vmax.f32 %v1552, 0.0
      %v1681 = vmax.f32 %v1553, 0.0
      %v1682 = vmax.f32 %v1554, 0.0
      %v1683 = vmax.f32 %v1555, 0.0
      %v1684 = vmax.f32 %v1556, 0.0
      %v1685 = vmax.f32 %v1557, 0.0
      %v1686 = vmax.f32 %v1558, 0.0
      %v1687 = vmax.f32 %v1559, 0.0
      %v1688 = vmax.f32 %v1560, 0.0
      %v1689 = vmax.f32 %v1561, 0.0
      %v1690 = vmax.f32 %v1562, 0.0
      %v1691 = vmax.f32 %v1563, 0.0
      %v1692 = vmax.f32 %v1564, 0.0
      %v1693 = vmax.f32 %v1565, 0.0
      %v1694 = vmax.f32 %v1566, 0.0
      %v1695 = vmax.f32 %v1567, 0.0
      %v1696 = vmax.f32 %v1568, 0.0
      %v1697 = vmax.f32 %v1569, 0.0
      %v1698 = vmax.f32 %v1570, 0.0
      %v1699 = vmax.f32 %v1571, 0.0
      %v1700 = vmax.f32 %v1572, 0.0
      %v1701 = vmax.f32 %v1573, 0.0
      %v1702 = vmax.f32 %v1574, 0.0
      %v1703 = vmax.f32 %v1575, 0.0
      %v1704 = vmax.f32 %v1576, 0.0
      %v1705 = vmax.f32 %v1577, 0.0
      %v1706 = vmax.f32 %v1578, 0.0
      %v1707 = vmax.f32 %v1579, 0.0
      %v1708 = vmax.f32 %v1580, 0.0
      %v1709 = vmax.f32 %v1581, 0.0
      %v1710 = vmax.f32 %v1582, 0.0
      %v1711 = vmax.f32 %v1583, 0.0
      %v1712 = vmax.f32 %v1584, 0.0
      %v1713 = vmax.f32 %v1585, 0.0
      %v1714 = vmax.f32 %v1586, 0.0
      %v1715 = vmax.f32 %v1587, 0.0
      %v1716 = vmax.f32 %v1588, 0.0
      %v1717 = vmax.f32 %v1589, 0.0
      %v1718 = vmax.f32 %v1590, 0.0
      %v1719 = vmax.f32 %v1591, 0.0
      %v1720 = vmax.f32 %v1592, 0.0
      %v1721 = vmax.f32 %v1593, 0.0
      %v1722 = vpack.c.bf16 %v1596, %v1594
      %v1723 = vpack.c.bf16 %v1597, %v1595
      %v1724 = vpack.c.bf16 %v1600, %v1598
      %v1725 = vpack.c.bf16 %v1601, %v1599
      %v1726 = vpack.c.bf16 %v1604, %v1602
      %v1727 = vpack.c.bf16 %v1605, %v1603
      %v1728 = vpack.c.bf16 %v1608, %v1606
      %v1729 = vpack.c.bf16 %v1609, %v1607
      %v1730 = vpack.c.bf16 %v1612, %v1610
      %v1731 = vpack.c.bf16 %v1613, %v1611
      %v1732 = vpack.c.bf16 %v1616, %v1614
      %v1733 = vpack.c.bf16 %v1617, %v1615
      %v1734 = vpack.c.bf16 %v1620, %v1618
      %v1735 = vpack.c.bf16 %v1621, %v1619
      %v1736 = vpack.c.bf16 %v1624, %v1622
      %v1737 = vpack.c.bf16 %v1625, %v1623
      %v1738 = vpack.c.bf16 %v1628, %v1626
      %v1739 = vpack.c.bf16 %v1629, %v1627
      %v1740 = vpack.c.bf16 %v1632, %v1630
      %v1741 = vpack.c.bf16 %v1633, %v1631
      %v1742 = vpack.c.bf16 %v1636, %v1634
      %v1743 = vpack.c.bf16 %v1637, %v1635
      %v1744 = vpack.c.bf16 %v1640, %v1638
      %v1745 = vpack.c.bf16 %v1641, %v1639
      %v1746 = vpack.c.bf16 %v1644, %v1642
      %v1747 = vpack.c.bf16 %v1645, %v1643
      %v1748 = vpack.c.bf16 %v1648, %v1646
      %v1749 = vpack.c.bf16 %v1649, %v1647
      %v1750 = vpack.c.bf16 %v1652, %v1650
      %v1751 = vpack.c.bf16 %v1653, %v1651
      %v1752 = vpack.c.bf16 %v1656, %v1654
      %v1753 = vpack.c.bf16 %v1657, %v1655
      %v1754 = vpack.c.bf16 %v1660, %v1658
      %v1755 = vpack.c.bf16 %v1661, %v1659
      %v1756 = vpack.c.bf16 %v1664, %v1662
      %v1757 = vpack.c.bf16 %v1665, %v1663
      %v1758 = vpack.c.bf16 %v1668, %v1666
      %v1759 = vpack.c.bf16 %v1669, %v1667
      %v1760 = vpack.c.bf16 %v1672, %v1670
      %v1761 = vpack.c.bf16 %v1673, %v1671
      %v1762 = vpack.c.bf16 %v1676, %v1674
      %v1763 = vpack.c.bf16 %v1677, %v1675
      %v1764 = vpack.c.bf16 %v1680, %v1678
      %v1765 = vpack.c.bf16 %v1681, %v1679
      %v1766 = vpack.c.bf16 %v1684, %v1682
      %v1767 = vpack.c.bf16 %v1685, %v1683
      %v1768 = vpack.c.bf16 %v1688, %v1686
      %v1769 = vpack.c.bf16 %v1689, %v1687
      %v1770 = vpack.c.bf16 %v1692, %v1690
      %v1771 = vpack.c.bf16 %v1693, %v1691
      %v1772 = vpack.c.bf16 %v1696, %v1694
      %v1773 = vpack.c.bf16 %v1697, %v1695
      %v1774 = vpack.c.bf16 %v1700, %v1698
      %v1775 = vpack.c.bf16 %v1701, %v1699
      %v1776 = vpack.c.bf16 %v1704, %v1702
      %v1777 = vpack.c.bf16 %v1705, %v1703
      %v1778 = vpack.c.bf16 %v1708, %v1706
      %v1779 = vpack.c.bf16 %v1709, %v1707
      %v1780 = vpack.c.bf16 %v1712, %v1710
      %v1781 = vpack.c.bf16 %v1713, %v1711
      %v1782 = vpack.c.bf16 %v1716, %v1714
      %v1783 = vpack.c.bf16 %v1717, %v1715
      %v1784 = vpack.c.bf16 %v1720, %v1718
      %v1785 = vpack.c.bf16 %v1721, %v1719
      %v1786 = vld [vmem:[%s3] sm:$0xff]
      %v1787 = vld [vmem:[%s3 + $0x8] sm:$0xff]
      %v1788 = vld [vmem:[%s3 + $0x10] sm:$0xff]
      %v1789 = vld [vmem:[%s3 + $0x18] sm:$0xff]
      %v1790 = vld [vmem:[%s3 + $0x20] sm:$0xff]
      %v1791 = vld [vmem:[%s3 + $0x28] sm:$0xff]
      %v1792 = vld [vmem:[%s3 + $0x30] sm:$0xff]
      %v1793 = vld [vmem:[%s3 + $0x38] sm:$0xff]
      %v1794 = vld [vmem:[%s3 + $0x40] sm:$0xff]
      %v1795 = vld [vmem:[%s3 + $0x48] sm:$0xff]
      %v1796 = vld [vmem:[%s3 + $0x50] sm:$0xff]
      %v1797 = vld [vmem:[%s3 + $0x58] sm:$0xff]
      %v1798 = vld [vmem:[%s3 + $0x60] sm:$0xff]
      %v1799 = vld [vmem:[%s3 + $0x68] sm:$0xff]
      %v1800 = vld [vmem:[%s3 + $0x70] sm:$0xff]
      %v1801 = vld [vmem:[%s3 + $0x78] sm:$0xff]
      %v1802 = vld [vmem:[%s3 + $0x80] sm:$0xff]
      %v1803 = vld [vmem:[%s3 + $0x88] sm:$0xff]
      %v1804 = vld [vmem:[%s3 + $0x90] sm:$0xff]
      %v1805 = vld [vmem:[%s3 + $0x98] sm:$0xff]
      %v1806 = vld [vmem:[%s3 + $0xa0] sm:$0xff]
      %v1807 = vld [vmem:[%s3 + $0xa8] sm:$0xff]
      %v1808 = vld [vmem:[%s3 + $0xb0] sm:$0xff]
      %v1809 = vld [vmem:[%s3 + $0xb8] sm:$0xff]
      %v1810 = vld [vmem:[%s3 + $0xc0] sm:$0xff]
      %v1811 = vld [vmem:[%s3 + $0xc8] sm:$0xff]
      %v1812 = vld [vmem:[%s3 + $0xd0] sm:$0xff]
      %v1813 = vld [vmem:[%s3 + $0xd8] sm:$0xff]
      %v1814 = vld [vmem:[%s3 + $0xe0] sm:$0xff]
      %v1815 = vld [vmem:[%s3 + $0xe8] sm:$0xff]
      %v1816 = vld [vmem:[%s3 + $0xf0] sm:$0xff]
      %v1817 = vld [vmem:[%s3 + $0xf8] sm:$0xff]
      %v1818 = vld [vmem:[%s4] sm:$0x3]
      %v1820 = vlaneseq
      %v1821 = vshrl.u32 %v1820, 7
      %v1822 = vsub.s32 0, %v1821
      %v1823 = vrot.slane %v1818, %v1822
      %v1824 = vlaneseq
      %v1825 = vshrl.u32 %v1824, 7
      %v1826 = vsub.s32 1, %v1825
      %v1827 = vrot.slane %v1818, %v1826
      %v1862 = vunpack.c.l.b16 %v1786
      %v1863 = vunpack.c.h.b16 %v1786
      %v1864 = vunpack.c.l.b16 %v1787
      %v1865 = vunpack.c.h.b16 %v1787
      %v1866 = vunpack.c.l.b16 %v1788
      %v1867 = vunpack.c.h.b16 %v1788
      %v1868 = vunpack.c.l.b16 %v1789
      %v1869 = vunpack.c.h.b16 %v1789
      %v1870 = vunpack.c.l.b16 %v1790
      %v1871 = vunpack.c.h.b16 %v1790
      %v1872 = vunpack.c.l.b16 %v1791
      %v1873 = vunpack.c.h.b16 %v1791
      %v1874 = vunpack.c.l.b16 %v1792
      %v1875 = vunpack.c.h.b16 %v1792
      %v1876 = vunpack.c.l.b16 %v1793
      %v1877 = vunpack.c.h.b16 %v1793
      %v1878 = vunpack.c.l.b16 %v1794
      %v1879 = vunpack.c.h.b16 %v1794
      %v1880 = vunpack.c.l.b16 %v1795
      %v1881 = vunpack.c.h.b16 %v1795
      %v1882 = vunpack.c.l.b16 %v1796
      %v1883 = vunpack.c.h.b16 %v1796
      %v1884 = vunpack.c.l.b16 %v1797
      %v1885 = vunpack.c.h.b16 %v1797
      %v1886 = vunpack.c.l.b16 %v1798
      %v1887 = vunpack.c.h.b16 %v1798
      %v1888 = vunpack.c.l.b16 %v1799
      %v1889 = vunpack.c.h.b16 %v1799
      %v1890 = vunpack.c.l.b16 %v1800
      %v1891 = vunpack.c.h.b16 %v1800
      %v1892 = vunpack.c.l.b16 %v1801
      %v1893 = vunpack.c.h.b16 %v1801
      %v1894 = vunpack.c.l.b16 %v1802
      %v1895 = vunpack.c.h.b16 %v1802
      %v1896 = vunpack.c.l.b16 %v1803
      %v1897 = vunpack.c.h.b16 %v1803
      %v1898 = vunpack.c.l.b16 %v1804
      %v1899 = vunpack.c.h.b16 %v1804
      %v1900 = vunpack.c.l.b16 %v1805
      %v1901 = vunpack.c.h.b16 %v1805
      %v1902 = vunpack.c.l.b16 %v1806
      %v1903 = vunpack.c.h.b16 %v1806
      %v1904 = vunpack.c.l.b16 %v1807
      %v1905 = vunpack.c.h.b16 %v1807
      %v1906 = vunpack.c.l.b16 %v1808
      %v1907 = vunpack.c.h.b16 %v1808
      %v1908 = vunpack.c.l.b16 %v1809
      %v1909 = vunpack.c.h.b16 %v1809
      %v1910 = vunpack.c.l.b16 %v1810
      %v1911 = vunpack.c.h.b16 %v1810
      %v1912 = vunpack.c.l.b16 %v1811
      %v1913 = vunpack.c.h.b16 %v1811
      %v1914 = vunpack.c.l.b16 %v1812
      %v1915 = vunpack.c.h.b16 %v1812
      %v1916 = vunpack.c.l.b16 %v1813
      %v1917 = vunpack.c.h.b16 %v1813
      %v1918 = vunpack.c.l.b16 %v1814
      %v1919 = vunpack.c.h.b16 %v1814
      %v1920 = vunpack.c.l.b16 %v1815
      %v1921 = vunpack.c.h.b16 %v1815
      %v1922 = vunpack.c.l.b16 %v1816
      %v1923 = vunpack.c.h.b16 %v1816
      %v1924 = vunpack.c.l.b16 %v1817
      %v1925 = vunpack.c.h.b16 %v1817
      %v1926 = vpack.c.b16 %v1864, %v1862
      %v1927 = vpack.c.b16 %v1865, %v1863
      %v1928 = vpack.c.b16 %v1868, %v1866
      %v1929 = vpack.c.b16 %v1869, %v1867
      %v1930 = vpack.c.b16 %v1872, %v1870
      %v1931 = vpack.c.b16 %v1873, %v1871
      %v1932 = vpack.c.b16 %v1876, %v1874
      %v1933 = vpack.c.b16 %v1877, %v1875
      %v1934 = vpack.c.b16 %v1880, %v1878
      %v1935 = vpack.c.b16 %v1881, %v1879
      %v1936 = vpack.c.b16 %v1884, %v1882
      %v1937 = vpack.c.b16 %v1885, %v1883
      %v1938 = vpack.c.b16 %v1888, %v1886
      %v1939 = vpack.c.b16 %v1889, %v1887
      %v1940 = vpack.c.b16 %v1892, %v1890
      %v1941 = vpack.c.b16 %v1893, %v1891
      %v1942 = vpack.c.b16 %v1896, %v1894
      %v1943 = vpack.c.b16 %v1897, %v1895
      %v1944 = vpack.c.b16 %v1900, %v1898
      %v1945 = vpack.c.b16 %v1901, %v1899
      %v1946 = vpack.c.b16 %v1904, %v1902
      %v1947 = vpack.c.b16 %v1905, %v1903
      %v1948 = vpack.c.b16 %v1908, %v1906
      %v1949 = vpack.c.b16 %v1909, %v1907
      %v1950 = vpack.c.b16 %v1912, %v1910
      %v1951 = vpack.c.b16 %v1913, %v1911
      %v1952 = vpack.c.b16 %v1916, %v1914
      %v1953 = vpack.c.b16 %v1917, %v1915
      %v1954 = vpack.c.b16 %v1920, %v1918
      %v1955 = vpack.c.b16 %v1921, %v1919
      %v1956 = vpack.c.b16 %v1924, %v1922
      %v1957 = vpack.c.b16 %v1925, %v1923
      %1990 = vmatprep.subr.bf16.mxu0 %v1941
      %1991 = vmatpush1.bf16.msra.mxu0 %v1940
      %1992 = vmatprep.subr.bf16.mxu0 %v1939
      %1993 = vmatpush1.bf16.msra.mxu0 %v1938
      %1994 = vmatprep.subr.bf16.mxu0 %v1937
      %1995 = vmatpush1.bf16.msra.mxu0 %v1936
      %1996 = vmatprep.subr.bf16.mxu0 %v1935
      %1997 = vmatpush1.bf16.msra.mxu0 %v1934
      %1998 = vmatprep.subr.bf16.mxu0 %v1933
      %1999 = vmatpush1.bf16.msra.mxu0 %v1932
      %2000 = vmatprep.subr.bf16.mxu0 %v1931
      %2001 = vmatpush1.bf16.msra.mxu0 %v1930
      %2002 = vmatprep.subr.bf16.mxu0 %v1929
      %2003 = vmatpush1.bf16.msra.mxu0 %v1928
      %2004 = vmatprep.subr.bf16.mxu0 %v1927
      %2005 = vmatpush1.bf16.msra.mxu0 %v1926
      %2006 = vmatprep.subr.bf16.mxu0 %v1957
      %2007 = vmatpush2.bf16.msra.mxu0 %v1956
      %2008 = vmatprep.subr.bf16.mxu0 %v1955
      %2009 = vmatpush2.bf16.msra.mxu0 %v1954
      %2010 = vmatprep.subr.bf16.mxu0 %v1953
      %2011 = vmatpush2.bf16.msra.mxu0 %v1952
      %2012 = vmatprep.subr.bf16.mxu0 %v1951
      %2013 = vmatpush2.bf16.msra.mxu0 %v1950
      %2014 = vmatprep.subr.bf16.mxu0 %v1949
      %2015 = vmatpush2.bf16.msra.mxu0 %v1948
      %2016 = vmatprep.subr.bf16.mxu0 %v1947
      %2017 = vmatpush2.bf16.msra.mxu0 %v1946
      %2018 = vmatprep.subr.bf16.mxu0 %v1945
      %2019 = vmatpush2.bf16.msra.mxu0 %v1944
      %2020 = vmatprep.subr.bf16.mxu0 %v1943
      %2021 = vmatpush2.bf16.msra.mxu0 %v1942
      %2022 = vmatprep.mubr.bf16.mxu0 %v1723
      %2023 = vmatmul.mubr.bf16.gmra.mxu0 %v1722
      %v2024 = vpop.f32.mrf.mxu0
      %v2025 = vadd.f32 %v1823, %v2024
      %v2026 = vpop.f32.mrf.mxu0
      %v2027 = vadd.f32 %v1827, %v2026
      %v2028 = vpop.f32.mrf.mxu0
      %v2029 = vadd.f32 %v1823, %v2028
      %v2030 = vpop.f32.mrf.mxu0
      %v2031 = vadd.f32 %v1827, %v2030
      %2032 = vmatprep.mubr.bf16.mxu0 %v1725
      %2033 = vmatmul.mubr.bf16.gmra.mxu0 %v1724
      %v2034 = vpop.f32.mrf.mxu0
      %v2035 = vadd.f32 %v1823, %v2034
      %v2036 = vpop.f32.mrf.mxu0
      %v2037 = vadd.f32 %v1827, %v2036
      %v2038 = vpop.f32.mrf.mxu0
      %v2039 = vadd.f32 %v1823, %v2038
      %v2040 = vpop.f32.mrf.mxu0
      %v2041 = vadd.f32 %v1827, %v2040
      %2042 = vmatprep.mubr.bf16.mxu0 %v1727
      %2043 = vmatmul.mubr.bf16.gmra.mxu0 %v1726
      %v2044 = vpop.f32.mrf.mxu0
      %v2045 = vadd.f32 %v1823, %v2044
      %v2046 = vpop.f32.mrf.mxu0
      %v2047 = vadd.f32 %v1827, %v2046
      %v2048 = vpop.f32.mrf.mxu0
      %v2049 = vadd.f32 %v1823, %v2048
      %v2050 = vpop.f32.mrf.mxu0
      %v2051 = vadd.f32 %v1827, %v2050
      %2052 = vmatprep.mubr.bf16.mxu0 %v1729
      %2053 = vmatmul.mubr.bf16.gmra.mxu0 %v1728
      %v2054 = vpop.f32.mrf.mxu0
      %v2055 = vadd.f32 %v1823, %v2054
      %v2056 = vpop.f32.mrf.mxu0
      %v2057 = vadd.f32 %v1827, %v2056
      %v2058 = vpop.f32.mrf.mxu0
      %v2059 = vadd.f32 %v1823, %v2058
      %v2060 = vpop.f32.mrf.mxu0
      %v2061 = vadd.f32 %v1827, %v2060
      %2062 = vmatprep.mubr.bf16.mxu0 %v1731
      %2063 = vmatmul.mubr.bf16.gmra.mxu0 %v1730
      %v2064 = vpop.f32.mrf.mxu0
      %v2065 = vadd.f32 %v1823, %v2064
      %v2066 = vpop.f32.mrf.mxu0
      %v2067 = vadd.f32 %v1827, %v2066
      %v2068 = vpop.f32.mrf.mxu0
      %v2069 = vadd.f32 %v1823, %v2068
      %v2070 = vpop.f32.mrf.mxu0
      %v2071 = vadd.f32 %v1827, %v2070
      %2072 = vmatprep.mubr.bf16.mxu0 %v1733
      %2073 = vmatmul.mubr.bf16.gmra.mxu0 %v1732
      %v2074 = vpop.f32.mrf.mxu0
      %v2075 = vadd.f32 %v1823, %v2074
      %v2076 = vpop.f32.mrf.mxu0
      %v2077 = vadd.f32 %v1827, %v2076
      %v2078 = vpop.f32.mrf.mxu0
      %v2079 = vadd.f32 %v1823, %v2078
      %v2080 = vpop.f32.mrf.mxu0
      %v2081 = vadd.f32 %v1827, %v2080
      %2082 = vmatprep.mubr.bf16.mxu0 %v1735
      %2083 = vmatmul.mubr.bf16.gmra.mxu0 %v1734
      %v2084 = vpop.f32.mrf.mxu0
      %v2085 = vadd.f32 %v1823, %v2084
      %v2086 = vpop.f32.mrf.mxu0
      %v2087 = vadd.f32 %v1827, %v2086
      %v2088 = vpop.f32.mrf.mxu0
      %v2089 = vadd.f32 %v1823, %v2088
      %v2090 = vpop.f32.mrf.mxu0
      %v2091 = vadd.f32 %v1827, %v2090
      %2092 = vmatprep.mubr.bf16.mxu0 %v1737
      %2093 = vmatmul.mubr.bf16.gmra.mxu0 %v1736
      %v2094 = vpop.f32.mrf.mxu0
      %v2095 = vadd.f32 %v1823, %v2094
      %v2096 = vpop.f32.mrf.mxu0
      %v2097 = vadd.f32 %v1827, %v2096
      %v2098 = vpop.f32.mrf.mxu0
      %v2099 = vadd.f32 %v1823, %v2098
      %v2100 = vpop.f32.mrf.mxu0
      %v2101 = vadd.f32 %v1827, %v2100
      %2102 = vmatprep.mubr.bf16.mxu0 %v1739
      %2103 = vmatmul.mubr.bf16.gmra.mxu0 %v1738
      %v2104 = vpop.f32.mrf.mxu0
      %v2105 = vadd.f32 %v1823, %v2104
      %v2106 = vpop.f32.mrf.mxu0
      %v2107 = vadd.f32 %v1827, %v2106
      %v2108 = vpop.f32.mrf.mxu0
      %v2109 = vadd.f32 %v1823, %v2108
      %v2110 = vpop.f32.mrf.mxu0
      %v2111 = vadd.f32 %v1827, %v2110
      %2112 = vmatprep.mubr.bf16.mxu0 %v1741
      %2113 = vmatmul.mubr.bf16.gmra.mxu0 %v1740
      %v2114 = vpop.f32.mrf.mxu0
      %v2115 = vadd.f32 %v1823, %v2114
      %v2116 = vpop.f32.mrf.mxu0
      %v2117 = vadd.f32 %v1827, %v2116
      %v2118 = vpop.f32.mrf.mxu0
      %v2119 = vadd.f32 %v1823, %v2118
      %v2120 = vpop.f32.mrf.mxu0
      %v2121 = vadd.f32 %v1827, %v2120
      %2122 = vmatprep.mubr.bf16.mxu0 %v1743
      %2123 = vmatmul.mubr.bf16.gmra.mxu0 %v1742
      %v2124 = vpop.f32.mrf.mxu0
      %v2125 = vadd.f32 %v1823, %v2124
      %v2126 = vpop.f32.mrf.mxu0
      %v2127 = vadd.f32 %v1827, %v2126
      %v2128 = vpop.f32.mrf.mxu0
      %v2129 = vadd.f32 %v1823, %v2128
      %v2130 = vpop.f32.mrf.mxu0
      %v2131 = vadd.f32 %v1827, %v2130
      %2132 = vmatprep.mubr.bf16.mxu0 %v1745
      %2133 = vmatmul.mubr.bf16.gmra.mxu0 %v1744
      %v2134 = vpop.f32.mrf.mxu0
      %v2135 = vadd.f32 %v1823, %v2134
      %v2136 = vpop.f32.mrf.mxu0
      %v2137 = vadd.f32 %v1827, %v2136
      %v2138 = vpop.f32.mrf.mxu0
      %v2139 = vadd.f32 %v1823, %v2138
      %v2140 = vpop.f32.mrf.mxu0
      %v2141 = vadd.f32 %v1827, %v2140
      %2142 = vmatprep.mubr.bf16.mxu0 %v1747
      %2143 = vmatmul.mubr.bf16.gmra.mxu0 %v1746
      %v2144 = vpop.f32.mrf.mxu0
      %v2145 = vadd.f32 %v1823, %v2144
      %v2146 = vpop.f32.mrf.mxu0
      %v2147 = vadd.f32 %v1827, %v2146
      %v2148 = vpop.f32.mrf.mxu0
      %v2149 = vadd.f32 %v1823, %v2148
      %v2150 = vpop.f32.mrf.mxu0
      %v2151 = vadd.f32 %v1827, %v2150
      %2152 = vmatprep.mubr.bf16.mxu0 %v1749
      %2153 = vmatmul.mubr.bf16.gmra.mxu0 %v1748
      %v2154 = vpop.f32.mrf.mxu0
      %v2155 = vadd.f32 %v1823, %v2154
      %v2156 = vpop.f32.mrf.mxu0
      %v2157 = vadd.f32 %v1827, %v2156
      %v2158 = vpop.f32.mrf.mxu0
      %v2159 = vadd.f32 %v1823, %v2158
      %v2160 = vpop.f32.mrf.mxu0
      %v2161 = vadd.f32 %v1827, %v2160
      %2162 = vmatprep.mubr.bf16.mxu0 %v1751
      %2163 = vmatmul.mubr.bf16.gmra.mxu0 %v1750
      %v2164 = vpop.f32.mrf.mxu0
      %v2165 = vadd.f32 %v1823, %v2164
      %v2166 = vpop.f32.mrf.mxu0
      %v2167 = vadd.f32 %v1827, %v2166
      %v2168 = vpop.f32.mrf.mxu0
      %v2169 = vadd.f32 %v1823, %v2168
      %v2170 = vpop.f32.mrf.mxu0
      %v2171 = vadd.f32 %v1827, %v2170
      %2172 = vmatprep.mubr.bf16.mxu0 %v1753
      %2173 = vmatmul.mubr.bf16.gmra.mxu0 %v1752
      %v2174 = vpop.f32.mrf.mxu0
      %v2175 = vadd.f32 %v1823, %v2174
      %v2176 = vpop.f32.mrf.mxu0
      %v2177 = vadd.f32 %v1827, %v2176
      %v2178 = vpop.f32.mrf.mxu0
      %v2179 = vadd.f32 %v1823, %v2178
      %v2180 = vpop.f32.mrf.mxu0
      %v2181 = vadd.f32 %v1827, %v2180
      %2182 = vmatprep.mubr.bf16.mxu0 %v1755
      %2183 = vmatmul.mubr.bf16.gmra.mxu0 %v1754
      %v2184 = vpop.f32.mrf.mxu0
      %v2185 = vadd.f32 %v1823, %v2184
      %v2186 = vpop.f32.mrf.mxu0
      %v2187 = vadd.f32 %v1827, %v2186
      %v2188 = vpop.f32.mrf.mxu0
      %v2189 = vadd.f32 %v1823, %v2188
      %v2190 = vpop.f32.mrf.mxu0
      %v2191 = vadd.f32 %v1827, %v2190
      %2192 = vmatprep.mubr.bf16.mxu0 %v1757
      %2193 = vmatmul.mubr.bf16.gmra.mxu0 %v1756
      %v2194 = vpop.f32.mrf.mxu0
      %v2195 = vadd.f32 %v1823, %v2194
      %v2196 = vpop.f32.mrf.mxu0
      %v2197 = vadd.f32 %v1827, %v2196
      %v2198 = vpop.f32.mrf.mxu0
      %v2199 = vadd.f32 %v1823, %v2198
      %v2200 = vpop.f32.mrf.mxu0
      %v2201 = vadd.f32 %v1827, %v2200
      %2202 = vmatprep.mubr.bf16.mxu0 %v1759
      %2203 = vmatmul.mubr.bf16.gmra.mxu0 %v1758
      %v2204 = vpop.f32.mrf.mxu0
      %v2205 = vadd.f32 %v1823, %v2204
      %v2206 = vpop.f32.mrf.mxu0
      %v2207 = vadd.f32 %v1827, %v2206
      %v2208 = vpop.f32.mrf.mxu0
      %v2209 = vadd.f32 %v1823, %v2208
      %v2210 = vpop.f32.mrf.mxu0
      %v2211 = vadd.f32 %v1827, %v2210
      %2212 = vmatprep.mubr.bf16.mxu0 %v1761
      %2213 = vmatmul.mubr.bf16.gmra.mxu0 %v1760
      %v2214 = vpop.f32.mrf.mxu0
      %v2215 = vadd.f32 %v1823, %v2214
      %v2216 = vpop.f32.mrf.mxu0
      %v2217 = vadd.f32 %v1827, %v2216
      %v2218 = vpop.f32.mrf.mxu0
      %v2219 = vadd.f32 %v1823, %v2218
      %v2220 = vpop.f32.mrf.mxu0
      %v2221 = vadd.f32 %v1827, %v2220
      %2222 = vmatprep.mubr.bf16.mxu0 %v1763
      %2223 = vmatmul.mubr.bf16.gmra.mxu0 %v1762
      %v2224 = vpop.f32.mrf.mxu0
      %v2225 = vadd.f32 %v1823, %v2224
      %v2226 = vpop.f32.mrf.mxu0
      %v2227 = vadd.f32 %v1827, %v2226
      %v2228 = vpop.f32.mrf.mxu0
      %v2229 = vadd.f32 %v1823, %v2228
      %v2230 = vpop.f32.mrf.mxu0
      %v2231 = vadd.f32 %v1827, %v2230
      %2232 = vmatprep.mubr.bf16.mxu0 %v1765
      %2233 = vmatmul.mubr.bf16.gmra.mxu0 %v1764
      %v2234 = vpop.f32.mrf.mxu0
      %v2235 = vadd.f32 %v1823, %v2234
      %v2236 = vpop.f32.mrf.mxu0
      %v2237 = vadd.f32 %v1827, %v2236
      %v2238 = vpop.f32.mrf.mxu0
      %v2239 = vadd.f32 %v1823, %v2238
      %v2240 = vpop.f32.mrf.mxu0
      %v2241 = vadd.f32 %v1827, %v2240
      %2242 = vmatprep.mubr.bf16.mxu0 %v1767
      %2243 = vmatmul.mubr.bf16.gmra.mxu0 %v1766
      %v2244 = vpop.f32.mrf.mxu0
      %v2245 = vadd.f32 %v1823, %v2244
      %v2246 = vpop.f32.mrf.mxu0
      %v2247 = vadd.f32 %v1827, %v2246
      %v2248 = vpop.f32.mrf.mxu0
      %v2249 = vadd.f32 %v1823, %v2248
      %v2250 = vpop.f32.mrf.mxu0
      %v2251 = vadd.f32 %v1827, %v2250
      %2252 = vmatprep.mubr.bf16.mxu0 %v1769
      %2253 = vmatmul.mubr.bf16.gmra.mxu0 %v1768
      %v2254 = vpop.f32.mrf.mxu0
      %v2255 = vadd.f32 %v1823, %v2254
      %v2256 = vpop.f32.mrf.mxu0
      %v2257 = vadd.f32 %v1827, %v2256
      %v2258 = vpop.f32.mrf.mxu0
      %v2259 = vadd.f32 %v1823, %v2258
      %v2260 = vpop.f32.mrf.mxu0
      %v2261 = vadd.f32 %v1827, %v2260
      %2262 = vmatprep.mubr.bf16.mxu0 %v1771
      %2263 = vmatmul.mubr.bf16.gmra.mxu0 %v1770
      %v2264 = vpop.f32.mrf.mxu0
      %v2265 = vadd.f32 %v1823, %v2264
      %v2266 = vpop.f32.mrf.mxu0
      %v2267 = vadd.f32 %v1827, %v2266
      %v2268 = vpop.f32.mrf.mxu0
      %v2269 = vadd.f32 %v1823, %v2268
      %v2270 = vpop.f32.mrf.mxu0
      %v2271 = vadd.f32 %v1827, %v2270
      %2272 = vmatprep.mubr.bf16.mxu0 %v1773
      %2273 = vmatmul.mubr.bf16.gmra.mxu0 %v1772
      %v2274 = vpop.f32.mrf.mxu0
      %v2275 = vadd.f32 %v1823, %v2274
      %v2276 = vpop.f32.mrf.mxu0
      %v2277 = vadd.f32 %v1827, %v2276
      %v2278 = vpop.f32.mrf.mxu0
      %v2279 = vadd.f32 %v1823, %v2278
      %v2280 = vpop.f32.mrf.mxu0
      %v2281 = vadd.f32 %v1827, %v2280
      %2282 = vmatprep.mubr.bf16.mxu0 %v1775
      %2283 = vmatmul.mubr.bf16.gmra.mxu0 %v1774
      %v2284 = vpop.f32.mrf.mxu0
      %v2285 = vadd.f32 %v1823, %v2284
      %v2286 = vpop.f32.mrf.mxu0
      %v2287 = vadd.f32 %v1827, %v2286
      %v2288 = vpop.f32.mrf.mxu0
      %v2289 = vadd.f32 %v1823, %v2288
      %v2290 = vpop.f32.mrf.mxu0
      %v2291 = vadd.f32 %v1827, %v2290
      %2292 = vmatprep.mubr.bf16.mxu0 %v1777
      %2293 = vmatmul.mubr.bf16.gmra.mxu0 %v1776
      %v2294 = vpop.f32.mrf.mxu0
      %v2295 = vadd.f32 %v1823, %v2294
      %v2296 = vpop.f32.mrf.mxu0
      %v2297 = vadd.f32 %v1827, %v2296
      %v2298 = vpop.f32.mrf.mxu0
      %v2299 = vadd.f32 %v1823, %v2298
      %v2300 = vpop.f32.mrf.mxu0
      %v2301 = vadd.f32 %v1827, %v2300
      %2302 = vmatprep.mubr.bf16.mxu0 %v1779
      %2303 = vmatmul.mubr.bf16.gmra.mxu0 %v1778
      %v2304 = vpop.f32.mrf.mxu0
      %v2305 = vadd.f32 %v1823, %v2304
      %v2306 = vpop.f32.mrf.mxu0
      %v2307 = vadd.f32 %v1827, %v2306
      %v2308 = vpop.f32.mrf.mxu0
      %v2309 = vadd.f32 %v1823, %v2308
      %v2310 = vpop.f32.mrf.mxu0
      %v2311 = vadd.f32 %v1827, %v2310
      %2312 = vmatprep.mubr.bf16.mxu0 %v1781
      %2313 = vmatmul.mubr.bf16.gmra.mxu0 %v1780
      %v2314 = vpop.f32.mrf.mxu0
      %v2315 = vadd.f32 %v1823, %v2314
      %v2316 = vpop.f32.mrf.mxu0
      %v2317 = vadd.f32 %v1827, %v2316
      %v2318 = vpop.f32.mrf.mxu0
      %v2319 = vadd.f32 %v1823, %v2318
      %v2320 = vpop.f32.mrf.mxu0
      %v2321 = vadd.f32 %v1827, %v2320
      %2322 = vmatprep.mubr.bf16.mxu0 %v1783
      %2323 = vmatmul.mubr.bf16.gmra.mxu0 %v1782
      %v2324 = vpop.f32.mrf.mxu0
      %v2325 = vadd.f32 %v1823, %v2324
      %v2326 = vpop.f32.mrf.mxu0
      %v2327 = vadd.f32 %v1827, %v2326
      %v2328 = vpop.f32.mrf.mxu0
      %v2329 = vadd.f32 %v1823, %v2328
      %v2330 = vpop.f32.mrf.mxu0
      %v2331 = vadd.f32 %v1827, %v2330
      %2332 = vmatprep.mubr.bf16.mxu0 %v1785
      %2333 = vmatmul.mubr.bf16.gmra.mxu0 %v1784
      %v2334 = vpop.f32.mrf.mxu0
      %v2335 = vadd.f32 %v1823, %v2334
      %v2336 = vpop.f32.mrf.mxu0
      %v2337 = vadd.f32 %v1827, %v2336
      %v2338 = vpop.f32.mrf.mxu0
      %v2339 = vadd.f32 %v1823, %v2338
      %v2340 = vpop.f32.mrf.mxu0
      %v2341 = vadd.f32 %v1827, %v2340
      %2342 = vdwg.mxu0
      %v2343 = vmax.f32 %v2025, 0.0
      %v2344 = vmax.f32 %v2027, 0.0
      %v2345 = vmax.f32 %v2029, 0.0
      %v2346 = vmax.f32 %v2031, 0.0
      %v2347 = vmax.f32 %v2035, 0.0
      %v2348 = vmax.f32 %v2037, 0.0
      %v2349 = vmax.f32 %v2039, 0.0
      %v2350 = vmax.f32 %v2041, 0.0
      %v2351 = vmax.f32 %v2045, 0.0
      %v2352 = vmax.f32 %v2047, 0.0
      %v2353 = vmax.f32 %v2049, 0.0
      %v2354 = vmax.f32 %v2051, 0.0
      %v2355 = vmax.f32 %v2055, 0.0
      %v2356 = vmax.f32 %v2057, 0.0
      %v2357 = vmax.f32 %v2059, 0.0
      %v2358 = vmax.f32 %v2061, 0.0
      %v2359 = vmax.f32 %v2065, 0.0
      %v2360 = vmax.f32 %v2067, 0.0
      %v2361 = vmax.f32 %v2069, 0.0
      %v2362 = vmax.f32 %v2071, 0.0
      %v2363 = vmax.f32 %v2075, 0.0
      %v2364 = vmax.f32 %v2077, 0.0
      %v2365 = vmax.f32 %v2079, 0.0
      %v2366 = vmax.f32 %v2081, 0.0
      %v2367 = vmax.f32 %v2085, 0.0
      %v2368 = vmax.f32 %v2087, 0.0
      %v2369 = vmax.f32 %v2089, 0.0
      %v2370 = vmax.f32 %v2091, 0.0
      %v2371 = vmax.f32 %v2095, 0.0
      %v2372 = vmax.f32 %v2097, 0.0
      %v2373 = vmax.f32 %v2099, 0.0
      %v2374 = vmax.f32 %v2101, 0.0
      %v2375 = vmax.f32 %v2105, 0.0
      %v2376 = vmax.f32 %v2107, 0.0
      %v2377 = vmax.f32 %v2109, 0.0
      %v2378 = vmax.f32 %v2111, 0.0
      %v2379 = vmax.f32 %v2115, 0.0
      %v2380 = vmax.f32 %v2117, 0.0
      %v2381 = vmax.f32 %v2119, 0.0
      %v2382 = vmax.f32 %v2121, 0.0
      %v2383 = vmax.f32 %v2125, 0.0
      %v2384 = vmax.f32 %v2127, 0.0
      %v2385 = vmax.f32 %v2129, 0.0
      %v2386 = vmax.f32 %v2131, 0.0
      %v2387 = vmax.f32 %v2135, 0.0
      %v2388 = vmax.f32 %v2137, 0.0
      %v2389 = vmax.f32 %v2139, 0.0
      %v2390 = vmax.f32 %v2141, 0.0
      %v2391 = vmax.f32 %v2145, 0.0
      %v2392 = vmax.f32 %v2147, 0.0
      %v2393 = vmax.f32 %v2149, 0.0
      %v2394 = vmax.f32 %v2151, 0.0
      %v2395 = vmax.f32 %v2155, 0.0
      %v2396 = vmax.f32 %v2157, 0.0
      %v2397 = vmax.f32 %v2159, 0.0
      %v2398 = vmax.f32 %v2161, 0.0
      %v2399 = vmax.f32 %v2165, 0.0
      %v2400 = vmax.f32 %v2167, 0.0
      %v2401 = vmax.f32 %v2169, 0.0
      %v2402 = vmax.f32 %v2171, 0.0
      %v2403 = vmax.f32 %v2175, 0.0
      %v2404 = vmax.f32 %v2177, 0.0
      %v2405 = vmax.f32 %v2179, 0.0
      %v2406 = vmax.f32 %v2181, 0.0
      %v2407 = vmax.f32 %v2185, 0.0
      %v2408 = vmax.f32 %v2187, 0.0
      %v2409 = vmax.f32 %v2189, 0.0
      %v2410 = vmax.f32 %v2191, 0.0
      %v2411 = vmax.f32 %v2195, 0.0
      %v2412 = vmax.f32 %v2197, 0.0
      %v2413 = vmax.f32 %v2199, 0.0
      %v2414 = vmax.f32 %v2201, 0.0
      %v2415 = vmax.f32 %v2205, 0.0
      %v2416 = vmax.f32 %v2207, 0.0
      %v2417 = vmax.f32 %v2209, 0.0
      %v2418 = vmax.f32 %v2211, 0.0
      %v2419 = vmax.f32 %v2215, 0.0
      %v2420 = vmax.f32 %v2217, 0.0
      %v2421 = vmax.f32 %v2219, 0.0
      %v2422 = vmax.f32 %v2221, 0.0
      %v2423 = vmax.f32 %v2225, 0.0
      %v2424 = vmax.f32 %v2227, 0.0
      %v2425 = vmax.f32 %v2229, 0.0
      %v2426 = vmax.f32 %v2231, 0.0
      %v2427 = vmax.f32 %v2235, 0.0
      %v2428 = vmax.f32 %v2237, 0.0
      %v2429 = vmax.f32 %v2239, 0.0
      %v2430 = vmax.f32 %v2241, 0.0
      %v2431 = vmax.f32 %v2245, 0.0
      %v2432 = vmax.f32 %v2247, 0.0
      %v2433 = vmax.f32 %v2249, 0.0
      %v2434 = vmax.f32 %v2251, 0.0
      %v2435 = vmax.f32 %v2255, 0.0
      %v2436 = vmax.f32 %v2257, 0.0
      %v2437 = vmax.f32 %v2259, 0.0
      %v2438 = vmax.f32 %v2261, 0.0
      %v2439 = vmax.f32 %v2265, 0.0
      %v2440 = vmax.f32 %v2267, 0.0
      %v2441 = vmax.f32 %v2269, 0.0
      %v2442 = vmax.f32 %v2271, 0.0
      %v2443 = vmax.f32 %v2275, 0.0
      %v2444 = vmax.f32 %v2277, 0.0
      %v2445 = vmax.f32 %v2279, 0.0
      %v2446 = vmax.f32 %v2281, 0.0
      %v2447 = vmax.f32 %v2285, 0.0
      %v2448 = vmax.f32 %v2287, 0.0
      %v2449 = vmax.f32 %v2289, 0.0
      %v2450 = vmax.f32 %v2291, 0.0
      %v2451 = vmax.f32 %v2295, 0.0
      %v2452 = vmax.f32 %v2297, 0.0
      %v2453 = vmax.f32 %v2299, 0.0
      %v2454 = vmax.f32 %v2301, 0.0
      %v2455 = vmax.f32 %v2305, 0.0
      %v2456 = vmax.f32 %v2307, 0.0
      %v2457 = vmax.f32 %v2309, 0.0
      %v2458 = vmax.f32 %v2311, 0.0
      %v2459 = vmax.f32 %v2315, 0.0
      %v2460 = vmax.f32 %v2317, 0.0
      %v2461 = vmax.f32 %v2319, 0.0
      %v2462 = vmax.f32 %v2321, 0.0
      %v2463 = vmax.f32 %v2325, 0.0
      %v2464 = vmax.f32 %v2327, 0.0
      %v2465 = vmax.f32 %v2329, 0.0
      %v2466 = vmax.f32 %v2331, 0.0
      %v2467 = vmax.f32 %v2335, 0.0
      %v2468 = vmax.f32 %v2337, 0.0
      %v2469 = vmax.f32 %v2339, 0.0
      %v2470 = vmax.f32 %v2341, 0.0
      %v2471 = vpack.c.bf16 %v2345, %v2343
      %v2472 = vpack.c.bf16 %v2346, %v2344
      %v2473 = vpack.c.bf16 %v2349, %v2347
      %v2474 = vpack.c.bf16 %v2350, %v2348
      %v2475 = vpack.c.bf16 %v2353, %v2351
      %v2476 = vpack.c.bf16 %v2354, %v2352
      %v2477 = vpack.c.bf16 %v2357, %v2355
      %v2478 = vpack.c.bf16 %v2358, %v2356
      %v2479 = vpack.c.bf16 %v2361, %v2359
      %v2480 = vpack.c.bf16 %v2362, %v2360
      %v2481 = vpack.c.bf16 %v2365, %v2363
      %v2482 = vpack.c.bf16 %v2366, %v2364
      %v2483 = vpack.c.bf16 %v2369, %v2367
      %v2484 = vpack.c.bf16 %v2370, %v2368
      %v2485 = vpack.c.bf16 %v2373, %v2371
      %v2486 = vpack.c.bf16 %v2374, %v2372
      %v2487 = vpack.c.bf16 %v2377, %v2375
      %v2488 = vpack.c.bf16 %v2378, %v2376
      %v2489 = vpack.c.bf16 %v2381, %v2379
      %v2490 = vpack.c.bf16 %v2382, %v2380
      %v2491 = vpack.c.bf16 %v2385, %v2383
      %v2492 = vpack.c.bf16 %v2386, %v2384
      %v2493 = vpack.c.bf16 %v2389, %v2387
      %v2494 = vpack.c.bf16 %v2390, %v2388
      %v2495 = vpack.c.bf16 %v2393, %v2391
      %v2496 = vpack.c.bf16 %v2394, %v2392
      %v2497 = vpack.c.bf16 %v2397, %v2395
      %v2498 = vpack.c.bf16 %v2398, %v2396
      %v2499 = vpack.c.bf16 %v2401, %v2399
      %v2500 = vpack.c.bf16 %v2402, %v2400
      %v2501 = vpack.c.bf16 %v2405, %v2403
      %v2502 = vpack.c.bf16 %v2406, %v2404
      %v2503 = vpack.c.bf16 %v2409, %v2407
      %v2504 = vpack.c.bf16 %v2410, %v2408
      %v2505 = vpack.c.bf16 %v2413, %v2411
      %v2506 = vpack.c.bf16 %v2414, %v2412
      %v2507 = vpack.c.bf16 %v2417, %v2415
      %v2508 = vpack.c.bf16 %v2418, %v2416
      %v2509 = vpack.c.bf16 %v2421, %v2419
      %v2510 = vpack.c.bf16 %v2422, %v2420
      %v2511 = vpack.c.bf16 %v2425, %v2423
      %v2512 = vpack.c.bf16 %v2426, %v2424
      %v2513 = vpack.c.bf16 %v2429, %v2427
      %v2514 = vpack.c.bf16 %v2430, %v2428
      %v2515 = vpack.c.bf16 %v2433, %v2431
      %v2516 = vpack.c.bf16 %v2434, %v2432
      %v2517 = vpack.c.bf16 %v2437, %v2435
      %v2518 = vpack.c.bf16 %v2438, %v2436
      %v2519 = vpack.c.bf16 %v2441, %v2439
      %v2520 = vpack.c.bf16 %v2442, %v2440
      %v2521 = vpack.c.bf16 %v2445, %v2443
      %v2522 = vpack.c.bf16 %v2446, %v2444
      %v2523 = vpack.c.bf16 %v2449, %v2447
      %v2524 = vpack.c.bf16 %v2450, %v2448
      %v2525 = vpack.c.bf16 %v2453, %v2451
      %v2526 = vpack.c.bf16 %v2454, %v2452
      %v2527 = vpack.c.bf16 %v2457, %v2455
      %v2528 = vpack.c.bf16 %v2458, %v2456
      %v2529 = vpack.c.bf16 %v2461, %v2459
      %v2530 = vpack.c.bf16 %v2462, %v2460
      %v2531 = vpack.c.bf16 %v2465, %v2463
      %v2532 = vpack.c.bf16 %v2466, %v2464
      %v2533 = vpack.c.bf16 %v2469, %v2467
      %v2534 = vpack.c.bf16 %v2470, %v2468
      %v2535 = vld [vmem:[%s5] sm:$0xff]
      %v2536 = vld [vmem:[%s5 + $0x8] sm:$0xff]
      %v2537 = vld [vmem:[%s5 + $0x10] sm:$0xff]
      %v2538 = vld [vmem:[%s5 + $0x18] sm:$0xff]
      %v2539 = vld [vmem:[%s5 + $0x20] sm:$0xff]
      %v2540 = vld [vmem:[%s5 + $0x28] sm:$0xff]
      %v2541 = vld [vmem:[%s5 + $0x30] sm:$0xff]
      %v2542 = vld [vmem:[%s5 + $0x38] sm:$0xff]
      %v2543 = vld [vmem:[%s5 + $0x40] sm:$0xff]
      %v2544 = vld [vmem:[%s5 + $0x48] sm:$0xff]
      %v2545 = vld [vmem:[%s5 + $0x50] sm:$0xff]
      %v2546 = vld [vmem:[%s5 + $0x58] sm:$0xff]
      %v2547 = vld [vmem:[%s5 + $0x60] sm:$0xff]
      %v2548 = vld [vmem:[%s5 + $0x68] sm:$0xff]
      %v2549 = vld [vmem:[%s5 + $0x70] sm:$0xff]
      %v2550 = vld [vmem:[%s5 + $0x78] sm:$0xff]
      %v2551 = vld [vmem:[%s5 + $0x80] sm:$0xff]
      %v2552 = vld [vmem:[%s5 + $0x88] sm:$0xff]
      %v2553 = vld [vmem:[%s5 + $0x90] sm:$0xff]
      %v2554 = vld [vmem:[%s5 + $0x98] sm:$0xff]
      %v2555 = vld [vmem:[%s5 + $0xa0] sm:$0xff]
      %v2556 = vld [vmem:[%s5 + $0xa8] sm:$0xff]
      %v2557 = vld [vmem:[%s5 + $0xb0] sm:$0xff]
      %v2558 = vld [vmem:[%s5 + $0xb8] sm:$0xff]
      %v2559 = vld [vmem:[%s5 + $0xc0] sm:$0xff]
      %v2560 = vld [vmem:[%s5 + $0xc8] sm:$0xff]
      %v2561 = vld [vmem:[%s5 + $0xd0] sm:$0xff]
      %v2562 = vld [vmem:[%s5 + $0xd8] sm:$0xff]
      %v2563 = vld [vmem:[%s5 + $0xe0] sm:$0xff]
      %v2564 = vld [vmem:[%s5 + $0xe8] sm:$0xff]
      %v2565 = vld [vmem:[%s5 + $0xf0] sm:$0xff]
      %v2566 = vld [vmem:[%s5 + $0xf8] sm:$0xff]
      %v2567 = vld [vmem:[%s6] sm:$0x3]
      %v2569 = vlaneseq
      %v2570 = vshrl.u32 %v2569, 7
      %v2571 = vsub.s32 0, %v2570
      %v2572 = vrot.slane %v2567, %v2571
      %v2573 = vlaneseq
      %v2574 = vshrl.u32 %v2573, 7
      %v2575 = vsub.s32 1, %v2574
      %v2576 = vrot.slane %v2567, %v2575
      %v2611 = vunpack.c.l.b16 %v2535
      %v2612 = vunpack.c.h.b16 %v2535
      %v2613 = vunpack.c.l.b16 %v2536
      %v2614 = vunpack.c.h.b16 %v2536
      %v2615 = vunpack.c.l.b16 %v2537
      %v2616 = vunpack.c.h.b16 %v2537
      %v2617 = vunpack.c.l.b16 %v2538
      %v2618 = vunpack.c.h.b16 %v2538
      %v2619 = vunpack.c.l.b16 %v2539
      %v2620 = vunpack.c.h.b16 %v2539
      %v2621 = vunpack.c.l.b16 %v2540
      %v2622 = vunpack.c.h.b16 %v2540
      %v2623 = vunpack.c.l.b16 %v2541
      %v2624 = vunpack.c.h.b16 %v2541
      %v2625 = vunpack.c.l.b16 %v2542
      %v2626 = vunpack.c.h.b16 %v2542
      %v2627 = vunpack.c.l.b16 %v2543
      %v2628 = vunpack.c.h.b16 %v2543
      %v2629 = vunpack.c.l.b16 %v2544
      %v2630 = vunpack.c.h.b16 %v2544
      %v2631 = vunpack.c.l.b16 %v2545
      %v2632 = vunpack.c.h.b16 %v2545
      %v2633 = vunpack.c.l.b16 %v2546
      %v2634 = vunpack.c.h.b16 %v2546
      %v2635 = vunpack.c.l.b16 %v2547
      %v2636 = vunpack.c.h.b16 %v2547
      %v2637 = vunpack.c.l.b16 %v2548
      %v2638 = vunpack.c.h.b16 %v2548
      %v2639 = vunpack.c.l.b16 %v2549
      %v2640 = vunpack.c.h.b16 %v2549
      %v2641 = vunpack.c.l.b16 %v2550
      %v2642 = vunpack.c.h.b16 %v2550
      %v2643 = vunpack.c.l.b16 %v2551
      %v2644 = vunpack.c.h.b16 %v2551
      %v2645 = vunpack.c.l.b16 %v2552
      %v2646 = vunpack.c.h.b16 %v2552
      %v2647 = vunpack.c.l.b16 %v2553
      %v2648 = vunpack.c.h.b16 %v2553
      %v2649 = vunpack.c.l.b16 %v2554
      %v2650 = vunpack.c.h.b16 %v2554
      %v2651 = vunpack.c.l.b16 %v2555
      %v2652 = vunpack.c.h.b16 %v2555
      %v2653 = vunpack.c.l.b16 %v2556
      %v2654 = vunpack.c.h.b16 %v2556
      %v2655 = vunpack.c.l.b16 %v2557
      %v2656 = vunpack.c.h.b16 %v2557
      %v2657 = vunpack.c.l.b16 %v2558
      %v2658 = vunpack.c.h.b16 %v2558
      %v2659 = vunpack.c.l.b16 %v2559
      %v2660 = vunpack.c.h.b16 %v2559
      %v2661 = vunpack.c.l.b16 %v2560
      %v2662 = vunpack.c.h.b16 %v2560
      %v2663 = vunpack.c.l.b16 %v2561
      %v2664 = vunpack.c.h.b16 %v2561
      %v2665 = vunpack.c.l.b16 %v2562
      %v2666 = vunpack.c.h.b16 %v2562
      %v2667 = vunpack.c.l.b16 %v2563
      %v2668 = vunpack.c.h.b16 %v2563
      %v2669 = vunpack.c.l.b16 %v2564
      %v2670 = vunpack.c.h.b16 %v2564
      %v2671 = vunpack.c.l.b16 %v2565
      %v2672 = vunpack.c.h.b16 %v2565
      %v2673 = vunpack.c.l.b16 %v2566
      %v2674 = vunpack.c.h.b16 %v2566
      %v2675 = vpack.c.b16 %v2613, %v2611
      %v2676 = vpack.c.b16 %v2614, %v2612
      %v2677 = vpack.c.b16 %v2617, %v2615
      %v2678 = vpack.c.b16 %v2618, %v2616
      %v2679 = vpack.c.b16 %v2621, %v2619
      %v2680 = vpack.c.b16 %v2622, %v2620
      %v2681 = vpack.c.b16 %v2625, %v2623
      %v2682 = vpack.c.b16 %v2626, %v2624
      %v2683 = vpack.c.b16 %v2629, %v2627
      %v2684 = vpack.c.b16 %v2630, %v2628
      %v2685 = vpack.c.b16 %v2633, %v2631
      %v2686 = vpack.c.b16 %v2634, %v2632
      %v2687 = vpack.c.b16 %v2637, %v2635
      %v2688 = vpack.c.b16 %v2638, %v2636
      %v2689 = vpack.c.b16 %v2641, %v2639
      %v2690 = vpack.c.b16 %v2642, %v2640
      %v2691 = vpack.c.b16 %v2645, %v2643
      %v2692 = vpack.c.b16 %v2646, %v2644
      %v2693 = vpack.c.b16 %v2649, %v2647
      %v2694 = vpack.c.b16 %v2650, %v2648
      %v2695 = vpack.c.b16 %v2653, %v2651
      %v2696 = vpack.c.b16 %v2654, %v2652
      %v2697 = vpack.c.b16 %v2657, %v2655
      %v2698 = vpack.c.b16 %v2658, %v2656
      %v2699 = vpack.c.b16 %v2661, %v2659
      %v2700 = vpack.c.b16 %v2662, %v2660
      %v2701 = vpack.c.b16 %v2665, %v2663
      %v2702 = vpack.c.b16 %v2666, %v2664
      %v2703 = vpack.c.b16 %v2669, %v2667
      %v2704 = vpack.c.b16 %v2670, %v2668
      %v2705 = vpack.c.b16 %v2673, %v2671
      %v2706 = vpack.c.b16 %v2674, %v2672
      %2739 = vmatprep.subr.bf16.mxu0 %v2690
      %2740 = vmatpush1.bf16.msra.mxu0 %v2689
      %2741 = vmatprep.subr.bf16.mxu0 %v2688
      %2742 = vmatpush1.bf16.msra.mxu0 %v2687
      %2743 = vmatprep.subr.bf16.mxu0 %v2686
      %2744 = vmatpush1.bf16.msra.mxu0 %v2685
      %2745 = vmatprep.subr.bf16.mxu0 %v2684
      %2746 = vmatpush1.bf16.msra.mxu0 %v2683
      %2747 = vmatprep.subr.bf16.mxu0 %v2682
      %2748 = vmatpush1.bf16.msra.mxu0 %v2681
      %2749 = vmatprep.subr.bf16.mxu0 %v2680
      %2750 = vmatpush1.bf16.msra.mxu0 %v2679
      %2751 = vmatprep.subr.bf16.mxu0 %v2678
      %2752 = vmatpush1.bf16.msra.mxu0 %v2677
      %2753 = vmatprep.subr.bf16.mxu0 %v2676
      %2754 = vmatpush1.bf16.msra.mxu0 %v2675
      %2755 = vmatprep.subr.bf16.mxu0 %v2706
      %2756 = vmatpush2.bf16.msra.mxu0 %v2705
      %2757 = vmatprep.subr.bf16.mxu0 %v2704
      %2758 = vmatpush2.bf16.msra.mxu0 %v2703
      %2759 = vmatprep.subr.bf16.mxu0 %v2702
      %2760 = vmatpush2.bf16.msra.mxu0 %v2701
      %2761 = vmatprep.subr.bf16.mxu0 %v2700
      %2762 = vmatpush2.bf16.msra.mxu0 %v2699
      %2763 = vmatprep.subr.bf16.mxu0 %v2698
      %2764 = vmatpush2.bf16.msra.mxu0 %v2697
      %2765 = vmatprep.subr.bf16.mxu0 %v2696
      %2766 = vmatpush2.bf16.msra.mxu0 %v2695
      %2767 = vmatprep.subr.bf16.mxu0 %v2694
      %2768 = vmatpush2.bf16.msra.mxu0 %v2693
      %2769 = vmatprep.subr.bf16.mxu0 %v2692
      %2770 = vmatpush2.bf16.msra.mxu0 %v2691
      %2771 = vmatprep.mubr.bf16.mxu0 %v2472
      %2772 = vmatmul.mubr.bf16.gmra.mxu0 %v2471
      %v2773 = vpop.f32.mrf.mxu0
      %v2774 = vadd.f32 %v2572, %v2773
      %v2775 = vpop.f32.mrf.mxu0
      %v2776 = vadd.f32 %v2576, %v2775
      %v2777 = vpop.f32.mrf.mxu0
      %v2778 = vadd.f32 %v2572, %v2777
      %v2779 = vpop.f32.mrf.mxu0
      %v2780 = vadd.f32 %v2576, %v2779
      %2781 = vmatprep.mubr.bf16.mxu0 %v2474
      %2782 = vmatmul.mubr.bf16.gmra.mxu0 %v2473
      %v2783 = vpop.f32.mrf.mxu0
      %v2784 = vadd.f32 %v2572, %v2783
      %v2785 = vpop.f32.mrf.mxu0
      %v2786 = vadd.f32 %v2576, %v2785
      %v2787 = vpop.f32.mrf.mxu0
      %v2788 = vadd.f32 %v2572, %v2787
      %v2789 = vpop.f32.mrf.mxu0
      %v2790 = vadd.f32 %v2576, %v2789
      %2791 = vmatprep.mubr.bf16.mxu0 %v2476
      %2792 = vmatmul.mubr.bf16.gmra.mxu0 %v2475
      %v2793 = vpop.f32.mrf.mxu0
      %v2794 = vadd.f32 %v2572, %v2793
      %v2795 = vpop.f32.mrf.mxu0
      %v2796 = vadd.f32 %v2576, %v2795
      %v2797 = vpop.f32.mrf.mxu0
      %v2798 = vadd.f32 %v2572, %v2797
      %v2799 = vpop.f32.mrf.mxu0
      %v2800 = vadd.f32 %v2576, %v2799
      %2801 = vmatprep.mubr.bf16.mxu0 %v2478
      %2802 = vmatmul.mubr.bf16.gmra.mxu0 %v2477
      %v2803 = vpop.f32.mrf.mxu0
      %v2804 = vadd.f32 %v2572, %v2803
      %v2805 = vpop.f32.mrf.mxu0
      %v2806 = vadd.f32 %v2576, %v2805
      %v2807 = vpop.f32.mrf.mxu0
      %v2808 = vadd.f32 %v2572, %v2807
      %v2809 = vpop.f32.mrf.mxu0
      %v2810 = vadd.f32 %v2576, %v2809
      %2811 = vmatprep.mubr.bf16.mxu0 %v2480
      %2812 = vmatmul.mubr.bf16.gmra.mxu0 %v2479
      %v2813 = vpop.f32.mrf.mxu0
      %v2814 = vadd.f32 %v2572, %v2813
      %v2815 = vpop.f32.mrf.mxu0
      %v2816 = vadd.f32 %v2576, %v2815
      %v2817 = vpop.f32.mrf.mxu0
      %v2818 = vadd.f32 %v2572, %v2817
      %v2819 = vpop.f32.mrf.mxu0
      %v2820 = vadd.f32 %v2576, %v2819
      %2821 = vmatprep.mubr.bf16.mxu0 %v2482
      %2822 = vmatmul.mubr.bf16.gmra.mxu0 %v2481
      %v2823 = vpop.f32.mrf.mxu0
      %v2824 = vadd.f32 %v2572, %v2823
      %v2825 = vpop.f32.mrf.mxu0
      %v2826 = vadd.f32 %v2576, %v2825
      %v2827 = vpop.f32.mrf.mxu0
      %v2828 = vadd.f32 %v2572, %v2827
      %v2829 = vpop.f32.mrf.mxu0
      %v2830 = vadd.f32 %v2576, %v2829
      %2831 = vmatprep.mubr.bf16.mxu0 %v2484
      %2832 = vmatmul.mubr.bf16.gmra.mxu0 %v2483
      %v2833 = vpop.f32.mrf.mxu0
      %v2834 = vadd.f32 %v2572, %v2833
      %v2835 = vpop.f32.mrf.mxu0
      %v2836 = vadd.f32 %v2576, %v2835
      %v2837 = vpop.f32.mrf.mxu0
      %v2838 = vadd.f32 %v2572, %v2837
      %v2839 = vpop.f32.mrf.mxu0
      %v2840 = vadd.f32 %v2576, %v2839
      %2841 = vmatprep.mubr.bf16.mxu0 %v2486
      %2842 = vmatmul.mubr.bf16.gmra.mxu0 %v2485
      %v2843 = vpop.f32.mrf.mxu0
      %v2844 = vadd.f32 %v2572, %v2843
      %v2845 = vpop.f32.mrf.mxu0
      %v2846 = vadd.f32 %v2576, %v2845
      %v2847 = vpop.f32.mrf.mxu0
      %v2848 = vadd.f32 %v2572, %v2847
      %v2849 = vpop.f32.mrf.mxu0
      %v2850 = vadd.f32 %v2576, %v2849
      %2851 = vmatprep.mubr.bf16.mxu0 %v2488
      %2852 = vmatmul.mubr.bf16.gmra.mxu0 %v2487
      %v2853 = vpop.f32.mrf.mxu0
      %v2854 = vadd.f32 %v2572, %v2853
      %v2855 = vpop.f32.mrf.mxu0
      %v2856 = vadd.f32 %v2576, %v2855
      %v2857 = vpop.f32.mrf.mxu0
      %v2858 = vadd.f32 %v2572, %v2857
      %v2859 = vpop.f32.mrf.mxu0
      %v2860 = vadd.f32 %v2576, %v2859
      %2861 = vmatprep.mubr.bf16.mxu0 %v2490
      %2862 = vmatmul.mubr.bf16.gmra.mxu0 %v2489
      %v2863 = vpop.f32.mrf.mxu0
      %v2864 = vadd.f32 %v2572, %v2863
      %v2865 = vpop.f32.mrf.mxu0
      %v2866 = vadd.f32 %v2576, %v2865
      %v2867 = vpop.f32.mrf.mxu0
      %v2868 = vadd.f32 %v2572, %v2867
      %v2869 = vpop.f32.mrf.mxu0
      %v2870 = vadd.f32 %v2576, %v2869
      %2871 = vmatprep.mubr.bf16.mxu0 %v2492
      %2872 = vmatmul.mubr.bf16.gmra.mxu0 %v2491
      %v2873 = vpop.f32.mrf.mxu0
      %v2874 = vadd.f32 %v2572, %v2873
      %v2875 = vpop.f32.mrf.mxu0
      %v2876 = vadd.f32 %v2576, %v2875
      %v2877 = vpop.f32.mrf.mxu0
      %v2878 = vadd.f32 %v2572, %v2877
      %v2879 = vpop.f32.mrf.mxu0
      %v2880 = vadd.f32 %v2576, %v2879
      %2881 = vmatprep.mubr.bf16.mxu0 %v2494
      %2882 = vmatmul.mubr.bf16.gmra.mxu0 %v2493
      %v2883 = vpop.f32.mrf.mxu0
      %v2884 = vadd.f32 %v2572, %v2883
      %v2885 = vpop.f32.mrf.mxu0
      %v2886 = vadd.f32 %v2576, %v2885
      %v2887 = vpop.f32.mrf.mxu0
      %v2888 = vadd.f32 %v2572, %v2887
      %v2889 = vpop.f32.mrf.mxu0
      %v2890 = vadd.f32 %v2576, %v2889
      %2891 = vmatprep.mubr.bf16.mxu0 %v2496
      %2892 = vmatmul.mubr.bf16.gmra.mxu0 %v2495
      %v2893 = vpop.f32.mrf.mxu0
      %v2894 = vadd.f32 %v2572, %v2893
      %v2895 = vpop.f32.mrf.mxu0
      %v2896 = vadd.f32 %v2576, %v2895
      %v2897 = vpop.f32.mrf.mxu0
      %v2898 = vadd.f32 %v2572, %v2897
      %v2899 = vpop.f32.mrf.mxu0
      %v2900 = vadd.f32 %v2576, %v2899
      %2901 = vmatprep.mubr.bf16.mxu0 %v2498
      %2902 = vmatmul.mubr.bf16.gmra.mxu0 %v2497
      %v2903 = vpop.f32.mrf.mxu0
      %v2904 = vadd.f32 %v2572, %v2903
      %v2905 = vpop.f32.mrf.mxu0
      %v2906 = vadd.f32 %v2576, %v2905
      %v2907 = vpop.f32.mrf.mxu0
      %v2908 = vadd.f32 %v2572, %v2907
      %v2909 = vpop.f32.mrf.mxu0
      %v2910 = vadd.f32 %v2576, %v2909
      %2911 = vmatprep.mubr.bf16.mxu0 %v2500
      %2912 = vmatmul.mubr.bf16.gmra.mxu0 %v2499
      %v2913 = vpop.f32.mrf.mxu0
      %v2914 = vadd.f32 %v2572, %v2913
      %v2915 = vpop.f32.mrf.mxu0
      %v2916 = vadd.f32 %v2576, %v2915
      %v2917 = vpop.f32.mrf.mxu0
      %v2918 = vadd.f32 %v2572, %v2917
      %v2919 = vpop.f32.mrf.mxu0
      %v2920 = vadd.f32 %v2576, %v2919
      %2921 = vmatprep.mubr.bf16.mxu0 %v2502
      %2922 = vmatmul.mubr.bf16.gmra.mxu0 %v2501
      %v2923 = vpop.f32.mrf.mxu0
      %v2924 = vadd.f32 %v2572, %v2923
      %v2925 = vpop.f32.mrf.mxu0
      %v2926 = vadd.f32 %v2576, %v2925
      %v2927 = vpop.f32.mrf.mxu0
      %v2928 = vadd.f32 %v2572, %v2927
      %v2929 = vpop.f32.mrf.mxu0
      %v2930 = vadd.f32 %v2576, %v2929
      %2931 = vmatprep.mubr.bf16.mxu0 %v2504
      %2932 = vmatmul.mubr.bf16.gmra.mxu0 %v2503
      %v2933 = vpop.f32.mrf.mxu0
      %v2934 = vadd.f32 %v2572, %v2933
      %v2935 = vpop.f32.mrf.mxu0
      %v2936 = vadd.f32 %v2576, %v2935
      %v2937 = vpop.f32.mrf.mxu0
      %v2938 = vadd.f32 %v2572, %v2937
      %v2939 = vpop.f32.mrf.mxu0
      %v2940 = vadd.f32 %v2576, %v2939
      %2941 = vmatprep.mubr.bf16.mxu0 %v2506
      %2942 = vmatmul.mubr.bf16.gmra.mxu0 %v2505
      %v2943 = vpop.f32.mrf.mxu0
      %v2944 = vadd.f32 %v2572, %v2943
      %v2945 = vpop.f32.mrf.mxu0
      %v2946 = vadd.f32 %v2576, %v2945
      %v2947 = vpop.f32.mrf.mxu0
      %v2948 = vadd.f32 %v2572, %v2947
      %v2949 = vpop.f32.mrf.mxu0
      %v2950 = vadd.f32 %v2576, %v2949
      %2951 = vmatprep.mubr.bf16.mxu0 %v2508
      %2952 = vmatmul.mubr.bf16.gmra.mxu0 %v2507
      %v2953 = vpop.f32.mrf.mxu0
      %v2954 = vadd.f32 %v2572, %v2953
      %v2955 = vpop.f32.mrf.mxu0
      %v2956 = vadd.f32 %v2576, %v2955
      %v2957 = vpop.f32.mrf.mxu0
      %v2958 = vadd.f32 %v2572, %v2957
      %v2959 = vpop.f32.mrf.mxu0
      %v2960 = vadd.f32 %v2576, %v2959
      %2961 = vmatprep.mubr.bf16.mxu0 %v2510
      %2962 = vmatmul.mubr.bf16.gmra.mxu0 %v2509
      %v2963 = vpop.f32.mrf.mxu0
      %v2964 = vadd.f32 %v2572, %v2963
      %v2965 = vpop.f32.mrf.mxu0
      %v2966 = vadd.f32 %v2576, %v2965
      %v2967 = vpop.f32.mrf.mxu0
      %v2968 = vadd.f32 %v2572, %v2967
      %v2969 = vpop.f32.mrf.mxu0
      %v2970 = vadd.f32 %v2576, %v2969
      %2971 = vmatprep.mubr.bf16.mxu0 %v2512
      %2972 = vmatmul.mubr.bf16.gmra.mxu0 %v2511
      %v2973 = vpop.f32.mrf.mxu0
      %v2974 = vadd.f32 %v2572, %v2973
      %v2975 = vpop.f32.mrf.mxu0
      %v2976 = vadd.f32 %v2576, %v2975
      %v2977 = vpop.f32.mrf.mxu0
      %v2978 = vadd.f32 %v2572, %v2977
      %v2979 = vpop.f32.mrf.mxu0
      %v2980 = vadd.f32 %v2576, %v2979
      %2981 = vmatprep.mubr.bf16.mxu0 %v2514
      %2982 = vmatmul.mubr.bf16.gmra.mxu0 %v2513
      %v2983 = vpop.f32.mrf.mxu0
      %v2984 = vadd.f32 %v2572, %v2983
      %v2985 = vpop.f32.mrf.mxu0
      %v2986 = vadd.f32 %v2576, %v2985
      %v2987 = vpop.f32.mrf.mxu0
      %v2988 = vadd.f32 %v2572, %v2987
      %v2989 = vpop.f32.mrf.mxu0
      %v2990 = vadd.f32 %v2576, %v2989
      %2991 = vmatprep.mubr.bf16.mxu0 %v2516
      %2992 = vmatmul.mubr.bf16.gmra.mxu0 %v2515
      %v2993 = vpop.f32.mrf.mxu0
      %v2994 = vadd.f32 %v2572, %v2993
      %v2995 = vpop.f32.mrf.mxu0
      %v2996 = vadd.f32 %v2576, %v2995
      %v2997 = vpop.f32.mrf.mxu0
      %v2998 = vadd.f32 %v2572, %v2997
      %v2999 = vpop.f32.mrf.mxu0
      %v3000 = vadd.f32 %v2576, %v2999
      %3001 = vmatprep.mubr.bf16.mxu0 %v2518
      %3002 = vmatmul.mubr.bf16.gmra.mxu0 %v2517
      %v3003 = vpop.f32.mrf.mxu0
      %v3004 = vadd.f32 %v2572, %v3003
      %v3005 = vpop.f32.mrf.mxu0
      %v3006 = vadd.f32 %v2576, %v3005
      %v3007 = vpop.f32.mrf.mxu0
      %v3008 = vadd.f32 %v2572, %v3007
      %v3009 = vpop.f32.mrf.mxu0
      %v3010 = vadd.f32 %v2576, %v3009
      %3011 = vmatprep.mubr.bf16.mxu0 %v2520
      %3012 = vmatmul.mubr.bf16.gmra.mxu0 %v2519
      %v3013 = vpop.f32.mrf.mxu0
      %v3014 = vadd.f32 %v2572, %v3013
      %v3015 = vpop.f32.mrf.mxu0
      %v3016 = vadd.f32 %v2576, %v3015
      %v3017 = vpop.f32.mrf.mxu0
      %v3018 = vadd.f32 %v2572, %v3017
      %v3019 = vpop.f32.mrf.mxu0
      %v3020 = vadd.f32 %v2576, %v3019
      %3021 = vmatprep.mubr.bf16.mxu0 %v2522
      %3022 = vmatmul.mubr.bf16.gmra.mxu0 %v2521
      %v3023 = vpop.f32.mrf.mxu0
      %v3024 = vadd.f32 %v2572, %v3023
      %v3025 = vpop.f32.mrf.mxu0
      %v3026 = vadd.f32 %v2576, %v3025
      %v3027 = vpop.f32.mrf.mxu0
      %v3028 = vadd.f32 %v2572, %v3027
      %v3029 = vpop.f32.mrf.mxu0
      %v3030 = vadd.f32 %v2576, %v3029
      %3031 = vmatprep.mubr.bf16.mxu0 %v2524
      %3032 = vmatmul.mubr.bf16.gmra.mxu0 %v2523
      %v3033 = vpop.f32.mrf.mxu0
      %v3034 = vadd.f32 %v2572, %v3033
      %v3035 = vpop.f32.mrf.mxu0
      %v3036 = vadd.f32 %v2576, %v3035
      %v3037 = vpop.f32.mrf.mxu0
      %v3038 = vadd.f32 %v2572, %v3037
      %v3039 = vpop.f32.mrf.mxu0
      %v3040 = vadd.f32 %v2576, %v3039
      %3041 = vmatprep.mubr.bf16.mxu0 %v2526
      %3042 = vmatmul.mubr.bf16.gmra.mxu0 %v2525
      %v3043 = vpop.f32.mrf.mxu0
      %v3044 = vadd.f32 %v2572, %v3043
      %v3045 = vpop.f32.mrf.mxu0
      %v3046 = vadd.f32 %v2576, %v3045
      %v3047 = vpop.f32.mrf.mxu0
      %v3048 = vadd.f32 %v2572, %v3047
      %v3049 = vpop.f32.mrf.mxu0
      %v3050 = vadd.f32 %v2576, %v3049
      %3051 = vmatprep.mubr.bf16.mxu0 %v2528
      %3052 = vmatmul.mubr.bf16.gmra.mxu0 %v2527
      %v3053 = vpop.f32.mrf.mxu0
      %v3054 = vadd.f32 %v2572, %v3053
      %v3055 = vpop.f32.mrf.mxu0
      %v3056 = vadd.f32 %v2576, %v3055
      %v3057 = vpop.f32.mrf.mxu0
      %v3058 = vadd.f32 %v2572, %v3057
      %v3059 = vpop.f32.mrf.mxu0
      %v3060 = vadd.f32 %v2576, %v3059
      %3061 = vmatprep.mubr.bf16.mxu0 %v2530
      %3062 = vmatmul.mubr.bf16.gmra.mxu0 %v2529
      %v3063 = vpop.f32.mrf.mxu0
      %v3064 = vadd.f32 %v2572, %v3063
      %v3065 = vpop.f32.mrf.mxu0
      %v3066 = vadd.f32 %v2576, %v3065
      %v3067 = vpop.f32.mrf.mxu0
      %v3068 = vadd.f32 %v2572, %v3067
      %v3069 = vpop.f32.mrf.mxu0
      %v3070 = vadd.f32 %v2576, %v3069
      %3071 = vmatprep.mubr.bf16.mxu0 %v2532
      %3072 = vmatmul.mubr.bf16.gmra.mxu0 %v2531
      %v3073 = vpop.f32.mrf.mxu0
      %v3074 = vadd.f32 %v2572, %v3073
      %v3075 = vpop.f32.mrf.mxu0
      %v3076 = vadd.f32 %v2576, %v3075
      %v3077 = vpop.f32.mrf.mxu0
      %v3078 = vadd.f32 %v2572, %v3077
      %v3079 = vpop.f32.mrf.mxu0
      %v3080 = vadd.f32 %v2576, %v3079
      %3081 = vmatprep.mubr.bf16.mxu0 %v2534
      %3082 = vmatmul.mubr.bf16.gmra.mxu0 %v2533
      %v3083 = vpop.f32.mrf.mxu0
      %v3084 = vadd.f32 %v2572, %v3083
      %v3085 = vpop.f32.mrf.mxu0
      %v3086 = vadd.f32 %v2576, %v3085
      %v3087 = vpop.f32.mrf.mxu0
      %v3088 = vadd.f32 %v2572, %v3087
      %v3089 = vpop.f32.mrf.mxu0
      %v3090 = vadd.f32 %v2576, %v3089
      %3091 = vdwg.mxu0
      %v3092 = vmax.f32 %v2774, 0.0
      %v3093 = vmax.f32 %v2776, 0.0
      %v3094 = vmax.f32 %v2778, 0.0
      %v3095 = vmax.f32 %v2780, 0.0
      %v3096 = vmax.f32 %v2784, 0.0
      %v3097 = vmax.f32 %v2786, 0.0
      %v3098 = vmax.f32 %v2788, 0.0
      %v3099 = vmax.f32 %v2790, 0.0
      %v3100 = vmax.f32 %v2794, 0.0
      %v3101 = vmax.f32 %v2796, 0.0
      %v3102 = vmax.f32 %v2798, 0.0
      %v3103 = vmax.f32 %v2800, 0.0
      %v3104 = vmax.f32 %v2804, 0.0
      %v3105 = vmax.f32 %v2806, 0.0
      %v3106 = vmax.f32 %v2808, 0.0
      %v3107 = vmax.f32 %v2810, 0.0
      %v3108 = vmax.f32 %v2814, 0.0
      %v3109 = vmax.f32 %v2816, 0.0
      %v3110 = vmax.f32 %v2818, 0.0
      %v3111 = vmax.f32 %v2820, 0.0
      %v3112 = vmax.f32 %v2824, 0.0
      %v3113 = vmax.f32 %v2826, 0.0
      %v3114 = vmax.f32 %v2828, 0.0
      %v3115 = vmax.f32 %v2830, 0.0
      %v3116 = vmax.f32 %v2834, 0.0
      %v3117 = vmax.f32 %v2836, 0.0
      %v3118 = vmax.f32 %v2838, 0.0
      %v3119 = vmax.f32 %v2840, 0.0
      %v3120 = vmax.f32 %v2844, 0.0
      %v3121 = vmax.f32 %v2846, 0.0
      %v3122 = vmax.f32 %v2848, 0.0
      %v3123 = vmax.f32 %v2850, 0.0
      %v3124 = vmax.f32 %v2854, 0.0
      %v3125 = vmax.f32 %v2856, 0.0
      %v3126 = vmax.f32 %v2858, 0.0
      %v3127 = vmax.f32 %v2860, 0.0
      %v3128 = vmax.f32 %v2864, 0.0
      %v3129 = vmax.f32 %v2866, 0.0
      %v3130 = vmax.f32 %v2868, 0.0
      %v3131 = vmax.f32 %v2870, 0.0
      %v3132 = vmax.f32 %v2874, 0.0
      %v3133 = vmax.f32 %v2876, 0.0
      %v3134 = vmax.f32 %v2878, 0.0
      %v3135 = vmax.f32 %v2880, 0.0
      %v3136 = vmax.f32 %v2884, 0.0
      %v3137 = vmax.f32 %v2886, 0.0
      %v3138 = vmax.f32 %v2888, 0.0
      %v3139 = vmax.f32 %v2890, 0.0
      %v3140 = vmax.f32 %v2894, 0.0
      %v3141 = vmax.f32 %v2896, 0.0
      %v3142 = vmax.f32 %v2898, 0.0
      %v3143 = vmax.f32 %v2900, 0.0
      %v3144 = vmax.f32 %v2904, 0.0
      %v3145 = vmax.f32 %v2906, 0.0
      %v3146 = vmax.f32 %v2908, 0.0
      %v3147 = vmax.f32 %v2910, 0.0
      %v3148 = vmax.f32 %v2914, 0.0
      %v3149 = vmax.f32 %v2916, 0.0
      %v3150 = vmax.f32 %v2918, 0.0
      %v3151 = vmax.f32 %v2920, 0.0
      %v3152 = vmax.f32 %v2924, 0.0
      %v3153 = vmax.f32 %v2926, 0.0
      %v3154 = vmax.f32 %v2928, 0.0
      %v3155 = vmax.f32 %v2930, 0.0
      %v3156 = vmax.f32 %v2934, 0.0
      %v3157 = vmax.f32 %v2936, 0.0
      %v3158 = vmax.f32 %v2938, 0.0
      %v3159 = vmax.f32 %v2940, 0.0
      %v3160 = vmax.f32 %v2944, 0.0
      %v3161 = vmax.f32 %v2946, 0.0
      %v3162 = vmax.f32 %v2948, 0.0
      %v3163 = vmax.f32 %v2950, 0.0
      %v3164 = vmax.f32 %v2954, 0.0
      %v3165 = vmax.f32 %v2956, 0.0
      %v3166 = vmax.f32 %v2958, 0.0
      %v3167 = vmax.f32 %v2960, 0.0
      %v3168 = vmax.f32 %v2964, 0.0
      %v3169 = vmax.f32 %v2966, 0.0
      %v3170 = vmax.f32 %v2968, 0.0
      %v3171 = vmax.f32 %v2970, 0.0
      %v3172 = vmax.f32 %v2974, 0.0
      %v3173 = vmax.f32 %v2976, 0.0
      %v3174 = vmax.f32 %v2978, 0.0
      %v3175 = vmax.f32 %v2980, 0.0
      %v3176 = vmax.f32 %v2984, 0.0
      %v3177 = vmax.f32 %v2986, 0.0
      %v3178 = vmax.f32 %v2988, 0.0
      %v3179 = vmax.f32 %v2990, 0.0
      %v3180 = vmax.f32 %v2994, 0.0
      %v3181 = vmax.f32 %v2996, 0.0
      %v3182 = vmax.f32 %v2998, 0.0
      %v3183 = vmax.f32 %v3000, 0.0
      %v3184 = vmax.f32 %v3004, 0.0
      %v3185 = vmax.f32 %v3006, 0.0
      %v3186 = vmax.f32 %v3008, 0.0
      %v3187 = vmax.f32 %v3010, 0.0
      %v3188 = vmax.f32 %v3014, 0.0
      %v3189 = vmax.f32 %v3016, 0.0
      %v3190 = vmax.f32 %v3018, 0.0
      %v3191 = vmax.f32 %v3020, 0.0
      %v3192 = vmax.f32 %v3024, 0.0
      %v3193 = vmax.f32 %v3026, 0.0
      %v3194 = vmax.f32 %v3028, 0.0
      %v3195 = vmax.f32 %v3030, 0.0
      %v3196 = vmax.f32 %v3034, 0.0
      %v3197 = vmax.f32 %v3036, 0.0
      %v3198 = vmax.f32 %v3038, 0.0
      %v3199 = vmax.f32 %v3040, 0.0
      %v3200 = vmax.f32 %v3044, 0.0
      %v3201 = vmax.f32 %v3046, 0.0
      %v3202 = vmax.f32 %v3048, 0.0
      %v3203 = vmax.f32 %v3050, 0.0
      %v3204 = vmax.f32 %v3054, 0.0
      %v3205 = vmax.f32 %v3056, 0.0
      %v3206 = vmax.f32 %v3058, 0.0
      %v3207 = vmax.f32 %v3060, 0.0
      %v3208 = vmax.f32 %v3064, 0.0
      %v3209 = vmax.f32 %v3066, 0.0
      %v3210 = vmax.f32 %v3068, 0.0
      %v3211 = vmax.f32 %v3070, 0.0
      %v3212 = vmax.f32 %v3074, 0.0
      %v3213 = vmax.f32 %v3076, 0.0
      %v3214 = vmax.f32 %v3078, 0.0
      %v3215 = vmax.f32 %v3080, 0.0
      %v3216 = vmax.f32 %v3084, 0.0
      %v3217 = vmax.f32 %v3086, 0.0
      %v3218 = vmax.f32 %v3088, 0.0
      %v3219 = vmax.f32 %v3090, 0.0
      %v3220 = vpack.c.bf16 %v3094, %v3092
      %v3221 = vpack.c.bf16 %v3095, %v3093
      %v3222 = vpack.c.bf16 %v3098, %v3096
      %v3223 = vpack.c.bf16 %v3099, %v3097
      %v3224 = vpack.c.bf16 %v3102, %v3100
      %v3225 = vpack.c.bf16 %v3103, %v3101
      %v3226 = vpack.c.bf16 %v3106, %v3104
      %v3227 = vpack.c.bf16 %v3107, %v3105
      %v3228 = vpack.c.bf16 %v3110, %v3108
      %v3229 = vpack.c.bf16 %v3111, %v3109
      %v3230 = vpack.c.bf16 %v3114, %v3112
      %v3231 = vpack.c.bf16 %v3115, %v3113
      %v3232 = vpack.c.bf16 %v3118, %v3116
      %v3233 = vpack.c.bf16 %v3119, %v3117
      %v3234 = vpack.c.bf16 %v3122, %v3120
      %v3235 = vpack.c.bf16 %v3123, %v3121
      %v3236 = vpack.c.bf16 %v3126, %v3124
      %v3237 = vpack.c.bf16 %v3127, %v3125
      %v3238 = vpack.c.bf16 %v3130, %v3128
      %v3239 = vpack.c.bf16 %v3131, %v3129
      %v3240 = vpack.c.bf16 %v3134, %v3132
      %v3241 = vpack.c.bf16 %v3135, %v3133
      %v3242 = vpack.c.bf16 %v3138, %v3136
      %v3243 = vpack.c.bf16 %v3139, %v3137
      %v3244 = vpack.c.bf16 %v3142, %v3140
      %v3245 = vpack.c.bf16 %v3143, %v3141
      %v3246 = vpack.c.bf16 %v3146, %v3144
      %v3247 = vpack.c.bf16 %v3147, %v3145
      %v3248 = vpack.c.bf16 %v3150, %v3148
      %v3249 = vpack.c.bf16 %v3151, %v3149
      %v3250 = vpack.c.bf16 %v3154, %v3152
      %v3251 = vpack.c.bf16 %v3155, %v3153
      %v3252 = vpack.c.bf16 %v3158, %v3156
      %v3253 = vpack.c.bf16 %v3159, %v3157
      %v3254 = vpack.c.bf16 %v3162, %v3160
      %v3255 = vpack.c.bf16 %v3163, %v3161
      %v3256 = vpack.c.bf16 %v3166, %v3164
      %v3257 = vpack.c.bf16 %v3167, %v3165
      %v3258 = vpack.c.bf16 %v3170, %v3168
      %v3259 = vpack.c.bf16 %v3171, %v3169
      %v3260 = vpack.c.bf16 %v3174, %v3172
      %v3261 = vpack.c.bf16 %v3175, %v3173
      %v3262 = vpack.c.bf16 %v3178, %v3176
      %v3263 = vpack.c.bf16 %v3179, %v3177
      %v3264 = vpack.c.bf16 %v3182, %v3180
      %v3265 = vpack.c.bf16 %v3183, %v3181
      %v3266 = vpack.c.bf16 %v3186, %v3184
      %v3267 = vpack.c.bf16 %v3187, %v3185
      %v3268 = vpack.c.bf16 %v3190, %v3188
      %v3269 = vpack.c.bf16 %v3191, %v3189
      %v3270 = vpack.c.bf16 %v3194, %v3192
      %v3271 = vpack.c.bf16 %v3195, %v3193
      %v3272 = vpack.c.bf16 %v3198, %v3196
      %v3273 = vpack.c.bf16 %v3199, %v3197
      %v3274 = vpack.c.bf16 %v3202, %v3200
      %v3275 = vpack.c.bf16 %v3203, %v3201
      %v3276 = vpack.c.bf16 %v3206, %v3204
      %v3277 = vpack.c.bf16 %v3207, %v3205
      %v3278 = vpack.c.bf16 %v3210, %v3208
      %v3279 = vpack.c.bf16 %v3211, %v3209
      %v3280 = vpack.c.bf16 %v3214, %v3212
      %v3281 = vpack.c.bf16 %v3215, %v3213
      %v3282 = vpack.c.bf16 %v3218, %v3216
      %v3283 = vpack.c.bf16 %v3219, %v3217
      %v3284 = vld [vmem:[%s7] sm:$0xff]
      %v3285 = vld [vmem:[%s7 + $0x8] sm:$0xff]
      %v3286 = vld [vmem:[%s7 + $0x10] sm:$0xff]
      %v3287 = vld [vmem:[%s7 + $0x18] sm:$0xff]
      %v3288 = vld [vmem:[%s7 + $0x20] sm:$0xff]
      %v3289 = vld [vmem:[%s7 + $0x28] sm:$0xff]
      %v3290 = vld [vmem:[%s7 + $0x30] sm:$0xff]
      %v3291 = vld [vmem:[%s7 + $0x38] sm:$0xff]
      %v3292 = vld [vmem:[%s7 + $0x40] sm:$0xff]
      %v3293 = vld [vmem:[%s7 + $0x48] sm:$0xff]
      %v3294 = vld [vmem:[%s7 + $0x50] sm:$0xff]
      %v3295 = vld [vmem:[%s7 + $0x58] sm:$0xff]
      %v3296 = vld [vmem:[%s7 + $0x60] sm:$0xff]
      %v3297 = vld [vmem:[%s7 + $0x68] sm:$0xff]
      %v3298 = vld [vmem:[%s7 + $0x70] sm:$0xff]
      %v3299 = vld [vmem:[%s7 + $0x78] sm:$0xff]
      %v3300 = vld [vmem:[%s7 + $0x80] sm:$0xff]
      %v3301 = vld [vmem:[%s7 + $0x88] sm:$0xff]
      %v3302 = vld [vmem:[%s7 + $0x90] sm:$0xff]
      %v3303 = vld [vmem:[%s7 + $0x98] sm:$0xff]
      %v3304 = vld [vmem:[%s7 + $0xa0] sm:$0xff]
      %v3305 = vld [vmem:[%s7 + $0xa8] sm:$0xff]
      %v3306 = vld [vmem:[%s7 + $0xb0] sm:$0xff]
      %v3307 = vld [vmem:[%s7 + $0xb8] sm:$0xff]
      %v3308 = vld [vmem:[%s7 + $0xc0] sm:$0xff]
      %v3309 = vld [vmem:[%s7 + $0xc8] sm:$0xff]
      %v3310 = vld [vmem:[%s7 + $0xd0] sm:$0xff]
      %v3311 = vld [vmem:[%s7 + $0xd8] sm:$0xff]
      %v3312 = vld [vmem:[%s7 + $0xe0] sm:$0xff]
      %v3313 = vld [vmem:[%s7 + $0xe8] sm:$0xff]
      %v3314 = vld [vmem:[%s7 + $0xf0] sm:$0xff]
      %v3315 = vld [vmem:[%s7 + $0xf8] sm:$0xff]
      %v3316 = vld [vmem:[%s8] sm:$0x3]
      %v3318 = vlaneseq
      %v3319 = vshrl.u32 %v3318, 7
      %v3320 = vsub.s32 0, %v3319
      %v3321 = vrot.slane %v3316, %v3320
      %v3322 = vlaneseq
      %v3323 = vshrl.u32 %v3322, 7
      %v3324 = vsub.s32 1, %v3323
      %v3325 = vrot.slane %v3316, %v3324
      %v3360 = vunpack.c.l.b16 %v3284
      %v3361 = vunpack.c.h.b16 %v3284
      %v3362 = vunpack.c.l.b16 %v3285
      %v3363 = vunpack.c.h.b16 %v3285
      %v3364 = vunpack.c.l.b16 %v3286
      %v3365 = vunpack.c.h.b16 %v3286
      %v3366 = vunpack.c.l.b16 %v3287
      %v3367 = vunpack.c.h.b16 %v3287
      %v3368 = vunpack.c.l.b16 %v3288
      %v3369 = vunpack.c.h.b16 %v3288
      %v3370 = vunpack.c.l.b16 %v3289
      %v3371 = vunpack.c.h.b16 %v3289
      %v3372 = vunpack.c.l.b16 %v3290
      %v3373 = vunpack.c.h.b16 %v3290
      %v3374 = vunpack.c.l.b16 %v3291
      %v3375 = vunpack.c.h.b16 %v3291
      %v3376 = vunpack.c.l.b16 %v3292
      %v3377 = vunpack.c.h.b16 %v3292
      %v3378 = vunpack.c.l.b16 %v3293
      %v3379 = vunpack.c.h.b16 %v3293
      %v3380 = vunpack.c.l.b16 %v3294
      %v3381 = vunpack.c.h.b16 %v3294
      %v3382 = vunpack.c.l.b16 %v3295
      %v3383 = vunpack.c.h.b16 %v3295
      %v3384 = vunpack.c.l.b16 %v3296
      %v3385 = vunpack.c.h.b16 %v3296
      %v3386 = vunpack.c.l.b16 %v3297
      %v3387 = vunpack.c.h.b16 %v3297
      %v3388 = vunpack.c.l.b16 %v3298
      %v3389 = vunpack.c.h.b16 %v3298
      %v3390 = vunpack.c.l.b16 %v3299
      %v3391 = vunpack.c.h.b16 %v3299
      %v3392 = vunpack.c.l.b16 %v3300
      %v3393 = vunpack.c.h.b16 %v3300
      %v3394 = vunpack.c.l.b16 %v3301
      %v3395 = vunpack.c.h.b16 %v3301
      %v3396 = vunpack.c.l.b16 %v3302
      %v3397 = vunpack.c.h.b16 %v3302
      %v3398 = vunpack.c.l.b16 %v3303
      %v3399 = vunpack.c.h.b16 %v3303
      %v3400 = vunpack.c.l.b16 %v3304
      %v3401 = vunpack.c.h.b16 %v3304
      %v3402 = vunpack.c.l.b16 %v3305
      %v3403 = vunpack.c.h.b16 %v3305
      %v3404 = vunpack.c.l.b16 %v3306
      %v3405 = vunpack.c.h.b16 %v3306
      %v3406 = vunpack.c.l.b16 %v3307
      %v3407 = vunpack.c.h.b16 %v3307
      %v3408 = vunpack.c.l.b16 %v3308
      %v3409 = vunpack.c.h.b16 %v3308
      %v3410 = vunpack.c.l.b16 %v3309
      %v3411 = vunpack.c.h.b16 %v3309
      %v3412 = vunpack.c.l.b16 %v3310
      %v3413 = vunpack.c.h.b16 %v3310
      %v3414 = vunpack.c.l.b16 %v3311
      %v3415 = vunpack.c.h.b16 %v3311
      %v3416 = vunpack.c.l.b16 %v3312
      %v3417 = vunpack.c.h.b16 %v3312
      %v3418 = vunpack.c.l.b16 %v3313
      %v3419 = vunpack.c.h.b16 %v3313
      %v3420 = vunpack.c.l.b16 %v3314
      %v3421 = vunpack.c.h.b16 %v3314
      %v3422 = vunpack.c.l.b16 %v3315
      %v3423 = vunpack.c.h.b16 %v3315
      %v3424 = vpack.c.b16 %v3362, %v3360
      %v3425 = vpack.c.b16 %v3363, %v3361
      %v3426 = vpack.c.b16 %v3366, %v3364
      %v3427 = vpack.c.b16 %v3367, %v3365
      %v3428 = vpack.c.b16 %v3370, %v3368
      %v3429 = vpack.c.b16 %v3371, %v3369
      %v3430 = vpack.c.b16 %v3374, %v3372
      %v3431 = vpack.c.b16 %v3375, %v3373
      %v3432 = vpack.c.b16 %v3378, %v3376
      %v3433 = vpack.c.b16 %v3379, %v3377
      %v3434 = vpack.c.b16 %v3382, %v3380
      %v3435 = vpack.c.b16 %v3383, %v3381
      %v3436 = vpack.c.b16 %v3386, %v3384
      %v3437 = vpack.c.b16 %v3387, %v3385
      %v3438 = vpack.c.b16 %v3390, %v3388
      %v3439 = vpack.c.b16 %v3391, %v3389
      %v3440 = vpack.c.b16 %v3394, %v3392
      %v3441 = vpack.c.b16 %v3395, %v3393
      %v3442 = vpack.c.b16 %v3398, %v3396
      %v3443 = vpack.c.b16 %v3399, %v3397
      %v3444 = vpack.c.b16 %v3402, %v3400
      %v3445 = vpack.c.b16 %v3403, %v3401
      %v3446 = vpack.c.b16 %v3406, %v3404
      %v3447 = vpack.c.b16 %v3407, %v3405
      %v3448 = vpack.c.b16 %v3410, %v3408
      %v3449 = vpack.c.b16 %v3411, %v3409
      %v3450 = vpack.c.b16 %v3414, %v3412
      %v3451 = vpack.c.b16 %v3415, %v3413
      %v3452 = vpack.c.b16 %v3418, %v3416
      %v3453 = vpack.c.b16 %v3419, %v3417
      %v3454 = vpack.c.b16 %v3422, %v3420
      %v3455 = vpack.c.b16 %v3423, %v3421
      %3488 = vmatprep.subr.bf16.mxu0 %v3439
      %3489 = vmatpush1.bf16.msra.mxu0 %v3438
      %3490 = vmatprep.subr.bf16.mxu0 %v3437
      %3491 = vmatpush1.bf16.msra.mxu0 %v3436
      %3492 = vmatprep.subr.bf16.mxu0 %v3435
      %3493 = vmatpush1.bf16.msra.mxu0 %v3434
      %3494 = vmatprep.subr.bf16.mxu0 %v3433
      %3495 = vmatpush1.bf16.msra.mxu0 %v3432
      %3496 = vmatprep.subr.bf16.mxu0 %v3431
      %3497 = vmatpush1.bf16.msra.mxu0 %v3430
      %3498 = vmatprep.subr.bf16.mxu0 %v3429
      %3499 = vmatpush1.bf16.msra.mxu0 %v3428
      %3500 = vmatprep.subr.bf16.mxu0 %v3427
      %3501 = vmatpush1.bf16.msra.mxu0 %v3426
      %3502 = vmatprep.subr.bf16.mxu0 %v3425
      %3503 = vmatpush1.bf16.msra.mxu0 %v3424
      %3504 = vmatprep.subr.bf16.mxu0 %v3455
      %3505 = vmatpush2.bf16.msra.mxu0 %v3454
      %3506 = vmatprep.subr.bf16.mxu0 %v3453
      %3507 = vmatpush2.bf16.msra.mxu0 %v3452
      %3508 = vmatprep.subr.bf16.mxu0 %v3451
      %3509 = vmatpush2.bf16.msra.mxu0 %v3450
      %3510 = vmatprep.subr.bf16.mxu0 %v3449
      %3511 = vmatpush2.bf16.msra.mxu0 %v3448
      %3512 = vmatprep.subr.bf16.mxu0 %v3447
      %3513 = vmatpush2.bf16.msra.mxu0 %v3446
      %3514 = vmatprep.subr.bf16.mxu0 %v3445
      %3515 = vmatpush2.bf16.msra.mxu0 %v3444
      %3516 = vmatprep.subr.bf16.mxu0 %v3443
      %3517 = vmatpush2.bf16.msra.mxu0 %v3442
      %3518 = vmatprep.subr.bf16.mxu0 %v3441
      %3519 = vmatpush2.bf16.msra.mxu0 %v3440
      %3520 = vmatprep.mubr.bf16.mxu0 %v3221
      %3521 = vmatmul.mubr.bf16.gmra.mxu0 %v3220
      %v3522 = vpop.f32.mrf.mxu0
      %v3523 = vadd.f32 %v3321, %v3522
      %v3524 = vpop.f32.mrf.mxu0
      %v3525 = vadd.f32 %v3325, %v3524
      %v3526 = vpop.f32.mrf.mxu0
      %v3527 = vadd.f32 %v3321, %v3526
      %v3528 = vpop.f32.mrf.mxu0
      %v3529 = vadd.f32 %v3325, %v3528
      %3530 = vmatprep.mubr.bf16.mxu0 %v3223
      %3531 = vmatmul.mubr.bf16.gmra.mxu0 %v3222
      %v3532 = vpop.f32.mrf.mxu0
      %v3533 = vadd.f32 %v3321, %v3532
      %v3534 = vpop.f32.mrf.mxu0
      %v3535 = vadd.f32 %v3325, %v3534
      %v3536 = vpop.f32.mrf.mxu0
      %v3537 = vadd.f32 %v3321, %v3536
      %v3538 = vpop.f32.mrf.mxu0
      %v3539 = vadd.f32 %v3325, %v3538
      %3540 = vmatprep.mubr.bf16.mxu0 %v3225
      %3541 = vmatmul.mubr.bf16.gmra.mxu0 %v3224
      %v3542 = vpop.f32.mrf.mxu0
      %v3543 = vadd.f32 %v3321, %v3542
      %v3544 = vpop.f32.mrf.mxu0
      %v3545 = vadd.f32 %v3325, %v3544
      %v3546 = vpop.f32.mrf.mxu0
      %v3547 = vadd.f32 %v3321, %v3546
      %v3548 = vpop.f32.mrf.mxu0
      %v3549 = vadd.f32 %v3325, %v3548
      %3550 = vmatprep.mubr.bf16.mxu0 %v3227
      %3551 = vmatmul.mubr.bf16.gmra.mxu0 %v3226
      %v3552 = vpop.f32.mrf.mxu0
      %v3553 = vadd.f32 %v3321, %v3552
      %v3554 = vpop.f32.mrf.mxu0
      %v3555 = vadd.f32 %v3325, %v3554
      %v3556 = vpop.f32.mrf.mxu0
      %v3557 = vadd.f32 %v3321, %v3556
      %v3558 = vpop.f32.mrf.mxu0
      %v3559 = vadd.f32 %v3325, %v3558
      %3560 = vmatprep.mubr.bf16.mxu0 %v3229
      %3561 = vmatmul.mubr.bf16.gmra.mxu0 %v3228
      %v3562 = vpop.f32.mrf.mxu0
      %v3563 = vadd.f32 %v3321, %v3562
      %v3564 = vpop.f32.mrf.mxu0
      %v3565 = vadd.f32 %v3325, %v3564
      %v3566 = vpop.f32.mrf.mxu0
      %v3567 = vadd.f32 %v3321, %v3566
      %v3568 = vpop.f32.mrf.mxu0
      %v3569 = vadd.f32 %v3325, %v3568
      %3570 = vmatprep.mubr.bf16.mxu0 %v3231
      %3571 = vmatmul.mubr.bf16.gmra.mxu0 %v3230
      %v3572 = vpop.f32.mrf.mxu0
      %v3573 = vadd.f32 %v3321, %v3572
      %v3574 = vpop.f32.mrf.mxu0
      %v3575 = vadd.f32 %v3325, %v3574
      %v3576 = vpop.f32.mrf.mxu0
      %v3577 = vadd.f32 %v3321, %v3576
      %v3578 = vpop.f32.mrf.mxu0
      %v3579 = vadd.f32 %v3325, %v3578
      %3580 = vmatprep.mubr.bf16.mxu0 %v3233
      %3581 = vmatmul.mubr.bf16.gmra.mxu0 %v3232
      %v3582 = vpop.f32.mrf.mxu0
      %v3583 = vadd.f32 %v3321, %v3582
      %v3584 = vpop.f32.mrf.mxu0
      %v3585 = vadd.f32 %v3325, %v3584
      %v3586 = vpop.f32.mrf.mxu0
      %v3587 = vadd.f32 %v3321, %v3586
      %v3588 = vpop.f32.mrf.mxu0
      %v3589 = vadd.f32 %v3325, %v3588
      %3590 = vmatprep.mubr.bf16.mxu0 %v3235
      %3591 = vmatmul.mubr.bf16.gmra.mxu0 %v3234
      %v3592 = vpop.f32.mrf.mxu0
      %v3593 = vadd.f32 %v3321, %v3592
      %v3594 = vpop.f32.mrf.mxu0
      %v3595 = vadd.f32 %v3325, %v3594
      %v3596 = vpop.f32.mrf.mxu0
      %v3597 = vadd.f32 %v3321, %v3596
      %v3598 = vpop.f32.mrf.mxu0
      %v3599 = vadd.f32 %v3325, %v3598
      %3600 = vmatprep.mubr.bf16.mxu0 %v3237
      %3601 = vmatmul.mubr.bf16.gmra.mxu0 %v3236
      %v3602 = vpop.f32.mrf.mxu0
      %v3603 = vadd.f32 %v3321, %v3602
      %v3604 = vpop.f32.mrf.mxu0
      %v3605 = vadd.f32 %v3325, %v3604
      %v3606 = vpop.f32.mrf.mxu0
      %v3607 = vadd.f32 %v3321, %v3606
      %v3608 = vpop.f32.mrf.mxu0
      %v3609 = vadd.f32 %v3325, %v3608
      %3610 = vmatprep.mubr.bf16.mxu0 %v3239
      %3611 = vmatmul.mubr.bf16.gmra.mxu0 %v3238
      %v3612 = vpop.f32.mrf.mxu0
      %v3613 = vadd.f32 %v3321, %v3612
      %v3614 = vpop.f32.mrf.mxu0
      %v3615 = vadd.f32 %v3325, %v3614
      %v3616 = vpop.f32.mrf.mxu0
      %v3617 = vadd.f32 %v3321, %v3616
      %v3618 = vpop.f32.mrf.mxu0
      %v3619 = vadd.f32 %v3325, %v3618
      %3620 = vmatprep.mubr.bf16.mxu0 %v3241
      %3621 = vmatmul.mubr.bf16.gmra.mxu0 %v3240
      %v3622 = vpop.f32.mrf.mxu0
      %v3623 = vadd.f32 %v3321, %v3622
      %v3624 = vpop.f32.mrf.mxu0
      %v3625 = vadd.f32 %v3325, %v3624
      %v3626 = vpop.f32.mrf.mxu0
      %v3627 = vadd.f32 %v3321, %v3626
      %v3628 = vpop.f32.mrf.mxu0
      %v3629 = vadd.f32 %v3325, %v3628
      %3630 = vmatprep.mubr.bf16.mxu0 %v3243
      %3631 = vmatmul.mubr.bf16.gmra.mxu0 %v3242
      %v3632 = vpop.f32.mrf.mxu0
      %v3633 = vadd.f32 %v3321, %v3632
      %v3634 = vpop.f32.mrf.mxu0
      %v3635 = vadd.f32 %v3325, %v3634
      %v3636 = vpop.f32.mrf.mxu0
      %v3637 = vadd.f32 %v3321, %v3636
      %v3638 = vpop.f32.mrf.mxu0
      %v3639 = vadd.f32 %v3325, %v3638
      %3640 = vmatprep.mubr.bf16.mxu0 %v3245
      %3641 = vmatmul.mubr.bf16.gmra.mxu0 %v3244
      %v3642 = vpop.f32.mrf.mxu0
      %v3643 = vadd.f32 %v3321, %v3642
      %v3644 = vpop.f32.mrf.mxu0
      %v3645 = vadd.f32 %v3325, %v3644
      %v3646 = vpop.f32.mrf.mxu0
      %v3647 = vadd.f32 %v3321, %v3646
      %v3648 = vpop.f32.mrf.mxu0
      %v3649 = vadd.f32 %v3325, %v3648
      %3650 = vmatprep.mubr.bf16.mxu0 %v3247
      %3651 = vmatmul.mubr.bf16.gmra.mxu0 %v3246
      %v3652 = vpop.f32.mrf.mxu0
      %v3653 = vadd.f32 %v3321, %v3652
      %v3654 = vpop.f32.mrf.mxu0
      %v3655 = vadd.f32 %v3325, %v3654
      %v3656 = vpop.f32.mrf.mxu0
      %v3657 = vadd.f32 %v3321, %v3656
      %v3658 = vpop.f32.mrf.mxu0
      %v3659 = vadd.f32 %v3325, %v3658
      %3660 = vmatprep.mubr.bf16.mxu0 %v3249
      %3661 = vmatmul.mubr.bf16.gmra.mxu0 %v3248
      %v3662 = vpop.f32.mrf.mxu0
      %v3663 = vadd.f32 %v3321, %v3662
      %v3664 = vpop.f32.mrf.mxu0
      %v3665 = vadd.f32 %v3325, %v3664
      %v3666 = vpop.f32.mrf.mxu0
      %v3667 = vadd.f32 %v3321, %v3666
      %v3668 = vpop.f32.mrf.mxu0
      %v3669 = vadd.f32 %v3325, %v3668
      %3670 = vmatprep.mubr.bf16.mxu0 %v3251
      %3671 = vmatmul.mubr.bf16.gmra.mxu0 %v3250
      %v3672 = vpop.f32.mrf.mxu0
      %v3673 = vadd.f32 %v3321, %v3672
      %v3674 = vpop.f32.mrf.mxu0
      %v3675 = vadd.f32 %v3325, %v3674
      %v3676 = vpop.f32.mrf.mxu0
      %v3677 = vadd.f32 %v3321, %v3676
      %v3678 = vpop.f32.mrf.mxu0
      %v3679 = vadd.f32 %v3325, %v3678
      %3680 = vmatprep.mubr.bf16.mxu0 %v3253
      %3681 = vmatmul.mubr.bf16.gmra.mxu0 %v3252
      %v3682 = vpop.f32.mrf.mxu0
      %v3683 = vadd.f32 %v3321, %v3682
      %v3684 = vpop.f32.mrf.mxu0
      %v3685 = vadd.f32 %v3325, %v3684
      %v3686 = vpop.f32.mrf.mxu0
      %v3687 = vadd.f32 %v3321, %v3686
      %v3688 = vpop.f32.mrf.mxu0
      %v3689 = vadd.f32 %v3325, %v3688
      %3690 = vmatprep.mubr.bf16.mxu0 %v3255
      %3691 = vmatmul.mubr.bf16.gmra.mxu0 %v3254
      %v3692 = vpop.f32.mrf.mxu0
      %v3693 = vadd.f32 %v3321, %v3692
      %v3694 = vpop.f32.mrf.mxu0
      %v3695 = vadd.f32 %v3325, %v3694
      %v3696 = vpop.f32.mrf.mxu0
      %v3697 = vadd.f32 %v3321, %v3696
      %v3698 = vpop.f32.mrf.mxu0
      %v3699 = vadd.f32 %v3325, %v3698
      %3700 = vmatprep.mubr.bf16.mxu0 %v3257
      %3701 = vmatmul.mubr.bf16.gmra.mxu0 %v3256
      %v3702 = vpop.f32.mrf.mxu0
      %v3703 = vadd.f32 %v3321, %v3702
      %v3704 = vpop.f32.mrf.mxu0
      %v3705 = vadd.f32 %v3325, %v3704
      %v3706 = vpop.f32.mrf.mxu0
      %v3707 = vadd.f32 %v3321, %v3706
      %v3708 = vpop.f32.mrf.mxu0
      %v3709 = vadd.f32 %v3325, %v3708
      %3710 = vmatprep.mubr.bf16.mxu0 %v3259
      %3711 = vmatmul.mubr.bf16.gmra.mxu0 %v3258
      %v3712 = vpop.f32.mrf.mxu0
      %v3713 = vadd.f32 %v3321, %v3712
      %v3714 = vpop.f32.mrf.mxu0
      %v3715 = vadd.f32 %v3325, %v3714
      %v3716 = vpop.f32.mrf.mxu0
      %v3717 = vadd.f32 %v3321, %v3716
      %v3718 = vpop.f32.mrf.mxu0
      %v3719 = vadd.f32 %v3325, %v3718
      %3720 = vmatprep.mubr.bf16.mxu0 %v3261
      %3721 = vmatmul.mubr.bf16.gmra.mxu0 %v3260
      %v3722 = vpop.f32.mrf.mxu0
      %v3723 = vadd.f32 %v3321, %v3722
      %v3724 = vpop.f32.mrf.mxu0
      %v3725 = vadd.f32 %v3325, %v3724
      %v3726 = vpop.f32.mrf.mxu0
      %v3727 = vadd.f32 %v3321, %v3726
      %v3728 = vpop.f32.mrf.mxu0
      %v3729 = vadd.f32 %v3325, %v3728
      %3730 = vmatprep.mubr.bf16.mxu0 %v3263
      %3731 = vmatmul.mubr.bf16.gmra.mxu0 %v3262
      %v3732 = vpop.f32.mrf.mxu0
      %v3733 = vadd.f32 %v3321, %v3732
      %v3734 = vpop.f32.mrf.mxu0
      %v3735 = vadd.f32 %v3325, %v3734
      %v3736 = vpop.f32.mrf.mxu0
      %v3737 = vadd.f32 %v3321, %v3736
      %v3738 = vpop.f32.mrf.mxu0
      %v3739 = vadd.f32 %v3325, %v3738
      %3740 = vmatprep.mubr.bf16.mxu0 %v3265
      %3741 = vmatmul.mubr.bf16.gmra.mxu0 %v3264
      %v3742 = vpop.f32.mrf.mxu0
      %v3743 = vadd.f32 %v3321, %v3742
      %v3744 = vpop.f32.mrf.mxu0
      %v3745 = vadd.f32 %v3325, %v3744
      %v3746 = vpop.f32.mrf.mxu0
      %v3747 = vadd.f32 %v3321, %v3746
      %v3748 = vpop.f32.mrf.mxu0
      %v3749 = vadd.f32 %v3325, %v3748
      %3750 = vmatprep.mubr.bf16.mxu0 %v3267
      %3751 = vmatmul.mubr.bf16.gmra.mxu0 %v3266
      %v3752 = vpop.f32.mrf.mxu0
      %v3753 = vadd.f32 %v3321, %v3752
      %v3754 = vpop.f32.mrf.mxu0
      %v3755 = vadd.f32 %v3325, %v3754
      %v3756 = vpop.f32.mrf.mxu0
      %v3757 = vadd.f32 %v3321, %v3756
      %v3758 = vpop.f32.mrf.mxu0
      %v3759 = vadd.f32 %v3325, %v3758
      %3760 = vmatprep.mubr.bf16.mxu0 %v3269
      %3761 = vmatmul.mubr.bf16.gmra.mxu0 %v3268
      %v3762 = vpop.f32.mrf.mxu0
      %v3763 = vadd.f32 %v3321, %v3762
      %v3764 = vpop.f32.mrf.mxu0
      %v3765 = vadd.f32 %v3325, %v3764
      %v3766 = vpop.f32.mrf.mxu0
      %v3767 = vadd.f32 %v3321, %v3766
      %v3768 = vpop.f32.mrf.mxu0
      %v3769 = vadd.f32 %v3325, %v3768
      %3770 = vmatprep.mubr.bf16.mxu0 %v3271
      %3771 = vmatmul.mubr.bf16.gmra.mxu0 %v3270
      %v3772 = vpop.f32.mrf.mxu0
      %v3773 = vadd.f32 %v3321, %v3772
      %v3774 = vpop.f32.mrf.mxu0
      %v3775 = vadd.f32 %v3325, %v3774
      %v3776 = vpop.f32.mrf.mxu0
      %v3777 = vadd.f32 %v3321, %v3776
      %v3778 = vpop.f32.mrf.mxu0
      %v3779 = vadd.f32 %v3325, %v3778
      %3780 = vmatprep.mubr.bf16.mxu0 %v3273
      %3781 = vmatmul.mubr.bf16.gmra.mxu0 %v3272
      %v3782 = vpop.f32.mrf.mxu0
      %v3783 = vadd.f32 %v3321, %v3782
      %v3784 = vpop.f32.mrf.mxu0
      %v3785 = vadd.f32 %v3325, %v3784
      %v3786 = vpop.f32.mrf.mxu0
      %v3787 = vadd.f32 %v3321, %v3786
      %v3788 = vpop.f32.mrf.mxu0
      %v3789 = vadd.f32 %v3325, %v3788
      %3790 = vmatprep.mubr.bf16.mxu0 %v3275
      %3791 = vmatmul.mubr.bf16.gmra.mxu0 %v3274
      %v3792 = vpop.f32.mrf.mxu0
      %v3793 = vadd.f32 %v3321, %v3792
      %v3794 = vpop.f32.mrf.mxu0
      %v3795 = vadd.f32 %v3325, %v3794
      %v3796 = vpop.f32.mrf.mxu0
      %v3797 = vadd.f32 %v3321, %v3796
      %v3798 = vpop.f32.mrf.mxu0
      %v3799 = vadd.f32 %v3325, %v3798
      %3800 = vmatprep.mubr.bf16.mxu0 %v3277
      %3801 = vmatmul.mubr.bf16.gmra.mxu0 %v3276
      %v3802 = vpop.f32.mrf.mxu0
      %v3803 = vadd.f32 %v3321, %v3802
      %v3804 = vpop.f32.mrf.mxu0
      %v3805 = vadd.f32 %v3325, %v3804
      %v3806 = vpop.f32.mrf.mxu0
      %v3807 = vadd.f32 %v3321, %v3806
      %v3808 = vpop.f32.mrf.mxu0
      %v3809 = vadd.f32 %v3325, %v3808
      %3810 = vmatprep.mubr.bf16.mxu0 %v3279
      %3811 = vmatmul.mubr.bf16.gmra.mxu0 %v3278
      %v3812 = vpop.f32.mrf.mxu0
      %v3813 = vadd.f32 %v3321, %v3812
      %v3814 = vpop.f32.mrf.mxu0
      %v3815 = vadd.f32 %v3325, %v3814
      %v3816 = vpop.f32.mrf.mxu0
      %v3817 = vadd.f32 %v3321, %v3816
      %v3818 = vpop.f32.mrf.mxu0
      %v3819 = vadd.f32 %v3325, %v3818
      %3820 = vmatprep.mubr.bf16.mxu0 %v3281
      %3821 = vmatmul.mubr.bf16.gmra.mxu0 %v3280
      %v3822 = vpop.f32.mrf.mxu0
      %v3823 = vadd.f32 %v3321, %v3822
      %v3824 = vpop.f32.mrf.mxu0
      %v3825 = vadd.f32 %v3325, %v3824
      %v3826 = vpop.f32.mrf.mxu0
      %v3827 = vadd.f32 %v3321, %v3826
      %v3828 = vpop.f32.mrf.mxu0
      %v3829 = vadd.f32 %v3325, %v3828
      %3830 = vmatprep.mubr.bf16.mxu0 %v3283
      %3831 = vmatmul.mubr.bf16.gmra.mxu0 %v3282
      %v3832 = vpop.f32.mrf.mxu0
      %v3833 = vadd.f32 %v3321, %v3832
      %v3834 = vpop.f32.mrf.mxu0
      %v3835 = vadd.f32 %v3325, %v3834
      %v3836 = vpop.f32.mrf.mxu0
      %v3837 = vadd.f32 %v3321, %v3836
      %v3838 = vpop.f32.mrf.mxu0
      %v3839 = vadd.f32 %v3325, %v3838
      %3840 = vdwg.mxu0
      %v3841 = vmax.f32 %v3523, 0.0
      %v3842 = vmax.f32 %v3525, 0.0
      %v3843 = vmax.f32 %v3527, 0.0
      %v3844 = vmax.f32 %v3529, 0.0
      %v3845 = vmax.f32 %v3533, 0.0
      %v3846 = vmax.f32 %v3535, 0.0
      %v3847 = vmax.f32 %v3537, 0.0
      %v3848 = vmax.f32 %v3539, 0.0
      %v3849 = vmax.f32 %v3543, 0.0
      %v3850 = vmax.f32 %v3545, 0.0
      %v3851 = vmax.f32 %v3547, 0.0
      %v3852 = vmax.f32 %v3549, 0.0
      %v3853 = vmax.f32 %v3553, 0.0
      %v3854 = vmax.f32 %v3555, 0.0
      %v3855 = vmax.f32 %v3557, 0.0
      %v3856 = vmax.f32 %v3559, 0.0
      %v3857 = vmax.f32 %v3563, 0.0
      %v3858 = vmax.f32 %v3565, 0.0
      %v3859 = vmax.f32 %v3567, 0.0
      %v3860 = vmax.f32 %v3569, 0.0
      %v3861 = vmax.f32 %v3573, 0.0
      %v3862 = vmax.f32 %v3575, 0.0
      %v3863 = vmax.f32 %v3577, 0.0
      %v3864 = vmax.f32 %v3579, 0.0
      %v3865 = vmax.f32 %v3583, 0.0
      %v3866 = vmax.f32 %v3585, 0.0
      %v3867 = vmax.f32 %v3587, 0.0
      %v3868 = vmax.f32 %v3589, 0.0
      %v3869 = vmax.f32 %v3593, 0.0
      %v3870 = vmax.f32 %v3595, 0.0
      %v3871 = vmax.f32 %v3597, 0.0
      %v3872 = vmax.f32 %v3599, 0.0
      %v3873 = vmax.f32 %v3603, 0.0
      %v3874 = vmax.f32 %v3605, 0.0
      %v3875 = vmax.f32 %v3607, 0.0
      %v3876 = vmax.f32 %v3609, 0.0
      %v3877 = vmax.f32 %v3613, 0.0
      %v3878 = vmax.f32 %v3615, 0.0
      %v3879 = vmax.f32 %v3617, 0.0
      %v3880 = vmax.f32 %v3619, 0.0
      %v3881 = vmax.f32 %v3623, 0.0
      %v3882 = vmax.f32 %v3625, 0.0
      %v3883 = vmax.f32 %v3627, 0.0
      %v3884 = vmax.f32 %v3629, 0.0
      %v3885 = vmax.f32 %v3633, 0.0
      %v3886 = vmax.f32 %v3635, 0.0
      %v3887 = vmax.f32 %v3637, 0.0
      %v3888 = vmax.f32 %v3639, 0.0
      %v3889 = vmax.f32 %v3643, 0.0
      %v3890 = vmax.f32 %v3645, 0.0
      %v3891 = vmax.f32 %v3647, 0.0
      %v3892 = vmax.f32 %v3649, 0.0
      %v3893 = vmax.f32 %v3653, 0.0
      %v3894 = vmax.f32 %v3655, 0.0
      %v3895 = vmax.f32 %v3657, 0.0
      %v3896 = vmax.f32 %v3659, 0.0
      %v3897 = vmax.f32 %v3663, 0.0
      %v3898 = vmax.f32 %v3665, 0.0
      %v3899 = vmax.f32 %v3667, 0.0
      %v3900 = vmax.f32 %v3669, 0.0
      %v3901 = vmax.f32 %v3673, 0.0
      %v3902 = vmax.f32 %v3675, 0.0
      %v3903 = vmax.f32 %v3677, 0.0
      %v3904 = vmax.f32 %v3679, 0.0
      %v3905 = vmax.f32 %v3683, 0.0
      %v3906 = vmax.f32 %v3685, 0.0
      %v3907 = vmax.f32 %v3687, 0.0
      %v3908 = vmax.f32 %v3689, 0.0
      %v3909 = vmax.f32 %v3693, 0.0
      %v3910 = vmax.f32 %v3695, 0.0
      %v3911 = vmax.f32 %v3697, 0.0
      %v3912 = vmax.f32 %v3699, 0.0
      %v3913 = vmax.f32 %v3703, 0.0
      %v3914 = vmax.f32 %v3705, 0.0
      %v3915 = vmax.f32 %v3707, 0.0
      %v3916 = vmax.f32 %v3709, 0.0
      %v3917 = vmax.f32 %v3713, 0.0
      %v3918 = vmax.f32 %v3715, 0.0
      %v3919 = vmax.f32 %v3717, 0.0
      %v3920 = vmax.f32 %v3719, 0.0
      %v3921 = vmax.f32 %v3723, 0.0
      %v3922 = vmax.f32 %v3725, 0.0
      %v3923 = vmax.f32 %v3727, 0.0
      %v3924 = vmax.f32 %v3729, 0.0
      %v3925 = vmax.f32 %v3733, 0.0
      %v3926 = vmax.f32 %v3735, 0.0
      %v3927 = vmax.f32 %v3737, 0.0
      %v3928 = vmax.f32 %v3739, 0.0
      %v3929 = vmax.f32 %v3743, 0.0
      %v3930 = vmax.f32 %v3745, 0.0
      %v3931 = vmax.f32 %v3747, 0.0
      %v3932 = vmax.f32 %v3749, 0.0
      %v3933 = vmax.f32 %v3753, 0.0
      %v3934 = vmax.f32 %v3755, 0.0
      %v3935 = vmax.f32 %v3757, 0.0
      %v3936 = vmax.f32 %v3759, 0.0
      %v3937 = vmax.f32 %v3763, 0.0
      %v3938 = vmax.f32 %v3765, 0.0
      %v3939 = vmax.f32 %v3767, 0.0
      %v3940 = vmax.f32 %v3769, 0.0
      %v3941 = vmax.f32 %v3773, 0.0
      %v3942 = vmax.f32 %v3775, 0.0
      %v3943 = vmax.f32 %v3777, 0.0
      %v3944 = vmax.f32 %v3779, 0.0
      %v3945 = vmax.f32 %v3783, 0.0
      %v3946 = vmax.f32 %v3785, 0.0
      %v3947 = vmax.f32 %v3787, 0.0
      %v3948 = vmax.f32 %v3789, 0.0
      %v3949 = vmax.f32 %v3793, 0.0
      %v3950 = vmax.f32 %v3795, 0.0
      %v3951 = vmax.f32 %v3797, 0.0
      %v3952 = vmax.f32 %v3799, 0.0
      %v3953 = vmax.f32 %v3803, 0.0
      %v3954 = vmax.f32 %v3805, 0.0
      %v3955 = vmax.f32 %v3807, 0.0
      %v3956 = vmax.f32 %v3809, 0.0
      %v3957 = vmax.f32 %v3813, 0.0
      %v3958 = vmax.f32 %v3815, 0.0
      %v3959 = vmax.f32 %v3817, 0.0
      %v3960 = vmax.f32 %v3819, 0.0
      %v3961 = vmax.f32 %v3823, 0.0
      %v3962 = vmax.f32 %v3825, 0.0
      %v3963 = vmax.f32 %v3827, 0.0
      %v3964 = vmax.f32 %v3829, 0.0
      %v3965 = vmax.f32 %v3833, 0.0
      %v3966 = vmax.f32 %v3835, 0.0
      %v3967 = vmax.f32 %v3837, 0.0
      %v3968 = vmax.f32 %v3839, 0.0
      %v3969 = vpack.c.bf16 %v3843, %v3841
      %v3970 = vpack.c.bf16 %v3844, %v3842
      %v3971 = vpack.c.bf16 %v3847, %v3845
      %v3972 = vpack.c.bf16 %v3848, %v3846
      %v3973 = vpack.c.bf16 %v3851, %v3849
      %v3974 = vpack.c.bf16 %v3852, %v3850
      %v3975 = vpack.c.bf16 %v3855, %v3853
      %v3976 = vpack.c.bf16 %v3856, %v3854
      %v3977 = vpack.c.bf16 %v3859, %v3857
      %v3978 = vpack.c.bf16 %v3860, %v3858
      %v3979 = vpack.c.bf16 %v3863, %v3861
      %v3980 = vpack.c.bf16 %v3864, %v3862
      %v3981 = vpack.c.bf16 %v3867, %v3865
      %v3982 = vpack.c.bf16 %v3868, %v3866
      %v3983 = vpack.c.bf16 %v3871, %v3869
      %v3984 = vpack.c.bf16 %v3872, %v3870
      %v3985 = vpack.c.bf16 %v3875, %v3873
      %v3986 = vpack.c.bf16 %v3876, %v3874
      %v3987 = vpack.c.bf16 %v3879, %v3877
      %v3988 = vpack.c.bf16 %v3880, %v3878
      %v3989 = vpack.c.bf16 %v3883, %v3881
      %v3990 = vpack.c.bf16 %v3884, %v3882
      %v3991 = vpack.c.bf16 %v3887, %v3885
      %v3992 = vpack.c.bf16 %v3888, %v3886
      %v3993 = vpack.c.bf16 %v3891, %v3889
      %v3994 = vpack.c.bf16 %v3892, %v3890
      %v3995 = vpack.c.bf16 %v3895, %v3893
      %v3996 = vpack.c.bf16 %v3896, %v3894
      %v3997 = vpack.c.bf16 %v3899, %v3897
      %v3998 = vpack.c.bf16 %v3900, %v3898
      %v3999 = vpack.c.bf16 %v3903, %v3901
      %v4000 = vpack.c.bf16 %v3904, %v3902
      %v4001 = vpack.c.bf16 %v3907, %v3905
      %v4002 = vpack.c.bf16 %v3908, %v3906
      %v4003 = vpack.c.bf16 %v3911, %v3909
      %v4004 = vpack.c.bf16 %v3912, %v3910
      %v4005 = vpack.c.bf16 %v3915, %v3913
      %v4006 = vpack.c.bf16 %v3916, %v3914
      %v4007 = vpack.c.bf16 %v3919, %v3917
      %v4008 = vpack.c.bf16 %v3920, %v3918
      %v4009 = vpack.c.bf16 %v3923, %v3921
      %v4010 = vpack.c.bf16 %v3924, %v3922
      %v4011 = vpack.c.bf16 %v3927, %v3925
      %v4012 = vpack.c.bf16 %v3928, %v3926
      %v4013 = vpack.c.bf16 %v3931, %v3929
      %v4014 = vpack.c.bf16 %v3932, %v3930
      %v4015 = vpack.c.bf16 %v3935, %v3933
      %v4016 = vpack.c.bf16 %v3936, %v3934
      %v4017 = vpack.c.bf16 %v3939, %v3937
      %v4018 = vpack.c.bf16 %v3940, %v3938
      %v4019 = vpack.c.bf16 %v3943, %v3941
      %v4020 = vpack.c.bf16 %v3944, %v3942
      %v4021 = vpack.c.bf16 %v3947, %v3945
      %v4022 = vpack.c.bf16 %v3948, %v3946
      %v4023 = vpack.c.bf16 %v3951, %v3949
      %v4024 = vpack.c.bf16 %v3952, %v3950
      %v4025 = vpack.c.bf16 %v3955, %v3953
      %v4026 = vpack.c.bf16 %v3956, %v3954
      %v4027 = vpack.c.bf16 %v3959, %v3957
      %v4028 = vpack.c.bf16 %v3960, %v3958
      %v4029 = vpack.c.bf16 %v3963, %v3961
      %v4030 = vpack.c.bf16 %v3964, %v3962
      %v4031 = vpack.c.bf16 %v3967, %v3965
      %v4032 = vpack.c.bf16 %v3968, %v3966
      %v4033 = vunpack.c.l.bf16 %v3969
      %v4034 = vunpack.c.l.bf16 %v3970
      %v4035 = vunpack.c.h.bf16 %v3969
      %v4036 = vunpack.c.h.bf16 %v3970
      %v4037 = vunpack.c.l.bf16 %v3971
      %v4038 = vunpack.c.l.bf16 %v3972
      %v4039 = vunpack.c.h.bf16 %v3971
      %v4040 = vunpack.c.h.bf16 %v3972
      %v4041 = vunpack.c.l.bf16 %v3973
      %v4042 = vunpack.c.l.bf16 %v3974
      %v4043 = vunpack.c.h.bf16 %v3973
      %v4044 = vunpack.c.h.bf16 %v3974
      %v4045 = vunpack.c.l.bf16 %v3975
      %v4046 = vunpack.c.l.bf16 %v3976
      %v4047 = vunpack.c.h.bf16 %v3975
      %v4048 = vunpack.c.h.bf16 %v3976
      %v4049 = vunpack.c.l.bf16 %v3977
      %v4050 = vunpack.c.l.bf16 %v3978
      %v4051 = vunpack.c.h.bf16 %v3977
      %v4052 = vunpack.c.h.bf16 %v3978
      %v4053 = vunpack.c.l.bf16 %v3979
      %v4054 = vunpack.c.l.bf16 %v3980
      %v4055 = vunpack.c.h.bf16 %v3979
      %v4056 = vunpack.c.h.bf16 %v3980
      %v4057 = vunpack.c.l.bf16 %v3981
      %v4058 = vunpack.c.l.bf16 %v3982
      %v4059 = vunpack.c.h.bf16 %v3981
      %v4060 = vunpack.c.h.bf16 %v3982
      %v4061 = vunpack.c.l.bf16 %v3983
      %v4062 = vunpack.c.l.bf16 %v3984
      %v4063 = vunpack.c.h.bf16 %v3983
      %v4064 = vunpack.c.h.bf16 %v3984
      %v4065 = vunpack.c.l.bf16 %v3985
      %v4066 = vunpack.c.l.bf16 %v3986
      %v4067 = vunpack.c.h.bf16 %v3985
      %v4068 = vunpack.c.h.bf16 %v3986
      %v4069 = vunpack.c.l.bf16 %v3987
      %v4070 = vunpack.c.l.bf16 %v3988
      %v4071 = vunpack.c.h.bf16 %v3987
      %v4072 = vunpack.c.h.bf16 %v3988
      %v4073 = vunpack.c.l.bf16 %v3989
      %v4074 = vunpack.c.l.bf16 %v3990
      %v4075 = vunpack.c.h.bf16 %v3989
      %v4076 = vunpack.c.h.bf16 %v3990
      %v4077 = vunpack.c.l.bf16 %v3991
      %v4078 = vunpack.c.l.bf16 %v3992
      %v4079 = vunpack.c.h.bf16 %v3991
      %v4080 = vunpack.c.h.bf16 %v3992
      %v4081 = vunpack.c.l.bf16 %v3993
      %v4082 = vunpack.c.l.bf16 %v3994
      %v4083 = vunpack.c.h.bf16 %v3993
      %v4084 = vunpack.c.h.bf16 %v3994
      %v4085 = vunpack.c.l.bf16 %v3995
      %v4086 = vunpack.c.l.bf16 %v3996
      %v4087 = vunpack.c.h.bf16 %v3995
      %v4088 = vunpack.c.h.bf16 %v3996
      %v4089 = vunpack.c.l.bf16 %v3997
      %v4090 = vunpack.c.l.bf16 %v3998
      %v4091 = vunpack.c.h.bf16 %v3997
      %v4092 = vunpack.c.h.bf16 %v3998
      %v4093 = vunpack.c.l.bf16 %v3999
      %v4094 = vunpack.c.l.bf16 %v4000
      %v4095 = vunpack.c.h.bf16 %v3999
      %v4096 = vunpack.c.h.bf16 %v4000
      %v4097 = vunpack.c.l.bf16 %v4001
      %v4098 = vunpack.c.l.bf16 %v4002
      %v4099 = vunpack.c.h.bf16 %v4001
      %v4100 = vunpack.c.h.bf16 %v4002
      %v4101 = vunpack.c.l.bf16 %v4003
      %v4102 = vunpack.c.l.bf16 %v4004
      %v4103 = vunpack.c.h.bf16 %v4003
      %v4104 = vunpack.c.h.bf16 %v4004
      %v4105 = vunpack.c.l.bf16 %v4005
      %v4106 = vunpack.c.l.bf16 %v4006
      %v4107 = vunpack.c.h.bf16 %v4005
      %v4108 = vunpack.c.h.bf16 %v4006
      %v4109 = vunpack.c.l.bf16 %v4007
      %v4110 = vunpack.c.l.bf16 %v4008
      %v4111 = vunpack.c.h.bf16 %v4007
      %v4112 = vunpack.c.h.bf16 %v4008
      %v4113 = vunpack.c.l.bf16 %v4009
      %v4114 = vunpack.c.l.bf16 %v4010
      %v4115 = vunpack.c.h.bf16 %v4009
      %v4116 = vunpack.c.h.bf16 %v4010
      %v4117 = vunpack.c.l.bf16 %v4011
      %v4118 = vunpack.c.l.bf16 %v4012
      %v4119 = vunpack.c.h.bf16 %v4011
      %v4120 = vunpack.c.h.bf16 %v4012
      %v4121 = vunpack.c.l.bf16 %v4013
      %v4122 = vunpack.c.l.bf16 %v4014
      %v4123 = vunpack.c.h.bf16 %v4013
      %v4124 = vunpack.c.h.bf16 %v4014
      %v4125 = vunpack.c.l.bf16 %v4015
      %v4126 = vunpack.c.l.bf16 %v4016
      %v4127 = vunpack.c.h.bf16 %v4015
      %v4128 = vunpack.c.h.bf16 %v4016
      %v4129 = vunpack.c.l.bf16 %v4017
      %v4130 = vunpack.c.l.bf16 %v4018
      %v4131 = vunpack.c.h.bf16 %v4017
      %v4132 = vunpack.c.h.bf16 %v4018
      %v4133 = vunpack.c.l.bf16 %v4019
      %v4134 = vunpack.c.l.bf16 %v4020
      %v4135 = vunpack.c.h.bf16 %v4019
      %v4136 = vunpack.c.h.bf16 %v4020
      %v4137 = vunpack.c.l.bf16 %v4021
      %v4138 = vunpack.c.l.bf16 %v4022
      %v4139 = vunpack.c.h.bf16 %v4021
      %v4140 = vunpack.c.h.bf16 %v4022
      %v4141 = vunpack.c.l.bf16 %v4023
      %v4142 = vunpack.c.l.bf16 %v4024
      %v4143 = vunpack.c.h.bf16 %v4023
      %v4144 = vunpack.c.h.bf16 %v4024
      %v4145 = vunpack.c.l.bf16 %v4025
      %v4146 = vunpack.c.l.bf16 %v4026
      %v4147 = vunpack.c.h.bf16 %v4025
      %v4148 = vunpack.c.h.bf16 %v4026
      %v4149 = vunpack.c.l.bf16 %v4027
      %v4150 = vunpack.c.l.bf16 %v4028
      %v4151 = vunpack.c.h.bf16 %v4027
      %v4152 = vunpack.c.h.bf16 %v4028
      %v4153 = vunpack.c.l.bf16 %v4029
      %v4154 = vunpack.c.l.bf16 %v4030
      %v4155 = vunpack.c.h.bf16 %v4029
      %v4156 = vunpack.c.h.bf16 %v4030
      %v4157 = vunpack.c.l.bf16 %v4031
      %v4158 = vunpack.c.l.bf16 %v4032
      %v4159 = vunpack.c.h.bf16 %v4031
      %v4160 = vunpack.c.h.bf16 %v4032
      %v4161 = vld [vmem:[%s9] sm:$0x3]
      %v4163 = vlaneseq
      %v4164 = vshrl.u32 %v4163, 7
      %v4165 = vsub.s32 0, %v4164
      %v4166 = vrot.slane %v4161, %v4165
      %v4167 = vlaneseq
      %v4168 = vshrl.u32 %v4167, 7
      %v4169 = vsub.s32 1, %v4168
      %v4170 = vrot.slane %v4161, %v4169
      %v4173 = vmul.f32 %v4033, %v4166
      %v4174 = vmul.f32 %v4034, %v4170
      %v4175 = vmul.f32 %v4035, %v4166
      %v4176 = vmul.f32 %v4036, %v4170
      %v4177 = vmul.f32 %v4037, %v4166
      %v4178 = vmul.f32 %v4038, %v4170
      %v4179 = vmul.f32 %v4039, %v4166
      %v4180 = vmul.f32 %v4040, %v4170
      %v4181 = vmul.f32 %v4041, %v4166
      %v4182 = vmul.f32 %v4042, %v4170
      %v4183 = vmul.f32 %v4043, %v4166
      %v4184 = vmul.f32 %v4044, %v4170
      %v4185 = vmul.f32 %v4045, %v4166
      %v4186 = vmul.f32 %v4046, %v4170
      %v4187 = vmul.f32 %v4047, %v4166
      %v4188 = vmul.f32 %v4048, %v4170
      %v4189 = vmul.f32 %v4049, %v4166
      %v4190 = vmul.f32 %v4050, %v4170
      %v4191 = vmul.f32 %v4051, %v4166
      %v4192 = vmul.f32 %v4052, %v4170
      %v4193 = vmul.f32 %v4053, %v4166
      %v4194 = vmul.f32 %v4054, %v4170
      %v4195 = vmul.f32 %v4055, %v4166
      %v4196 = vmul.f32 %v4056, %v4170
      %v4197 = vmul.f32 %v4057, %v4166
      %v4198 = vmul.f32 %v4058, %v4170
      %v4199 = vmul.f32 %v4059, %v4166
      %v4200 = vmul.f32 %v4060, %v4170
      %v4201 = vmul.f32 %v4061, %v4166
      %v4202 = vmul.f32 %v4062, %v4170
      %v4203 = vmul.f32 %v4063, %v4166
      %v4204 = vmul.f32 %v4064, %v4170
      %v4205 = vmul.f32 %v4065, %v4166
      %v4206 = vmul.f32 %v4066, %v4170
      %v4207 = vmul.f32 %v4067, %v4166
      %v4208 = vmul.f32 %v4068, %v4170
      %v4209 = vmul.f32 %v4069, %v4166
      %v4210 = vmul.f32 %v4070, %v4170
      %v4211 = vmul.f32 %v4071, %v4166
      %v4212 = vmul.f32 %v4072, %v4170
      %v4213 = vmul.f32 %v4073, %v4166
      %v4214 = vmul.f32 %v4074, %v4170
      %v4215 = vmul.f32 %v4075, %v4166
      %v4216 = vmul.f32 %v4076, %v4170
      %v4217 = vmul.f32 %v4077, %v4166
      %v4218 = vmul.f32 %v4078, %v4170
      %v4219 = vmul.f32 %v4079, %v4166
      %v4220 = vmul.f32 %v4080, %v4170
      %v4221 = vmul.f32 %v4081, %v4166
      %v4222 = vmul.f32 %v4082, %v4170
      %v4223 = vmul.f32 %v4083, %v4166
      %v4224 = vmul.f32 %v4084, %v4170
      %v4225 = vmul.f32 %v4085, %v4166
      %v4226 = vmul.f32 %v4086, %v4170
      %v4227 = vmul.f32 %v4087, %v4166
      %v4228 = vmul.f32 %v4088, %v4170
      %v4229 = vmul.f32 %v4089, %v4166
      %v4230 = vmul.f32 %v4090, %v4170
      %v4231 = vmul.f32 %v4091, %v4166
      %v4232 = vmul.f32 %v4092, %v4170
      %v4233 = vmul.f32 %v4093, %v4166
      %v4234 = vmul.f32 %v4094, %v4170
      %v4235 = vmul.f32 %v4095, %v4166
      %v4236 = vmul.f32 %v4096, %v4170
      %v4237 = vmul.f32 %v4097, %v4166
      %v4238 = vmul.f32 %v4098, %v4170
      %v4239 = vmul.f32 %v4099, %v4166
      %v4240 = vmul.f32 %v4100, %v4170
      %v4241 = vmul.f32 %v4101, %v4166
      %v4242 = vmul.f32 %v4102, %v4170
      %v4243 = vmul.f32 %v4103, %v4166
      %v4244 = vmul.f32 %v4104, %v4170
      %v4245 = vmul.f32 %v4105, %v4166
      %v4246 = vmul.f32 %v4106, %v4170
      %v4247 = vmul.f32 %v4107, %v4166
      %v4248 = vmul.f32 %v4108, %v4170
      %v4249 = vmul.f32 %v4109, %v4166
      %v4250 = vmul.f32 %v4110, %v4170
      %v4251 = vmul.f32 %v4111, %v4166
      %v4252 = vmul.f32 %v4112, %v4170
      %v4253 = vmul.f32 %v4113, %v4166
      %v4254 = vmul.f32 %v4114, %v4170
      %v4255 = vmul.f32 %v4115, %v4166
      %v4256 = vmul.f32 %v4116, %v4170
      %v4257 = vmul.f32 %v4117, %v4166
      %v4258 = vmul.f32 %v4118, %v4170
      %v4259 = vmul.f32 %v4119, %v4166
      %v4260 = vmul.f32 %v4120, %v4170
      %v4261 = vmul.f32 %v4121, %v4166
      %v4262 = vmul.f32 %v4122, %v4170
      %v4263 = vmul.f32 %v4123, %v4166
      %v4264 = vmul.f32 %v4124, %v4170
      %v4265 = vmul.f32 %v4125, %v4166
      %v4266 = vmul.f32 %v4126, %v4170
      %v4267 = vmul.f32 %v4127, %v4166
      %v4268 = vmul.f32 %v4128, %v4170
      %v4269 = vmul.f32 %v4129, %v4166
      %v4270 = vmul.f32 %v4130, %v4170
      %v4271 = vmul.f32 %v4131, %v4166
      %v4272 = vmul.f32 %v4132, %v4170
      %v4273 = vmul.f32 %v4133, %v4166
      %v4274 = vmul.f32 %v4134, %v4170
      %v4275 = vmul.f32 %v4135, %v4166
      %v4276 = vmul.f32 %v4136, %v4170
      %v4277 = vmul.f32 %v4137, %v4166
      %v4278 = vmul.f32 %v4138, %v4170
      %v4279 = vmul.f32 %v4139, %v4166
      %v4280 = vmul.f32 %v4140, %v4170
      %v4281 = vmul.f32 %v4141, %v4166
      %v4282 = vmul.f32 %v4142, %v4170
      %v4283 = vmul.f32 %v4143, %v4166
      %v4284 = vmul.f32 %v4144, %v4170
      %v4285 = vmul.f32 %v4145, %v4166
      %v4286 = vmul.f32 %v4146, %v4170
      %v4287 = vmul.f32 %v4147, %v4166
      %v4288 = vmul.f32 %v4148, %v4170
      %v4289 = vmul.f32 %v4149, %v4166
      %v4290 = vmul.f32 %v4150, %v4170
      %v4291 = vmul.f32 %v4151, %v4166
      %v4292 = vmul.f32 %v4152, %v4170
      %v4293 = vmul.f32 %v4153, %v4166
      %v4294 = vmul.f32 %v4154, %v4170
      %v4295 = vmul.f32 %v4155, %v4166
      %v4296 = vmul.f32 %v4156, %v4170
      %v4297 = vmul.f32 %v4157, %v4166
      %v4298 = vmul.f32 %v4158, %v4170
      %v4299 = vmul.f32 %v4159, %v4166
      %v4300 = vmul.f32 %v4160, %v4170
      %v4301 = vadd.f32 %v4173, %v4174
      %4302 = vadd.xlane.f32.xlu0 %v4301
      %v4303 = vpop.xlane.xlu0 %4302
      %v4304 = vadd.f32 %v4175, %v4176
      %4305 = vadd.xlane.f32.xlu0 %v4304
      %v4306 = vpop.xlane.xlu0 %4305
      %v4307 = vadd.f32 %v4177, %v4178
      %4308 = vadd.xlane.f32.xlu0 %v4307
      %v4309 = vpop.xlane.xlu0 %4308
      %v4310 = vadd.f32 %v4179, %v4180
      %4311 = vadd.xlane.f32.xlu0 %v4310
      %v4312 = vpop.xlane.xlu0 %4311
      %v4313 = vadd.f32 %v4181, %v4182
      %4314 = vadd.xlane.f32.xlu0 %v4313
      %v4315 = vpop.xlane.xlu0 %4314
      %v4316 = vadd.f32 %v4183, %v4184
      %4317 = vadd.xlane.f32.xlu0 %v4316
      %v4318 = vpop.xlane.xlu0 %4317
      %v4319 = vadd.f32 %v4185, %v4186
      %4320 = vadd.xlane.f32.xlu0 %v4319
      %v4321 = vpop.xlane.xlu0 %4320
      %v4322 = vadd.f32 %v4187, %v4188
      %4323 = vadd.xlane.f32.xlu0 %v4322
      %v4324 = vpop.xlane.xlu0 %4323
      %v4325 = vadd.f32 %v4189, %v4190
      %4326 = vadd.xlane.f32.xlu0 %v4325
      %v4327 = vpop.xlane.xlu0 %4326
      %v4328 = vadd.f32 %v4191, %v4192
      %4329 = vadd.xlane.f32.xlu0 %v4328
      %v4330 = vpop.xlane.xlu0 %4329
      %v4331 = vadd.f32 %v4193, %v4194
      %4332 = vadd.xlane.f32.xlu0 %v4331
      %v4333 = vpop.xlane.xlu0 %4332
      %v4334 = vadd.f32 %v4195, %v4196
      %4335 = vadd.xlane.f32.xlu0 %v4334
      %v4336 = vpop.xlane.xlu0 %4335
      %v4337 = vadd.f32 %v4197, %v4198
      %4338 = vadd.xlane.f32.xlu0 %v4337
      %v4339 = vpop.xlane.xlu0 %4338
      %v4340 = vadd.f32 %v4199, %v4200
      %4341 = vadd.xlane.f32.xlu0 %v4340
      %v4342 = vpop.xlane.xlu0 %4341
      %v4343 = vadd.f32 %v4201, %v4202
      %4344 = vadd.xlane.f32.xlu0 %v4343
      %v4345 = vpop.xlane.xlu0 %4344
      %v4346 = vadd.f32 %v4203, %v4204
      %4347 = vadd.xlane.f32.xlu0 %v4346
      %v4348 = vpop.xlane.xlu0 %4347
      %v4349 = vadd.f32 %v4205, %v4206
      %4350 = vadd.xlane.f32.xlu0 %v4349
      %v4351 = vpop.xlane.xlu0 %4350
      %v4352 = vadd.f32 %v4207, %v4208
      %4353 = vadd.xlane.f32.xlu0 %v4352
      %v4354 = vpop.xlane.xlu0 %4353
      %v4355 = vadd.f32 %v4209, %v4210
      %4356 = vadd.xlane.f32.xlu0 %v4355
      %v4357 = vpop.xlane.xlu0 %4356
      %v4358 = vadd.f32 %v4211, %v4212
      %4359 = vadd.xlane.f32.xlu0 %v4358
      %v4360 = vpop.xlane.xlu0 %4359
      %v4361 = vadd.f32 %v4213, %v4214
      %4362 = vadd.xlane.f32.xlu0 %v4361
      %v4363 = vpop.xlane.xlu0 %4362
      %v4364 = vadd.f32 %v4215, %v4216
      %4365 = vadd.xlane.f32.xlu0 %v4364
      %v4366 = vpop.xlane.xlu0 %4365
      %v4367 = vadd.f32 %v4217, %v4218
      %4368 = vadd.xlane.f32.xlu0 %v4367
      %v4369 = vpop.xlane.xlu0 %4368
      %v4370 = vadd.f32 %v4219, %v4220
      %4371 = vadd.xlane.f32.xlu0 %v4370
      %v4372 = vpop.xlane.xlu0 %4371
      %v4373 = vadd.f32 %v4221, %v4222
      %4374 = vadd.xlane.f32.xlu0 %v4373
      %v4375 = vpop.xlane.xlu0 %4374
      %v4376 = vadd.f32 %v4223, %v4224
      %4377 = vadd.xlane.f32.xlu0 %v4376
      %v4378 = vpop.xlane.xlu0 %4377
      %v4379 = vadd.f32 %v4225, %v4226
      %4380 = vadd.xlane.f32.xlu0 %v4379
      %v4381 = vpop.xlane.xlu0 %4380
      %v4382 = vadd.f32 %v4227, %v4228
      %4383 = vadd.xlane.f32.xlu0 %v4382
      %v4384 = vpop.xlane.xlu0 %4383
      %v4385 = vadd.f32 %v4229, %v4230
      %4386 = vadd.xlane.f32.xlu0 %v4385
      %v4387 = vpop.xlane.xlu0 %4386
      %v4388 = vadd.f32 %v4231, %v4232
      %4389 = vadd.xlane.f32.xlu0 %v4388
      %v4390 = vpop.xlane.xlu0 %4389
      %v4391 = vadd.f32 %v4233, %v4234
      %4392 = vadd.xlane.f32.xlu0 %v4391
      %v4393 = vpop.xlane.xlu0 %4392
      %v4394 = vadd.f32 %v4235, %v4236
      %4395 = vadd.xlane.f32.xlu0 %v4394
      %v4396 = vpop.xlane.xlu0 %4395
      %v4397 = vadd.f32 %v4237, %v4238
      %4398 = vadd.xlane.f32.xlu0 %v4397
      %v4399 = vpop.xlane.xlu0 %4398
      %v4400 = vadd.f32 %v4239, %v4240
      %4401 = vadd.xlane.f32.xlu0 %v4400
      %v4402 = vpop.xlane.xlu0 %4401
      %v4403 = vadd.f32 %v4241, %v4242
      %4404 = vadd.xlane.f32.xlu0 %v4403
      %v4405 = vpop.xlane.xlu0 %4404
      %v4406 = vadd.f32 %v4243, %v4244
      %4407 = vadd.xlane.f32.xlu0 %v4406
      %v4408 = vpop.xlane.xlu0 %4407
      %v4409 = vadd.f32 %v4245, %v4246
      %4410 = vadd.xlane.f32.xlu0 %v4409
      %v4411 = vpop.xlane.xlu0 %4410
      %v4412 = vadd.f32 %v4247, %v4248
      %4413 = vadd.xlane.f32.xlu0 %v4412
      %v4414 = vpop.xlane.xlu0 %4413
      %v4415 = vadd.f32 %v4249, %v4250
      %4416 = vadd.xlane.f32.xlu0 %v4415
      %v4417 = vpop.xlane.xlu0 %4416
      %v4418 = vadd.f32 %v4251, %v4252
      %4419 = vadd.xlane.f32.xlu0 %v4418
      %v4420 = vpop.xlane.xlu0 %4419
      %v4421 = vadd.f32 %v4253, %v4254
      %4422 = vadd.xlane.f32.xlu0 %v4421
      %v4423 = vpop.xlane.xlu0 %4422
      %v4424 = vadd.f32 %v4255, %v4256
      %4425 = vadd.xlane.f32.xlu0 %v4424
      %v4426 = vpop.xlane.xlu0 %4425
      %v4427 = vadd.f32 %v4257, %v4258
      %4428 = vadd.xlane.f32.xlu0 %v4427
      %v4429 = vpop.xlane.xlu0 %4428
      %v4430 = vadd.f32 %v4259, %v4260
      %4431 = vadd.xlane.f32.xlu0 %v4430
      %v4432 = vpop.xlane.xlu0 %4431
      %v4433 = vadd.f32 %v4261, %v4262
      %4434 = vadd.xlane.f32.xlu0 %v4433
      %v4435 = vpop.xlane.xlu0 %4434
      %v4436 = vadd.f32 %v4263, %v4264
      %4437 = vadd.xlane.f32.xlu0 %v4436
      %v4438 = vpop.xlane.xlu0 %4437
      %v4439 = vadd.f32 %v4265, %v4266
      %4440 = vadd.xlane.f32.xlu0 %v4439
      %v4441 = vpop.xlane.xlu0 %4440
      %v4442 = vadd.f32 %v4267, %v4268
      %4443 = vadd.xlane.f32.xlu0 %v4442
      %v4444 = vpop.xlane.xlu0 %4443
      %v4445 = vadd.f32 %v4269, %v4270
      %4446 = vadd.xlane.f32.xlu0 %v4445
      %v4447 = vpop.xlane.xlu0 %4446
      %v4448 = vadd.f32 %v4271, %v4272
      %4449 = vadd.xlane.f32.xlu0 %v4448
      %v4450 = vpop.xlane.xlu0 %4449
      %v4451 = vadd.f32 %v4273, %v4274
      %4452 = vadd.xlane.f32.xlu0 %v4451
      %v4453 = vpop.xlane.xlu0 %4452
      %v4454 = vadd.f32 %v4275, %v4276
      %4455 = vadd.xlane.f32.xlu0 %v4454
      %v4456 = vpop.xlane.xlu0 %4455
      %v4457 = vadd.f32 %v4277, %v4278
      %4458 = vadd.xlane.f32.xlu0 %v4457
      %v4459 = vpop.xlane.xlu0 %4458
      %v4460 = vadd.f32 %v4279, %v4280
      %4461 = vadd.xlane.f32.xlu0 %v4460
      %v4462 = vpop.xlane.xlu0 %4461
      %v4463 = vadd.f32 %v4281, %v4282
      %4464 = vadd.xlane.f32.xlu0 %v4463
      %v4465 = vpop.xlane.xlu0 %4464
      %v4466 = vadd.f32 %v4283, %v4284
      %4467 = vadd.xlane.f32.xlu0 %v4466
      %v4468 = vpop.xlane.xlu0 %4467
      %v4469 = vadd.f32 %v4285, %v4286
      %4470 = vadd.xlane.f32.xlu0 %v4469
      %v4471 = vpop.xlane.xlu0 %4470
      %v4472 = vadd.f32 %v4287, %v4288
      %4473 = vadd.xlane.f32.xlu0 %v4472
      %v4474 = vpop.xlane.xlu0 %4473
      %v4475 = vadd.f32 %v4289, %v4290
      %4476 = vadd.xlane.f32.xlu0 %v4475
      %v4477 = vpop.xlane.xlu0 %4476
      %v4478 = vadd.f32 %v4291, %v4292
      %4479 = vadd.xlane.f32.xlu0 %v4478
      %v4480 = vpop.xlane.xlu0 %4479
      %v4481 = vadd.f32 %v4293, %v4294
      %4482 = vadd.xlane.f32.xlu0 %v4481
      %v4483 = vpop.xlane.xlu0 %4482
      %v4484 = vadd.f32 %v4295, %v4296
      %4485 = vadd.xlane.f32.xlu0 %v4484
      %v4486 = vpop.xlane.xlu0 %4485
      %v4487 = vadd.f32 %v4297, %v4298
      %4488 = vadd.xlane.f32.xlu0 %v4487
      %v4489 = vpop.xlane.xlu0 %4488
      %v4490 = vadd.f32 %v4299, %v4300
      %4491 = vadd.xlane.f32.xlu0 %v4490
      %v4492 = vpop.xlane.xlu0 %4491
      %v4493 = vld [vmem:[#allocation2] sm:$0x1]
      %v4495 = vlaneseq
      %v4496 = vshrl.u32 %v4495, 7
      %v4497 = vsub.s32 0, %v4496
      %v4498 = vrot.slane %v4493, %v4497
      %v4500 = vadd.f32 %v4303, %v4498
      %v4501 = vadd.f32 %v4306, %v4498
      %v4502 = vadd.f32 %v4309, %v4498
      %v4503 = vadd.f32 %v4312, %v4498
      %v4504 = vadd.f32 %v4315, %v4498
      %v4505 = vadd.f32 %v4318, %v4498
      %v4506 = vadd.f32 %v4321, %v4498
      %v4507 = vadd.f32 %v4324, %v4498
      %v4508 = vadd.f32 %v4327, %v4498
      %v4509 = vadd.f32 %v4330, %v4498
      %v4510 = vadd.f32 %v4333, %v4498
      %v4511 = vadd.f32 %v4336, %v4498
      %v4512 = vadd.f32 %v4339, %v4498
      %v4513 = vadd.f32 %v4342, %v4498
      %v4514 = vadd.f32 %v4345, %v4498
      %v4515 = vadd.f32 %v4348, %v4498
      %v4516 = vadd.f32 %v4351, %v4498
      %v4517 = vadd.f32 %v4354, %v4498
      %v4518 = vadd.f32 %v4357, %v4498
      %v4519 = vadd.f32 %v4360, %v4498
      %v4520 = vadd.f32 %v4363, %v4498
      %v4521 = vadd.f32 %v4366, %v4498
      %v4522 = vadd.f32 %v4369, %v4498
      %v4523 = vadd.f32 %v4372, %v4498
      %v4524 = vadd.f32 %v4375, %v4498
      %v4525 = vadd.f32 %v4378, %v4498
      %v4526 = vadd.f32 %v4381, %v4498
      %v4527 = vadd.f32 %v4384, %v4498
      %v4528 = vadd.f32 %v4387, %v4498
      %v4529 = vadd.f32 %v4390, %v4498
      %v4530 = vadd.f32 %v4393, %v4498
      %v4531 = vadd.f32 %v4396, %v4498
      %v4532 = vadd.f32 %v4399, %v4498
      %v4533 = vadd.f32 %v4402, %v4498
      %v4534 = vadd.f32 %v4405, %v4498
      %v4535 = vadd.f32 %v4408, %v4498
      %v4536 = vadd.f32 %v4411, %v4498
      %v4537 = vadd.f32 %v4414, %v4498
      %v4538 = vadd.f32 %v4417, %v4498
      %v4539 = vadd.f32 %v4420, %v4498
      %v4540 = vadd.f32 %v4423, %v4498
      %v4541 = vadd.f32 %v4426, %v4498
      %v4542 = vadd.f32 %v4429, %v4498
      %v4543 = vadd.f32 %v4432, %v4498
      %v4544 = vadd.f32 %v4435, %v4498
      %v4545 = vadd.f32 %v4438, %v4498
      %v4546 = vadd.f32 %v4441, %v4498
      %v4547 = vadd.f32 %v4444, %v4498
      %v4548 = vadd.f32 %v4447, %v4498
      %v4549 = vadd.f32 %v4450, %v4498
      %v4550 = vadd.f32 %v4453, %v4498
      %v4551 = vadd.f32 %v4456, %v4498
      %v4552 = vadd.f32 %v4459, %v4498
      %v4553 = vadd.f32 %v4462, %v4498
      %v4554 = vadd.f32 %v4465, %v4498
      %v4555 = vadd.f32 %v4468, %v4498
      %v4556 = vadd.f32 %v4471, %v4498
      %v4557 = vadd.f32 %v4474, %v4498
      %v4558 = vadd.f32 %v4477, %v4498
      %v4559 = vadd.f32 %v4480, %v4498
      %v4560 = vadd.f32 %v4483, %v4498
      %v4561 = vadd.f32 %v4486, %v4498
      %v4562 = vadd.f32 %v4489, %v4498
      %v4563 = vadd.f32 %v4492, %v4498
      %vm4564 = vcmask 7168
      %4565 = vst.msk [vmem:[%s390] sm:$0xff] %vm4564, %v4500
      %4566 = vst.msk [vmem:[%s390 + $0x8] sm:$0xff] %vm4564, %v4501
      %4567 = vst.msk [vmem:[%s390 + $0x10] sm:$0xff] %vm4564, %v4502
      %4568 = vst.msk [vmem:[%s390 + $0x18] sm:$0xff] %vm4564, %v4503
      %4569 = vst.msk [vmem:[%s390 + $0x20] sm:$0xff] %vm4564, %v4504
      %4570 = vst.msk [vmem:[%s390 + $0x28] sm:$0xff] %vm4564, %v4505
      %4571 = vst.msk [vmem:[%s390 + $0x30] sm:$0xff] %vm4564, %v4506
      %4572 = vst.msk [vmem:[%s390 + $0x38] sm:$0xff] %vm4564, %v4507
      %4573 = vst.msk [vmem:[%s390 + $0x40] sm:$0xff] %vm4564, %v4508
      %4574 = vst.msk [vmem:[%s390 + $0x48] sm:$0xff] %vm4564, %v4509
      %4575 = vst.msk [vmem:[%s390 + $0x50] sm:$0xff] %vm4564, %v4510
      %4576 = vst.msk [vmem:[%s390 + $0x58] sm:$0xff] %vm4564, %v4511
      %4577 = vst.msk [vmem:[%s390 + $0x60] sm:$0xff] %vm4564, %v4512
      %4578 = vst.msk [vmem:[%s390 + $0x68] sm:$0xff] %vm4564, %v4513
      %4579 = vst.msk [vmem:[%s390 + $0x70] sm:$0xff] %vm4564, %v4514
      %4580 = vst.msk [vmem:[%s390 + $0x78] sm:$0xff] %vm4564, %v4515
      %4581 = vst.msk [vmem:[%s390 + $0x80] sm:$0xff] %vm4564, %v4516
      %4582 = vst.msk [vmem:[%s390 + $0x88] sm:$0xff] %vm4564, %v4517
      %4583 = vst.msk [vmem:[%s390 + $0x90] sm:$0xff] %vm4564, %v4518
      %4584 = vst.msk [vmem:[%s390 + $0x98] sm:$0xff] %vm4564, %v4519
      %4585 = vst.msk [vmem:[%s390 + $0xa0] sm:$0xff] %vm4564, %v4520
      %4586 = vst.msk [vmem:[%s390 + $0xa8] sm:$0xff] %vm4564, %v4521
      %4587 = vst.msk [vmem:[%s390 + $0xb0] sm:$0xff] %vm4564, %v4522
      %4588 = vst.msk [vmem:[%s390 + $0xb8] sm:$0xff] %vm4564, %v4523
      %4589 = vst.msk [vmem:[%s390 + $0xc0] sm:$0xff] %vm4564, %v4524
      %4590 = vst.msk [vmem:[%s390 + $0xc8] sm:$0xff] %vm4564, %v4525
      %4591 = vst.msk [vmem:[%s390 + $0xd0] sm:$0xff] %vm4564, %v4526
      %4592 = vst.msk [vmem:[%s390 + $0xd8] sm:$0xff] %vm4564, %v4527
      %4593 = vst.msk [vmem:[%s390 + $0xe0] sm:$0xff] %vm4564, %v4528
      %4594 = vst.msk [vmem:[%s390 + $0xe8] sm:$0xff] %vm4564, %v4529
      %4595 = vst.msk [vmem:[%s390 + $0xf0] sm:$0xff] %vm4564, %v4530
      %4596 = vst.msk [vmem:[%s390 + $0xf8] sm:$0xff] %vm4564, %v4531
      %4597 = vst.msk [vmem:[%s390 + $0x100] sm:$0xff] %vm4564, %v4532
      %4598 = vst.msk [vmem:[%s390 + $0x108] sm:$0xff] %vm4564, %v4533
      %4599 = vst.msk [vmem:[%s390 + $0x110] sm:$0xff] %vm4564, %v4534
      %4600 = vst.msk [vmem:[%s390 + $0x118] sm:$0xff] %vm4564, %v4535
      %4601 = vst.msk [vmem:[%s390 + $0x120] sm:$0xff] %vm4564, %v4536
      %4602 = vst.msk [vmem:[%s390 + $0x128] sm:$0xff] %vm4564, %v4537
      %4603 = vst.msk [vmem:[%s390 + $0x130] sm:$0xff] %vm4564, %v4538
      %4604 = vst.msk [vmem:[%s390 + $0x138] sm:$0xff] %vm4564, %v4539
      %4605 = vst.msk [vmem:[%s390 + $0x140] sm:$0xff] %vm4564, %v4540
      %4606 = vst.msk [vmem:[%s390 + $0x148] sm:$0xff] %vm4564, %v4541
      %4607 = vst.msk [vmem:[%s390 + $0x150] sm:$0xff] %vm4564, %v4542
      %4608 = vst.msk [vmem:[%s390 + $0x158] sm:$0xff] %vm4564, %v4543
      %4609 = vst.msk [vmem:[%s390 + $0x160] sm:$0xff] %vm4564, %v4544
      %4610 = vst.msk [vmem:[%s390 + $0x168] sm:$0xff] %vm4564, %v4545
      %4611 = vst.msk [vmem:[%s390 + $0x170] sm:$0xff] %vm4564, %v4546
      %4612 = vst.msk [vmem:[%s390 + $0x178] sm:$0xff] %vm4564, %v4547
      %4613 = vst.msk [vmem:[%s390 + $0x180] sm:$0xff] %vm4564, %v4548
      %4614 = vst.msk [vmem:[%s390 + $0x188] sm:$0xff] %vm4564, %v4549
      %4615 = vst.msk [vmem:[%s390 + $0x190] sm:$0xff] %vm4564, %v4550
      %4616 = vst.msk [vmem:[%s390 + $0x198] sm:$0xff] %vm4564, %v4551
      %4617 = vst.msk [vmem:[%s390 + $0x1a0] sm:$0xff] %vm4564, %v4552
      %4618 = vst.msk [vmem:[%s390 + $0x1a8] sm:$0xff] %vm4564, %v4553
      %4619 = vst.msk [vmem:[%s390 + $0x1b0] sm:$0xff] %vm4564, %v4554
      %4620 = vst.msk [vmem:[%s390 + $0x1b8] sm:$0xff] %vm4564, %v4555
      %4621 = vst.msk [vmem:[%s390 + $0x1c0] sm:$0xff] %vm4564, %v4556
      %4622 = vst.msk [vmem:[%s390 + $0x1c8] sm:$0xff] %vm4564, %v4557
      %4623 = vst.msk [vmem:[%s390 + $0x1d0] sm:$0xff] %vm4564, %v4558
      %4624 = vst.msk [vmem:[%s390 + $0x1d8] sm:$0xff] %vm4564, %v4559
      %4625 = vst.msk [vmem:[%s390 + $0x1e0] sm:$0xff] %vm4564, %v4560
      %4626 = vst.msk [vmem:[%s390 + $0x1e8] sm:$0xff] %vm4564, %v4561
      %4627 = vst.msk [vmem:[%s390 + $0x1f0] sm:$0xff] %vm4564, %v4562
      %4628 = vst.msk [vmem:[%s390 + $0x1f8] sm:$0xff] %vm4564, %v4563
      %s4629 = smul.u32 64, %s24
      %p4630 = scmp.lt.s32.totalorder %s4629, 127
      %s4631 = scalar_select %p4630, %s4629, 127
      %s4632 = smul.addr %s4631, 8
      %s4633 = scalar_lea.vmem %s11, %s4632
      // Predicated region
      $region65: #{mlp_forward.1} parent=63 // pred_check
        %p4634 = pneg %p278
      $region66: #{mlp_forward.1} parent=63 // pred_check_branch
        %4636 = sbr.rel (%p4634) target = $region68
      $region67: #{mlp_forward.1} parent=63 // pred_region
        %s4637 = smul.u32 64, %s24
      $region68: #{mlp_forward.1} parent=63 // pred_fallthru
        _
    $region64: #{mlp_forward.1} parent=5 // pred_fallthru
      _
    %p4638 = scmp.le.s32.totalorder 2, %s19
    // Predicated region
    $region69: #{mlp_forward.1} parent=5 // pred_check
      %p4639 = pneg %p4638
    $region70: #{mlp_forward.1} parent=5 // pred_check_branch
      %4641 = sbr.rel (%p4639) target = $region72
    $region71: #{mlp_forward.1} parent=5 // pred_region
      %s4642 = ssub.s32 %s19, 2
      // Predicated region
      $region73: #{mlp_forward.1} parent=71 // pred_check
        %p4643 = pneg %p284
      $region74: #{mlp_forward.1} parent=71 // pred_check_branch
        %4645 = sbr.rel (%p4643) target = $region76
      $region75: #{mlp_forward.1} parent=71 // pred_region
        %s4646 = smul.u32 64, %s25
        %p4647 = scmp.lt.s32.totalorder %s4646, 127
        %s4648 = scalar_select %p4647, %s4646, 127
        %s4649 = smul.addr %s4648, 8
        %s4650 = scalar_lea.vmem %s11, %s4649
      $region76: #{mlp_forward.1} parent=71 // pred_fallthru
        _
    $region72: #{mlp_forward.1} parent=5 // pred_fallthru
      _
  $region6: #{mlp_forward.1} parent=0 // loop_footer
    %s23 = sadd.s32 1, %s19
  $region7: #{mlp_forward.1} parent=0 // loop_footer_branch
    %18 = sbr.rel target = $region3
  $region8: #{mlp_forward.1} parent=0 // loop_exit
    _

</llo_original>
